<compile_context>
chip_gen: v6e
topology: v6e:2x2x1
jax: 0.10.0
libtpu: 0.0.40
codegen_flags: <defaults>
</compile_context>

<pallas_src>
import functools

import jax
import jax.numpy as jnp
from jax.experimental import pallas as pl
from jax.experimental.pallas import tpu as pltpu


# ------------------------------ Pallas kernel -------------------------------

def _silumod(y, ln_w, ln_b, b_tile, hw):
    """sigmoid(LayerNorm(avgpool(y)) + y) * y, pooled per sample over HW."""
    c = y.shape[-1]
    y3 = y.reshape(b_tile, hw, c)
    pooled = jnp.mean(y3, axis=1, keepdims=True)                 # (B, 1, C)
    mu = jnp.mean(pooled, axis=-1, keepdims=True)                # (B, 1, 1)
    var = jnp.mean((pooled - mu) ** 2, axis=-1, keepdims=True)
    shift = (pooled - mu) * jax.lax.rsqrt(var + 1e-6)
    shift = shift * ln_w + ln_b                                  # (B, 1, C)
    return (jax.nn.sigmoid(shift + y3) * y3).reshape(b_tile * hw, c)


def _bottleneck_kernel(x_ref, mask_ref, w1_ref, w2_ref, w3_ref,
                       p1_ref, p2_ref, p3_ref, o_ref, *, b_tile, W):
    # x_ref : (b_tile, Cin, HW) f32   -- channels-first block; also the residual
    # mask  : (b_tile*HW, 9*C1) f32   -- zeros for rolled-in out-of-image taps
    # w*    : bf16 conv weights laid out as matmul operands
    # p*    : (4, C) f32 = [bn_scale; bn_bias; ln_weight; ln_bias]
    HW = x_ref.shape[2]

    # channels-first HBM layout -> channels-last compute layout, in VMEM (XLU).
    x = jnp.concatenate([x_ref[b].T for b in range(b_tile)], axis=0)  # (M, Cin)
    p1, p2, p3 = p1_ref[...], p2_ref[...], p3_ref[...]

    # ---- stage 1: 1x1 conv + BN + silumod
    y = jnp.dot(x.astype(jnp.bfloat16), w1_ref[...],
                preferred_element_type=jnp.float32)
    y = y * p1[0:1] + p1[1:2]
    y = _silumod(y, p1[2:3], p1[3:4], b_tile, HW)

    # ---- stage 2: 3x3 conv (stride 1, pad 1) as rolls + lane-concat + one
    #      K = 9*C1 matmul.  Rows where a roll wraps across an image (or
    #      sample) boundary are exactly the rows the mask zeroes.
    taps = []
    for dh in (-1, 0, 1):
        for dw in (-1, 0, 1):
            d = dh * W + dw
            taps.append(y if d == 0 else jnp.roll(y, -d, axis=0))
    t = jnp.concatenate(taps, axis=1) * mask_ref[...]            # (M, 9*C1) f32
    y = jnp.dot(t.astype(jnp.bfloat16), w2_ref[...],
                preferred_element_type=jnp.float32)
    y = y * p2[0:1] + p2[1:2]
    y = _silumod(y, p2[2:3], p2[3:4], b_tile, HW)

    # ---- stage 3: 1x1 conv + BN + residual add + silumod
    y = jnp.dot(y.astype(jnp.bfloat16), w3_ref[...],
                preferred_element_type=jnp.float32)
    y = y * p3[0:1] + p3[1:2]
    y = y + x
    y = _silumod(y, p3[2:3], p3[3:4], b_tile, HW)

    # store channels-first so the wrapper only reshapes (no HBM transpose).
    for b in range(b_tile):
        o_ref[b] = y[b * HW:(b + 1) * HW, :].T


def _full_spec(arr):
    nd = arr.ndim
    return pl.BlockSpec(arr.shape, lambda *_: (0,) * nd)


def bottleneck_fused(x_nc_hw, mask, w1, w2, w3, p1, p2, p3, *, b_tile, W):
    """Whole bottleneck in one pallas_call; grid over the batch (parallel)."""
    N, Cin, HW = x_nc_hw.shape
    Cout = w3.shape[-1]
    kernel = functools.partial(_bottleneck_kernel, b_tile=b_tile, W=W)
    return pl.pallas_call(
        kernel,
        out_shape=jax.ShapeDtypeStruct((N, Cout, HW), jnp.float32),
        grid=(N // b_tile,),
        in_specs=[
            pl.BlockSpec((b_tile, Cin, HW), lambda n: (n, 0, 0)),
            _full_spec(mask), _full_spec(w1), _full_spec(w2), _full_spec(w3),
            _full_spec(p1), _full_spec(p2), _full_spec(p3),
        ],
        out_specs=pl.BlockSpec((b_tile, Cout, HW), lambda n: (n, 0, 0)),
        compiler_params=pltpu.CompilerParams(
            dimension_semantics=("parallel",)),
    )(x_nc_hw, mask, w1, w2, w3, p1, p2, p3)


# -------------------------------- JAX glue ----------------------------------

def make_tap_mask(H, W, b_tile, c1):
    """(b_tile*HW, 9*c1) f32 mask zeroing rolled-in out-of-image taps."""
    HW = H * W
    p = jnp.arange(HW)
    h, w = p // W, p % W
    cols = []
    for dh in (-1, 0, 1):
        for dw in (-1, 0, 1):
            valid = ((h + dh >= 0) & (h + dh < H) &
                     (w + dw >= 0) & (w + dw < W)).astype(jnp.float32)
            cols.append(jnp.repeat(valid[:, None], c1, axis=1))
    m = jnp.concatenate(cols, axis=1)                   # (HW, 9*c1)
    return jnp.tile(m, (b_tile, 1))                     # (b_tile*HW, 9*c1)


def _pick_b_tile(N, HW):
    # Fill >=128 MXU rows per grid step when HW is small, but keep >=2 grid
    # steps so both v7x TensorCores get work.
    b = max(1, 128 // HW)
    while b > 1 and (N % b != 0 or N // b < 2):
        b -= 1
    return b if N % b == 0 else 1


def bn_fold(gamma, beta, mean, var, eps=1e-5):
    scale = gamma / jnp.sqrt(var + eps)
    bias = beta - mean * scale
    return scale[None, :], bias[None, :]


@jax.jit
def bottleneck_forward(x_nchw, params):
    N, Cin, H, W = x_nchw.shape
    HW = H * W
    b_tile = _pick_b_tile(N, HW)
    c1 = params["w1_bf16"].shape[-1]
    mask = make_tap_mask(H, W, b_tile, c1)
    x = x_nchw.reshape(N, Cin, HW).astype(jnp.float32)   # free view, no transpose
    out = bottleneck_fused(
        x, mask, params["w1_bf16"], params["w2_bf16"], params["w3_bf16"],
        params["p1"], params["p2"], params["p3"], b_tile=b_tile, W=W)
    return out.reshape(N, -1, H, W)                      # NCHW, free view


# --------------------------- pure-JAX reference ------------------------------

def _silumod_ref(x_flat, ln_w, ln_b):
    pooled = jnp.mean(x_flat, axis=1)                              # (N, C)
    mu = jnp.mean(pooled, axis=-1, keepdims=True)
    var = jnp.mean((pooled - mu) ** 2, axis=-1, keepdims=True)
    shift = (pooled - mu) / jnp.sqrt(var + 1e-6) * ln_w + ln_b     # (N, C)
    return jax.nn.sigmoid(shift[:, None, :] + x_flat) * x_flat


def bottleneck_reference(x_nchw, params, H, W):
    x = jnp.transpose(x_nchw, (0, 2, 3, 1)).astype(jnp.float32)
    N = x.shape[0]
    res = x.reshape(N, H * W, -1)

    y1 = res @ params["w1"] * params["bn1_scale"] + params["bn1_bias"]
    y1 = _silumod_ref(y1, params["ln1_w"], params["ln1_b"])

    y1_img = y1.reshape(N, H, W, -1)
    y2_img = jax.lax.conv_general_dilated(
        y1_img, params["w2_hwio"], window_strides=(1, 1), padding="SAME",
        dimension_numbers=("NHWC", "HWIO", "NHWC"))
    y2 = y2_img.reshape(N, H * W, -1) * params["bn2_scale"] + params["bn2_bias"]
    y2 = _silumod_ref(y2, params["ln2_w"], params["ln2_b"])

    y3 = y2 @ params["w3"] * params["bn3_scale"] + params["bn3_bias"]
    y3 = y3 + res
    y3 = _silumod_ref(y3, params["ln3_w"], params["ln3_b"])

    out = y3.reshape(N, H, W, -1)
    return jnp.transpose(out, (0, 3, 1, 2))


# ---------------------------------- main -------------------------------------

if __name__ == "__main__":
    # Bottleneck(inplanes=64, planes=16): width = first_planes = 16,
    # outplanes = 64, stride=1, downsample=None (residual needs Cin == Cout).
    N, inplanes, H, W = 4, 64, 16, 16
    planes = 16
    first_planes = width = 16
    outplanes = planes * 4  # 64

    key = jax.random.PRNGKey(0)
    ks = jax.random.split(key, 16)

    def bn_params(kg, kb, km, kv, c):
        gamma = 0.5 + jax.random.uniform(kg, (c,))
        beta = 0.1 * jax.random.normal(kb, (c,))
        mean = 0.1 * jax.random.normal(km, (c,))
        var = 0.5 + jax.random.uniform(kv, (c,))
        return bn_fold(gamma, beta, mean, var)

    bn1_scale, bn1_bias = bn_params(ks[3], ks[4], ks[5], ks[6], first_planes)
    bn2_scale, bn2_bias = bn_params(ks[7], ks[8], ks[9], ks[10], width)
    bn3_scale, bn3_bias = bn_params(ks[11], ks[12], ks[13], ks[14], outplanes)

    w1 = 0.05 * jax.random.normal(ks[0], (inplanes, first_planes),
                                  dtype=jnp.float32)
    w2_hwio = 0.05 * jax.random.normal(ks[1], (3, 3, first_planes, width),
                                       dtype=jnp.float32)
    w3 = 0.05 * jax.random.normal(ks[2], (width, outplanes), dtype=jnp.float32)

    # silumod LayerNorm init: weight = 0.01, bias = 0 (per module __init__).
    ln1_w = jnp.full((1, first_planes), 0.01, jnp.float32)
    ln1_b = jnp.zeros((1, first_planes), jnp.float32)
    ln2_w = jnp.full((1, width), 0.01, jnp.float32)
    ln2_b = jnp.zeros((1, width), jnp.float32)
    ln3_w = jnp.full((1, outplanes), 0.01, jnp.float32)
    ln3_b = jnp.zeros((1, outplanes), jnp.float32)

    params = {
        # kernel-side (bf16 MXU operands, packed f32 affine params)
        "w1_bf16": w1.astype(jnp.bfloat16),
        "w2_bf16": w2_hwio.reshape(9 * first_planes, width).astype(jnp.bfloat16),
        "w3_bf16": w3.astype(jnp.bfloat16),
        "p1": jnp.concatenate([bn1_scale, bn1_bias, ln1_w, ln1_b], axis=0),
        "p2": jnp.concatenate([bn2_scale, bn2_bias, ln2_w, ln2_b], axis=0),
        "p3": jnp.concatenate([bn3_scale, bn3_bias, ln3_w, ln3_b], axis=0),
        # reference-side (f32)
        "w1": w1, "w2_hwio": w2_hwio, "w3": w3,
        "bn1_scale": bn1_scale, "bn1_bias": bn1_bias,
        "bn2_scale": bn2_scale, "bn2_bias": bn2_bias,
        "bn3_scale": bn3_scale, "bn3_bias": bn3_bias,
        "ln1_w": ln1_w, "ln1_b": ln1_b,
        "ln2_w": ln2_w, "ln2_b": ln2_b,
        "ln3_w": ln3_w, "ln3_b": ln3_b,
    }

    x = jax.random.normal(ks[15], (N, inplanes, H, W), dtype=jnp.float32)

    out = jax.block_until_ready(bottleneck_forward(x, params))
    ref = jax.block_until_ready(bottleneck_reference(x, params, H, W))

    assert out.shape == (N, outplanes, H, W)
    max_err = float(jnp.max(jnp.abs(out - ref)))
    # bf16 MXU operands vs f32 reference -> loosened tolerance.
    assert jnp.allclose(out, ref, rtol=2e-2, atol=2e-2), max_err

    print("KERNEL_OK")
</pallas_src>

<mosaic_0001>
module attributes {stable_mosaic.version = 11 : i64} {
  func.func @_bottleneck_kernel(%arg0: i32, %arg1: memref<1x64x256xf32, #tpu.memory_space<vmem>>, %arg2: memref<256x144xf32, #tpu.memory_space<vmem>>, %arg3: memref<64x16xbf16, #tpu.memory_space<vmem>>, %arg4: memref<144x16xbf16, #tpu.memory_space<vmem>>, %arg5: memref<16x64xbf16, #tpu.memory_space<vmem>>, %arg6: memref<4x16xf32, #tpu.memory_space<vmem>>, %arg7: memref<4x16xf32, #tpu.memory_space<vmem>>, %arg8: memref<4x64xf32, #tpu.memory_space<vmem>>, %arg9: memref<1x64x256xf32, #tpu.memory_space<vmem>>) attributes {dimension_semantics = [#tpu.dimension_semantics<parallel>], iteration_bounds = array<i64: 4>, scalar_prefetch = 0 : i64, scratch_operands = 0 : i64, tpu.core_type = #tpu.core_type<tc>, window_params = [{transform_indices = @transform_0, window_bounds = array<i64: 1, 64, 256>}, {pipeline_mode = #tpu.pipeline_mode<synchronous>, transform_indices = @transform_1, window_bounds = array<i64: 256, 144>}, {pipeline_mode = #tpu.pipeline_mode<synchronous>, transform_indices = @transform_2, window_bounds = array<i64: 64, 16>}, {pipeline_mode = #tpu.pipeline_mode<synchronous>, transform_indices = @transform_3, window_bounds = array<i64: 144, 16>}, {pipeline_mode = #tpu.pipeline_mode<synchronous>, transform_indices = @transform_4, window_bounds = array<i64: 16, 64>}, {pipeline_mode = #tpu.pipeline_mode<synchronous>, transform_indices = @transform_5, window_bounds = array<i64: 4, 16>}, {pipeline_mode = #tpu.pipeline_mode<synchronous>, transform_indices = @transform_6, window_bounds = array<i64: 4, 16>}, {pipeline_mode = #tpu.pipeline_mode<synchronous>, transform_indices = @transform_7, window_bounds = array<i64: 4, 64>}, {transform_indices = @transform_8, window_bounds = array<i64: 1, 64, 256>}]} {
    %c0 = arith.constant 0 : index
    %c0_0 = arith.constant 0 : index
    %c0_1 = arith.constant 0 : index
    %0 = vector.load %arg1[%c0, %c0_0, %c0_1] : memref<1x64x256xf32, #tpu.memory_space<vmem>>, vector<1x64x256xf32>
    %1 = vector.shape_cast %0 : vector<1x64x256xf32> to vector<64x256xf32>
    %2 = tpu.transpose %1, [1, 0] : vector<64x256xf32> -> vector<256x64xf32>
    %c0_2 = arith.constant 0 : index
    %c0_3 = arith.constant 0 : index
    %3 = vector.load %arg6[%c0_2, %c0_3] : memref<4x16xf32, #tpu.memory_space<vmem>>, vector<4x16xf32>
    %c0_4 = arith.constant 0 : index
    %c0_5 = arith.constant 0 : index
    %4 = vector.load %arg7[%c0_4, %c0_5] : memref<4x16xf32, #tpu.memory_space<vmem>>, vector<4x16xf32>
    %c0_6 = arith.constant 0 : index
    %c0_7 = arith.constant 0 : index
    %5 = vector.load %arg8[%c0_6, %c0_7] : memref<4x64xf32, #tpu.memory_space<vmem>>, vector<4x64xf32>
    %6 = arith.truncf %2 : vector<256x64xf32> to vector<256x64xbf16>
    %c0_8 = arith.constant 0 : index
    %c0_9 = arith.constant 0 : index
    %7 = vector.load %arg3[%c0_8, %c0_9] : memref<64x16xbf16, #tpu.memory_space<vmem>>, vector<64x16xbf16>
    %cst = arith.constant dense<0.000000e+00> : vector<256x16xf32>
    %8 = tpu.matmul %6, %7, %cst {dimension_numbers = #tpu.dot_dimension_numbers<[1], [0], [0], [1], [0, 0, 1, 1], [], []>} : vector<256x64xbf16>, vector<64x16xbf16>, vector<256x16xf32> -> vector<256x16xf32>
    %9 = vector.extract_strided_slice %3 {offsets = [0, 0], sizes = [1, 16], strides = [1, 1]} : vector<4x16xf32> to vector<1x16xf32>
    %10 = vector.broadcast %9 : vector<1x16xf32> to vector<256x16xf32>
    %11 = arith.mulf %8, %10 : vector<256x16xf32>
    %12 = vector.extract_strided_slice %3 {offsets = [1, 0], sizes = [1, 16], strides = [1, 1]} : vector<4x16xf32> to vector<1x16xf32>
    %13 = vector.broadcast %12 : vector<1x16xf32> to vector<256x16xf32>
    %14 = arith.addf %11, %13 : vector<256x16xf32>
    %15 = vector.extract_strided_slice %3 {offsets = [2, 0], sizes = [1, 16], strides = [1, 1]} : vector<4x16xf32> to vector<1x16xf32>
    %16 = vector.extract_strided_slice %3 {offsets = [3, 0], sizes = [1, 16], strides = [1, 1]} : vector<4x16xf32> to vector<1x16xf32>
    %17 = vector.shape_cast %14 : vector<256x16xf32> to vector<1x256x16xf32>
    %cst_10 = arith.constant dense<0.000000e+00> : vector<1x16xf32>
    %18 = vector.multi_reduction <add>, %17, %cst_10 [1] : vector<1x256x16xf32> to vector<1x16xf32>
    %19 = vector.shape_cast %18 : vector<1x16xf32> to vector<1x1x16xf32>
    %cst_11 = arith.constant 2.560000e+02 : f32
    %20 = vector.broadcast %cst_11 : f32 to vector<1x1x16xf32>
    %21 = arith.divf %19, %20 : vector<1x1x16xf32>
    %cst_12 = arith.constant dense<0.000000e+00> : vector<1x1xf32>
    %22 = vector.multi_reduction <add>, %21, %cst_12 [2] : vector<1x1x16xf32> to vector<1x1xf32>
    %23 = vector.shape_cast %22 : vector<1x1xf32> to vector<1x1x1xf32>
    %cst_13 = arith.constant 1.600000e+01 : f32
    %24 = vector.broadcast %cst_13 : f32 to vector<1x1x1xf32>
    %25 = arith.divf %23, %24 : vector<1x1x1xf32>
    %26 = vector.broadcast %25 : vector<1x1x1xf32> to vector<1x1x16xf32>
    %27 = arith.subf %21, %26 : vector<1x1x16xf32>
    %28 = arith.mulf %27, %27 : vector<1x1x16xf32>
    %cst_14 = arith.constant dense<0.000000e+00> : vector<1x1xf32>
    %29 = vector.multi_reduction <add>, %28, %cst_14 [2] : vector<1x1x16xf32> to vector<1x1xf32>
    %30 = vector.shape_cast %29 : vector<1x1xf32> to vector<1x1x1xf32>
    %cst_15 = arith.constant 1.600000e+01 : f32
    %31 = vector.broadcast %cst_15 : f32 to vector<1x1x1xf32>
    %32 = arith.divf %30, %31 : vector<1x1x1xf32>
    %33 = vector.broadcast %25 : vector<1x1x1xf32> to vector<1x1x16xf32>
    %34 = arith.subf %21, %33 : vector<1x1x16xf32>
    %cst_16 = arith.constant 9.99999997E-7 : f32
    %35 = vector.broadcast %cst_16 : f32 to vector<1x1x1xf32>
    %36 = arith.addf %32, %35 : vector<1x1x1xf32>
    %37 = math.rsqrt %36 : vector<1x1x1xf32>
    %38 = vector.broadcast %37 : vector<1x1x1xf32> to vector<1x1x16xf32>
    %39 = arith.mulf %34, %38 : vector<1x1x16xf32>
    %40 = vector.shape_cast %15 : vector<1x16xf32> to vector<1x1x16xf32>
    %41 = arith.mulf %39, %40 : vector<1x1x16xf32>
    %42 = vector.shape_cast %16 : vector<1x16xf32> to vector<1x1x16xf32>
    %43 = arith.addf %41, %42 : vector<1x1x16xf32>
    %44 = vector.broadcast %43 : vector<1x1x16xf32> to vector<1x256x16xf32>
    %45 = arith.addf %44, %17 : vector<1x256x16xf32>
    %46 = arith.negf %45 : vector<1x256x16xf32>
    %47 = math.exp %46 : vector<1x256x16xf32>
    %cst_17 = arith.constant 1.000000e+00 : f32
    %48 = vector.broadcast %cst_17 : f32 to vector<1x256x16xf32>
    %49 = arith.addf %48, %47 : vector<1x256x16xf32>
    %50 = arith.divf %48, %49 : vector<1x256x16xf32>
    %51 = arith.mulf %50, %17 : vector<1x256x16xf32>
    %52 = vector.shape_cast %51 : vector<1x256x16xf32> to vector<256x16xf32>
    %53 = vector.extract_strided_slice %52 {offsets = [239, 0], sizes = [17, 16], strides = [1, 1]} : vector<256x16xf32> to vector<17x16xf32>
    %54 = vector.extract_strided_slice %52 {offsets = [0, 0], sizes = [239, 16], strides = [1, 1]} : vector<256x16xf32> to vector<239x16xf32>
    %55 = tpu.concatenate %53, %54 in 0 : vector<17x16xf32>, vector<239x16xf32> -> vector<256x16xf32>
    %56 = vector.extract_strided_slice %52 {offsets = [240, 0], sizes = [16, 16], strides = [1, 1]} : vector<256x16xf32> to vector<16x16xf32>
    %57 = vector.extract_strided_slice %52 {offsets = [0, 0], sizes = [240, 16], strides = [1, 1]} : vector<256x16xf32> to vector<240x16xf32>
    %58 = tpu.concatenate %56, %57 in 0 : vector<16x16xf32>, vector<240x16xf32> -> vector<256x16xf32>
    %59 = vector.extract_strided_slice %52 {offsets = [241, 0], sizes = [15, 16], strides = [1, 1]} : vector<256x16xf32> to vector<15x16xf32>
    %60 = vector.extract_strided_slice %52 {offsets = [0, 0], sizes = [241, 16], strides = [1, 1]} : vector<256x16xf32> to vector<241x16xf32>
    %61 = tpu.concatenate %59, %60 in 0 : vector<15x16xf32>, vector<241x16xf32> -> vector<256x16xf32>
    %62 = vector.extract_strided_slice %52 {offsets = [255, 0], sizes = [1, 16], strides = [1, 1]} : vector<256x16xf32> to vector<1x16xf32>
    %63 = vector.extract_strided_slice %52 {offsets = [0, 0], sizes = [255, 16], strides = [1, 1]} : vector<256x16xf32> to vector<255x16xf32>
    %64 = tpu.concatenate %62, %63 in 0 : vector<1x16xf32>, vector<255x16xf32> -> vector<256x16xf32>
    %65 = vector.extract_strided_slice %52 {offsets = [1, 0], sizes = [255, 16], strides = [1, 1]} : vector<256x16xf32> to vector<255x16xf32>
    %66 = vector.extract_strided_slice %52 {offsets = [0, 0], sizes = [1, 16], strides = [1, 1]} : vector<256x16xf32> to vector<1x16xf32>
    %67 = tpu.concatenate %65, %66 in 0 : vector<255x16xf32>, vector<1x16xf32> -> vector<256x16xf32>
    %68 = vector.extract_strided_slice %52 {offsets = [15, 0], sizes = [241, 16], strides = [1, 1]} : vector<256x16xf32> to vector<241x16xf32>
    %69 = vector.extract_strided_slice %52 {offsets = [0, 0], sizes = [15, 16], strides = [1, 1]} : vector<256x16xf32> to vector<15x16xf32>
    %70 = tpu.concatenate %68, %69 in 0 : vector<241x16xf32>, vector<15x16xf32> -> vector<256x16xf32>
    %71 = vector.extract_strided_slice %52 {offsets = [16, 0], sizes = [240, 16], strides = [1, 1]} : vector<256x16xf32> to vector<240x16xf32>
    %72 = vector.extract_strided_slice %52 {offsets = [0, 0], sizes = [16, 16], strides = [1, 1]} : vector<256x16xf32> to vector<16x16xf32>
    %73 = tpu.concatenate %71, %72 in 0 : vector<240x16xf32>, vector<16x16xf32> -> vector<256x16xf32>
    %74 = vector.extract_strided_slice %52 {offsets = [17, 0], sizes = [239, 16], strides = [1, 1]} : vector<256x16xf32> to vector<239x16xf32>
    %75 = vector.extract_strided_slice %52 {offsets = [0, 0], sizes = [17, 16], strides = [1, 1]} : vector<256x16xf32> to vector<17x16xf32>
    %76 = tpu.concatenate %74, %75 in 0 : vector<239x16xf32>, vector<17x16xf32> -> vector<256x16xf32>
    %77 = tpu.concatenate %55, %58, %61, %64, %52, %67, %70, %73, %76 in 1 : vector<256x16xf32>, vector<256x16xf32>, vector<256x16xf32>, vector<256x16xf32>, vector<256x16xf32>, vector<256x16xf32>, vector<256x16xf32>, vector<256x16xf32>, vector<256x16xf32> -> vector<256x144xf32>
    %c0_18 = arith.constant 0 : index
    %c0_19 = arith.constant 0 : index
    %78 = vector.load %arg2[%c0_18, %c0_19] : memref<256x144xf32, #tpu.memory_space<vmem>>, vector<256x144xf32>
    %79 = arith.mulf %77, %78 : vector<256x144xf32>
    %80 = arith.truncf %79 : vector<256x144xf32> to vector<256x144xbf16>
    %c0_20 = arith.constant 0 : index
    %c0_21 = arith.constant 0 : index
    %81 = vector.load %arg4[%c0_20, %c0_21] : memref<144x16xbf16, #tpu.memory_space<vmem>>, vector<144x16xbf16>
    %cst_22 = arith.constant dense<0.000000e+00> : vector<256x16xf32>
    %82 = tpu.matmul %80, %81, %cst_22 {dimension_numbers = #tpu.dot_dimension_numbers<[1], [0], [0], [1], [0, 0, 1, 1], [], []>} : vector<256x144xbf16>, vector<144x16xbf16>, vector<256x16xf32> -> vector<256x16xf32>
    %83 = vector.extract_strided_slice %4 {offsets = [0, 0], sizes = [1, 16], strides = [1, 1]} : vector<4x16xf32> to vector<1x16xf32>
    %84 = vector.broadcast %83 : vector<1x16xf32> to vector<256x16xf32>
    %85 = arith.mulf %82, %84 : vector<256x16xf32>
    %86 = vector.extract_strided_slice %4 {offsets = [1, 0], sizes = [1, 16], strides = [1, 1]} : vector<4x16xf32> to vector<1x16xf32>
    %87 = vector.broadcast %86 : vector<1x16xf32> to vector<256x16xf32>
    %88 = arith.addf %85, %87 : vector<256x16xf32>
    %89 = vector.extract_strided_slice %4 {offsets = [2, 0], sizes = [1, 16], strides = [1, 1]} : vector<4x16xf32> to vector<1x16xf32>
    %90 = vector.extract_strided_slice %4 {offsets = [3, 0], sizes = [1, 16], strides = [1, 1]} : vector<4x16xf32> to vector<1x16xf32>
    %91 = vector.shape_cast %88 : vector<256x16xf32> to vector<1x256x16xf32>
    %cst_23 = arith.constant dense<0.000000e+00> : vector<1x16xf32>
    %92 = vector.multi_reduction <add>, %91, %cst_23 [1] : vector<1x256x16xf32> to vector<1x16xf32>
    %93 = vector.shape_cast %92 : vector<1x16xf32> to vector<1x1x16xf32>
    %cst_24 = arith.constant 2.560000e+02 : f32
    %94 = vector.broadcast %cst_24 : f32 to vector<1x1x16xf32>
    %95 = arith.divf %93, %94 : vector<1x1x16xf32>
    %cst_25 = arith.constant dense<0.000000e+00> : vector<1x1xf32>
    %96 = vector.multi_reduction <add>, %95, %cst_25 [2] : vector<1x1x16xf32> to vector<1x1xf32>
    %97 = vector.shape_cast %96 : vector<1x1xf32> to vector<1x1x1xf32>
    %cst_26 = arith.constant 1.600000e+01 : f32
    %98 = vector.broadcast %cst_26 : f32 to vector<1x1x1xf32>
    %99 = arith.divf %97, %98 : vector<1x1x1xf32>
    %100 = vector.broadcast %99 : vector<1x1x1xf32> to vector<1x1x16xf32>
    %101 = arith.subf %95, %100 : vector<1x1x16xf32>
    %102 = arith.mulf %101, %101 : vector<1x1x16xf32>
    %cst_27 = arith.constant dense<0.000000e+00> : vector<1x1xf32>
    %103 = vector.multi_reduction <add>, %102, %cst_27 [2] : vector<1x1x16xf32> to vector<1x1xf32>
    %104 = vector.shape_cast %103 : vector<1x1xf32> to vector<1x1x1xf32>
    %cst_28 = arith.constant 1.600000e+01 : f32
    %105 = vector.broadcast %cst_28 : f32 to vector<1x1x1xf32>
    %106 = arith.divf %104, %105 : vector<1x1x1xf32>
    %107 = vector.broadcast %99 : vector<1x1x1xf32> to vector<1x1x16xf32>
    %108 = arith.subf %95, %107 : vector<1x1x16xf32>
    %cst_29 = arith.constant 9.99999997E-7 : f32
    %109 = vector.broadcast %cst_29 : f32 to vector<1x1x1xf32>
    %110 = arith.addf %106, %109 : vector<1x1x1xf32>
    %111 = math.rsqrt %110 : vector<1x1x1xf32>
    %112 = vector.broadcast %111 : vector<1x1x1xf32> to vector<1x1x16xf32>
    %113 = arith.mulf %108, %112 : vector<1x1x16xf32>
    %114 = vector.shape_cast %89 : vector<1x16xf32> to vector<1x1x16xf32>
    %115 = arith.mulf %113, %114 : vector<1x1x16xf32>
    %116 = vector.shape_cast %90 : vector<1x16xf32> to vector<1x1x16xf32>
    %117 = arith.addf %115, %116 : vector<1x1x16xf32>
    %118 = vector.broadcast %117 : vector<1x1x16xf32> to vector<1x256x16xf32>
    %119 = arith.addf %118, %91 : vector<1x256x16xf32>
    %120 = arith.negf %119 : vector<1x256x16xf32>
    %121 = math.exp %120 : vector<1x256x16xf32>
    %cst_30 = arith.constant 1.000000e+00 : f32
    %122 = vector.broadcast %cst_30 : f32 to vector<1x256x16xf32>
    %123 = arith.addf %122, %121 : vector<1x256x16xf32>
    %124 = arith.divf %122, %123 : vector<1x256x16xf32>
    %125 = arith.mulf %124, %91 : vector<1x256x16xf32>
    %126 = vector.shape_cast %125 : vector<1x256x16xf32> to vector<256x16xf32>
    %127 = arith.truncf %126 : vector<256x16xf32> to vector<256x16xbf16>
    %c0_31 = arith.constant 0 : index
    %c0_32 = arith.constant 0 : index
    %128 = vector.load %arg5[%c0_31, %c0_32] : memref<16x64xbf16, #tpu.memory_space<vmem>>, vector<16x64xbf16>
    %cst_33 = arith.constant dense<0.000000e+00> : vector<256x64xf32>
    %129 = tpu.matmul %127, %128, %cst_33 {dimension_numbers = #tpu.dot_dimension_numbers<[1], [0], [0], [1], [0, 0, 1, 1], [], []>} : vector<256x16xbf16>, vector<16x64xbf16>, vector<256x64xf32> -> vector<256x64xf32>
    %130 = vector.extract_strided_slice %5 {offsets = [0, 0], sizes = [1, 64], strides = [1, 1]} : vector<4x64xf32> to vector<1x64xf32>
    %131 = vector.broadcast %130 : vector<1x64xf32> to vector<256x64xf32>
    %132 = arith.mulf %129, %131 : vector<256x64xf32>
    %133 = vector.extract_strided_slice %5 {offsets = [1, 0], sizes = [1, 64], strides = [1, 1]} : vector<4x64xf32> to vector<1x64xf32>
    %134 = vector.broadcast %133 : vector<1x64xf32> to vector<256x64xf32>
    %135 = arith.addf %132, %134 : vector<256x64xf32>
    %136 = arith.addf %135, %2 : vector<256x64xf32>
    %137 = vector.extract_strided_slice %5 {offsets = [2, 0], sizes = [1, 64], strides = [1, 1]} : vector<4x64xf32> to vector<1x64xf32>
    %138 = vector.extract_strided_slice %5 {offsets = [3, 0], sizes = [1, 64], strides = [1, 1]} : vector<4x64xf32> to vector<1x64xf32>
    %139 = vector.shape_cast %136 : vector<256x64xf32> to vector<1x256x64xf32>
    %cst_34 = arith.constant dense<0.000000e+00> : vector<1x64xf32>
    %140 = vector.multi_reduction <add>, %139, %cst_34 [1] : vector<1x256x64xf32> to vector<1x64xf32>
    %141 = vector.shape_cast %140 : vector<1x64xf32> to vector<1x1x64xf32>
    %cst_35 = arith.constant 2.560000e+02 : f32
    %142 = vector.broadcast %cst_35 : f32 to vector<1x1x64xf32>
    %143 = arith.divf %141, %142 : vector<1x1x64xf32>
    %cst_36 = arith.constant dense<0.000000e+00> : vector<1x1xf32>
    %144 = vector.multi_reduction <add>, %143, %cst_36 [2] : vector<1x1x64xf32> to vector<1x1xf32>
    %145 = vector.shape_cast %144 : vector<1x1xf32> to vector<1x1x1xf32>
    %cst_37 = arith.constant 6.400000e+01 : f32
    %146 = vector.broadcast %cst_37 : f32 to vector<1x1x1xf32>
    %147 = arith.divf %145, %146 : vector<1x1x1xf32>
    %148 = vector.broadcast %147 : vector<1x1x1xf32> to vector<1x1x64xf32>
    %149 = arith.subf %143, %148 : vector<1x1x64xf32>
    %150 = arith.mulf %149, %149 : vector<1x1x64xf32>
    %cst_38 = arith.constant dense<0.000000e+00> : vector<1x1xf32>
    %151 = vector.multi_reduction <add>, %150, %cst_38 [2] : vector<1x1x64xf32> to vector<1x1xf32>
    %152 = vector.shape_cast %151 : vector<1x1xf32> to vector<1x1x1xf32>
    %cst_39 = arith.constant 6.400000e+01 : f32
    %153 = vector.broadcast %cst_39 : f32 to vector<1x1x1xf32>
    %154 = arith.divf %152, %153 : vector<1x1x1xf32>
    %155 = vector.broadcast %147 : vector<1x1x1xf32> to vector<1x1x64xf32>
    %156 = arith.subf %143, %155 : vector<1x1x64xf32>
    %cst_40 = arith.constant 9.99999997E-7 : f32
    %157 = vector.broadcast %cst_40 : f32 to vector<1x1x1xf32>
    %158 = arith.addf %154, %157 : vector<1x1x1xf32>
    %159 = math.rsqrt %158 : vector<1x1x1xf32>
    %160 = vector.broadcast %159 : vector<1x1x1xf32> to vector<1x1x64xf32>
    %161 = arith.mulf %156, %160 : vector<1x1x64xf32>
    %162 = vector.shape_cast %137 : vector<1x64xf32> to vector<1x1x64xf32>
    %163 = arith.mulf %161, %162 : vector<1x1x64xf32>
    %164 = vector.shape_cast %138 : vector<1x64xf32> to vector<1x1x64xf32>
    %165 = arith.addf %163, %164 : vector<1x1x64xf32>
    %166 = vector.broadcast %165 : vector<1x1x64xf32> to vector<1x256x64xf32>
    %167 = arith.addf %166, %139 : vector<1x256x64xf32>
    %168 = arith.negf %167 : vector<1x256x64xf32>
    %169 = math.exp %168 : vector<1x256x64xf32>
    %cst_41 = arith.constant 1.000000e+00 : f32
    %170 = vector.broadcast %cst_41 : f32 to vector<1x256x64xf32>
    %171 = arith.addf %170, %169 : vector<1x256x64xf32>
    %172 = arith.divf %170, %171 : vector<1x256x64xf32>
    %173 = arith.mulf %172, %139 : vector<1x256x64xf32>
    %174 = vector.shape_cast %173 : vector<1x256x64xf32> to vector<256x64xf32>
    %175 = tpu.transpose %174, [1, 0] : vector<256x64xf32> -> vector<64x256xf32>
    %c0_42 = arith.constant 0 : index
    %c0_43 = arith.constant 0 : index
    %c0_44 = arith.constant 0 : index
    %176 = vector.load %arg9[%c0_42, %c0_43, %c0_44] : memref<1x64x256xf32, #tpu.memory_space<vmem>>, vector<1x64x256xf32>
    %177 = vector.shape_cast %176 : vector<1x64x256xf32> to vector<64x256xf32>
    %178 = vector.shape_cast %175 : vector<64x256xf32> to vector<1x64x256xf32>
    tpu.vector_store %arg9[%c0_42, %c0_43, %c0_44], %178 {strides = array<i32>} : memref<1x64x256xf32, #tpu.memory_space<vmem>>, vector<1x64x256xf32>,
    return
  }
  func.func @transform_0(%arg0: i32) -> (i32, i32, i32) {
    %c0_i32 = arith.constant 0 : i32
    %c0_i32_0 = arith.constant 0 : i32
    %c0_i32_1 = arith.constant 0 : i32
    return %arg0, %c0_i32, %c0_i32_0 : i32, i32, i32
  }
  func.func @transform_1(%arg0: i32) -> (i32, i32) {
    %c0_i32 = arith.constant 0 : i32
    %c0_i32_0 = arith.constant 0 : i32
    %c0_i32_1 = arith.constant 0 : i32
    return %c0_i32, %c0_i32_0 : i32, i32
  }
  func.func @transform_2(%arg0: i32) -> (i32, i32) {
    %c0_i32 = arith.constant 0 : i32
    %c0_i32_0 = arith.constant 0 : i32
    %c0_i32_1 = arith.constant 0 : i32
    return %c0_i32, %c0_i32_0 : i32, i32
  }
  func.func @transform_3(%arg0: i32) -> (i32, i32) {
    %c0_i32 = arith.constant 0 : i32
    %c0_i32_0 = arith.constant 0 : i32
    %c0_i32_1 = arith.constant 0 : i32
    return %c0_i32, %c0_i32_0 : i32, i32
  }
  func.func @transform_4(%arg0: i32) -> (i32, i32) {
    %c0_i32 = arith.constant 0 : i32
    %c0_i32_0 = arith.constant 0 : i32
    %c0_i32_1 = arith.constant 0 : i32
    return %c0_i32, %c0_i32_0 : i32, i32
  }
  func.func @transform_5(%arg0: i32) -> (i32, i32) {
    %c0_i32 = arith.constant 0 : i32
    %c0_i32_0 = arith.constant 0 : i32
    %c0_i32_1 = arith.constant 0 : i32
    return %c0_i32, %c0_i32_0 : i32, i32
  }
  func.func @transform_6(%arg0: i32) -> (i32, i32) {
    %c0_i32 = arith.constant 0 : i32
    %c0_i32_0 = arith.constant 0 : i32
    %c0_i32_1 = arith.constant 0 : i32
    return %c0_i32, %c0_i32_0 : i32, i32
  }
  func.func @transform_7(%arg0: i32) -> (i32, i32) {
    %c0_i32 = arith.constant 0 : i32
    %c0_i32_0 = arith.constant 0 : i32
    %c0_i32_1 = arith.constant 0 : i32
    return %c0_i32, %c0_i32_0 : i32, i32
  }
  func.func @transform_8(%arg0: i32) -> (i32, i32, i32) {
    %c0_i32 = arith.constant 0 : i32
    %c0_i32_0 = arith.constant 0 : i32
    %c0_i32_1 = arith.constant 0 : i32
    return %arg0, %c0_i32, %c0_i32_0 : i32, i32, i32
  }
}

</mosaic_0001>

<llo_original>
// kernel: bottleneck_forward.1
$region0: #{bottleneck_forward.1}
  #allocation0 [shape = 'u32[]', space=smem, size = 0x4, offset = 0x4, fixed_abs, tag = 'smem constant byte address 0x4 - core index']
  #allocation1 [shape = 'u32[144,128]{1,0:T(1,128)}', space=vmem, size = 0x12000, scoped, tag = 'internal scratch']
  %s0 = inlined_call_operand.vmem [shape: f32[4,64,256], index: 0, kind: input, shape index: {}]
  %s1 = inlined_call_operand.vmem [shape: f32[256,144], index: 1, kind: input, shape index: {}]
  %s2 = inlined_call_operand.vmem [shape: bf16[64,16], index: 2, kind: input, shape index: {}]
  %s3 = inlined_call_operand.vmem [shape: bf16[144,16], index: 3, kind: input, shape index: {}]
  %s4 = inlined_call_operand.vmem [shape: bf16[16,64], index: 4, kind: input, shape index: {}]
  %s5 = inlined_call_operand.vmem [shape: f32[4,16], index: 5, kind: input, shape index: {}]
  %s6 = inlined_call_operand.vmem [shape: f32[4,16], index: 6, kind: input, shape index: {}]
  %s7 = inlined_call_operand.vmem [shape: f32[4,64], index: 7, kind: input, shape index: {}]
  %s8 = inlined_call_operand.vmem [shape: f32[4,64,256], index: 8, kind: output, shape index: {}]
  %s9 = sld [smem:[#allocation0]]
  $region65: #{bottleneck_forward.1} parent=0
    _
  %s11 = ssub.s32 1, %s9
  %s12 = scalar_select 0, %s11, %s9
  loop: start=0, step=1, limit=6
  $region2: #{bottleneck_forward.1} parent=0 // loop_pre_header
    _
  $region3: #{bottleneck_forward.1} parent=0 // loop_header
    %s14 = sphi 0, %s18
    %p15 = scmp.ge.s32.totalorder %s14, 6
    %s24 = sphi 0, %s26
    %s27 = sphi 0, %s24
    %s28 = sphi 0, %s27
    %s44 = sphi 0, %s28
    %s48 = sphi 0, %s48
    %s50 = sphi 0, %s48
    %s51 = sphi 0, %s50
    %s65 = sphi 0, %s51
    %s69 = sphi 0, %s69
    %s71 = sphi 0, %s69
    %s72 = sphi 0, %s71
    %s86 = sphi 0, %s72
    %s90 = sphi 0, %s90
    %s92 = sphi 0, %s90
    %s93 = sphi 0, %s92
    %s107 = sphi 0, %s93
    %s111 = sphi 0, %s111
    %s113 = sphi 0, %s111
    %s114 = sphi 0, %s113
    %s128 = sphi 0, %s114
    %s132 = sphi 0, %s132
    %s134 = sphi 0, %s132
    %s135 = sphi 0, %s134
    %s149 = sphi 0, %s135
    %s153 = sphi 0, %s153
    %s155 = sphi 0, %s153
    %s156 = sphi 0, %s155
    %s170 = sphi 0, %s156
    %s174 = sphi 0, %s174
    %s176 = sphi 0, %s174
    %s177 = sphi 0, %s176
    %s191 = sphi 0, %s177
    %s197 = sphi 0, %s199
    %s200 = sphi 0, %s197
    %s201 = sphi 0, %s200
    %s217 = sphi 0, %s201
  $region4: #{bottleneck_forward.1} parent=0 // loop_header_branch
    %17 = sbr.rel (%p15) target = $region8
  $region5: #{bottleneck_forward.1} parent=0 // loop_body
    %s19 = ssub.s32 %s14, 1
    %s20 = ssub.s32 %s14, 2
    %s21 = sadd.s32 %s14, 1
    %s22 = ssub.s32 %s14, %s21
    %p23 = scmp.eq.s32.totalorder %s22, 0
    %s25 = sadd.s32 %s24, 1
    %s26 = scalar_select %p23, %s24, %s25
    %p29 = pneg %p23
    %p30 = scmp.eq.s32.totalorder %s14, 3
    %p31 = por %p29, %p30
    %p32 = scmp.ne.s32.totalorder %s24, %s27
    %p33 = scmp.eq.s32.totalorder %s14, 0
    %p34 = por %p32, %p33
    %p35 = scmp.ne.s32.totalorder %s24, %s27
    %p36 = scmp.eq.s32.totalorder %s19, 3
    %p37 = por %p35, %p36
    %p38 = scmp.ne.s32.totalorder %s27, %s28
    %p39 = scmp.eq.s32.totalorder %s19, 0
    %p40 = por %p38, %p39
    %p41 = scmp.ne.s32.totalorder %s27, %s28
    %p42 = scmp.eq.s32.totalorder %s20, 3
    %p43 = por %p41, %p42
    %p45 = scmp.ne.s32.totalorder %s28, %s44
    %p46 = scmp.eq.s32.totalorder %s20, 0
    %p47 = por %p45, %p46
    %s49 = sadd.s32 %s48, 1
    %p52 = scmp.eq.s32.totalorder %s14, 3
    %p53 = scmp.ne.s32.totalorder %s48, %s50
    %p54 = scmp.eq.s32.totalorder %s14, 0
    %p55 = por %p53, %p54
    %p56 = scmp.ne.s32.totalorder %s48, %s50
    %p57 = scmp.eq.s32.totalorder %s19, 3
    %p58 = por %p56, %p57
    %p59 = scmp.ne.s32.totalorder %s50, %s51
    %p60 = scmp.eq.s32.totalorder %s19, 0
    %p61 = por %p59, %p60
    %p62 = scmp.ne.s32.totalorder %s50, %s51
    %p63 = scmp.eq.s32.totalorder %s20, 3
    %p64 = por %p62, %p63
    %p66 = scmp.ne.s32.totalorder %s51, %s65
    %p67 = scmp.eq.s32.totalorder %s20, 0
    %p68 = por %p66, %p67
    %s70 = sadd.s32 %s69, 1
    %p73 = scmp.eq.s32.totalorder %s14, 3
    %p74 = scmp.ne.s32.totalorder %s69, %s71
    %p75 = scmp.eq.s32.totalorder %s14, 0
    %p76 = por %p74, %p75
    %p77 = scmp.ne.s32.totalorder %s69, %s71
    %p78 = scmp.eq.s32.totalorder %s19, 3
    %p79 = por %p77, %p78
    %p80 = scmp.ne.s32.totalorder %s71, %s72
    %p81 = scmp.eq.s32.totalorder %s19, 0
    %p82 = por %p80, %p81
    %p83 = scmp.ne.s32.totalorder %s71, %s72
    %p84 = scmp.eq.s32.totalorder %s20, 3
    %p85 = por %p83, %p84
    %p87 = scmp.ne.s32.totalorder %s72, %s86
    %p88 = scmp.eq.s32.totalorder %s20, 0
    %p89 = por %p87, %p88
    %s91 = sadd.s32 %s90, 1
    %p94 = scmp.eq.s32.totalorder %s14, 3
    %p95 = scmp.ne.s32.totalorder %s90, %s92
    %p96 = scmp.eq.s32.totalorder %s14, 0
    %p97 = por %p95, %p96
    %p98 = scmp.ne.s32.totalorder %s90, %s92
    %p99 = scmp.eq.s32.totalorder %s19, 3
    %p100 = por %p98, %p99
    %p101 = scmp.ne.s32.totalorder %s92, %s93
    %p102 = scmp.eq.s32.totalorder %s19, 0
    %p103 = por %p101, %p102
    %p104 = scmp.ne.s32.totalorder %s92, %s93
    %p105 = scmp.eq.s32.totalorder %s20, 3
    %p106 = por %p104, %p105
    %p108 = scmp.ne.s32.totalorder %s93, %s107
    %p109 = scmp.eq.s32.totalorder %s20, 0
    %p110 = por %p108, %p109
    %s112 = sadd.s32 %s111, 1
    %p115 = scmp.eq.s32.totalorder %s14, 3
    %p116 = scmp.ne.s32.totalorder %s111, %s113
    %p117 = scmp.eq.s32.totalorder %s14, 0
    %p118 = por %p116, %p117
    %p119 = scmp.ne.s32.totalorder %s111, %s113
    %p120 = scmp.eq.s32.totalorder %s19, 3
    %p121 = por %p119, %p120
    %p122 = scmp.ne.s32.totalorder %s113, %s114
    %p123 = scmp.eq.s32.totalorder %s19, 0
    %p124 = por %p122, %p123
    %p125 = scmp.ne.s32.totalorder %s113, %s114
    %p126 = scmp.eq.s32.totalorder %s20, 3
    %p127 = por %p125, %p126
    %p129 = scmp.ne.s32.totalorder %s114, %s128
    %p130 = scmp.eq.s32.totalorder %s20, 0
    %p131 = por %p129, %p130
    %s133 = sadd.s32 %s132, 1
    %p136 = scmp.eq.s32.totalorder %s14, 3
    %p137 = scmp.ne.s32.totalorder %s132, %s134
    %p138 = scmp.eq.s32.totalorder %s14, 0
    %p139 = por %p137, %p138
    %p140 = scmp.ne.s32.totalorder %s132, %s134
    %p141 = scmp.eq.s32.totalorder %s19, 3
    %p142 = por %p140, %p141
    %p143 = scmp.ne.s32.totalorder %s134, %s135
    %p144 = scmp.eq.s32.totalorder %s19, 0
    %p145 = por %p143, %p144
    %p146 = scmp.ne.s32.totalorder %s134, %s135
    %p147 = scmp.eq.s32.totalorder %s20, 3
    %p148 = por %p146, %p147
    %p150 = scmp.ne.s32.totalorder %s135, %s149
    %p151 = scmp.eq.s32.totalorder %s20, 0
    %p152 = por %p150, %p151
    %s154 = sadd.s32 %s153, 1
    %p157 = scmp.eq.s32.totalorder %s14, 3
    %p158 = scmp.ne.s32.totalorder %s153, %s155
    %p159 = scmp.eq.s32.totalorder %s14, 0
    %p160 = por %p158, %p159
    %p161 = scmp.ne.s32.totalorder %s153, %s155
    %p162 = scmp.eq.s32.totalorder %s19, 3
    %p163 = por %p161, %p162
    %p164 = scmp.ne.s32.totalorder %s155, %s156
    %p165 = scmp.eq.s32.totalorder %s19, 0
    %p166 = por %p164, %p165
    %p167 = scmp.ne.s32.totalorder %s155, %s156
    %p168 = scmp.eq.s32.totalorder %s20, 3
    %p169 = por %p167, %p168
    %p171 = scmp.ne.s32.totalorder %s156, %s170
    %p172 = scmp.eq.s32.totalorder %s20, 0
    %p173 = por %p171, %p172
    %s175 = sadd.s32 %s174, 1
    %p178 = scmp.eq.s32.totalorder %s14, 3
    %p179 = scmp.ne.s32.totalorder %s174, %s176
    %p180 = scmp.eq.s32.totalorder %s14, 0
    %p181 = por %p179, %p180
    %p182 = scmp.ne.s32.totalorder %s174, %s176
    %p183 = scmp.eq.s32.totalorder %s19, 3
    %p184 = por %p182, %p183
    %p185 = scmp.ne.s32.totalorder %s176, %s177
    %p186 = scmp.eq.s32.totalorder %s19, 0
    %p187 = por %p185, %p186
    %p188 = scmp.ne.s32.totalorder %s176, %s177
    %p189 = scmp.eq.s32.totalorder %s20, 3
    %p190 = por %p188, %p189
    %p192 = scmp.ne.s32.totalorder %s177, %s191
    %p193 = scmp.eq.s32.totalorder %s20, 0
    %p194 = por %p192, %p193
    %s195 = ssub.s32 %s14, %s21
    %p196 = scmp.eq.s32.totalorder %s195, 0
    %s198 = sadd.s32 %s197, 1
    %s199 = scalar_select %p196, %s197, %s198
    %p202 = pneg %p196
    %p203 = scmp.eq.s32.totalorder %s14, 3
    %p204 = por %p202, %p203
    %p205 = scmp.ne.s32.totalorder %s197, %s200
    %p206 = scmp.eq.s32.totalorder %s14, 0
    %p207 = por %p205, %p206
    %p208 = scmp.ne.s32.totalorder %s197, %s200
    %p209 = scmp.eq.s32.totalorder %s19, 3
    %p210 = por %p208, %p209
    %p211 = scmp.ne.s32.totalorder %s200, %s201
    %p212 = scmp.eq.s32.totalorder %s19, 0
    %p213 = por %p211, %p212
    %p214 = scmp.ne.s32.totalorder %s200, %s201
    %p215 = scmp.eq.s32.totalorder %s20, 3
    %p216 = por %p214, %p215
    %p218 = scmp.ne.s32.totalorder %s201, %s217
    %p219 = scmp.eq.s32.totalorder %s20, 0
    %p220 = por %p218, %p219
    %p221 = scmp.le.s32.totalorder 1, %s14
    %p222 = scmp.lt.s32.totalorder %s14, 5
    %p223 = pnand %p221, %p222
    %p224 = pneg %p223
    // Predicated region
    $region9: #{bottleneck_forward.1} parent=5 // pred_check
      _
    $region10: #{bottleneck_forward.1} parent=5 // pred_check_branch
      %226 = sbr.rel (%p223) target = $region12
    $region11: #{bottleneck_forward.1} parent=5 // pred_region
      %s227 = ssub.s32 %s14, 1
      // Predicated region
      $region13: #{bottleneck_forward.1} parent=11 // pred_check
        %p228 = pneg %p61
      $region14: #{bottleneck_forward.1} parent=11 // pred_check_branch
        %230 = sbr.rel (%p228) target = $region16
      $region15: #{bottleneck_forward.1} parent=11 // pred_region
        _
      $region16: #{bottleneck_forward.1} parent=11 // pred_fallthru
        _
      // Predicated region
      $region17: #{bottleneck_forward.1} parent=11 // pred_check
        %p231 = pneg %p82
      $region18: #{bottleneck_forward.1} parent=11 // pred_check_branch
        %233 = sbr.rel (%p231) target = $region20
      $region19: #{bottleneck_forward.1} parent=11 // pred_region
        _
      $region20: #{bottleneck_forward.1} parent=11 // pred_fallthru
        _
      // Predicated region
      $region21: #{bottleneck_forward.1} parent=11 // pred_check
        %p234 = pneg %p103
      $region22: #{bottleneck_forward.1} parent=11 // pred_check_branch
        %236 = sbr.rel (%p234) target = $region24
      $region23: #{bottleneck_forward.1} parent=11 // pred_region
        _
      $region24: #{bottleneck_forward.1} parent=11 // pred_fallthru
        _
      // Predicated region
      $region25: #{bottleneck_forward.1} parent=11 // pred_check
        %p237 = pneg %p124
      $region26: #{bottleneck_forward.1} parent=11 // pred_check_branch
        %239 = sbr.rel (%p237) target = $region28
      $region27: #{bottleneck_forward.1} parent=11 // pred_region
        _
      $region28: #{bottleneck_forward.1} parent=11 // pred_fallthru
        _
      // Predicated region
      $region29: #{bottleneck_forward.1} parent=11 // pred_check
        %p240 = pneg %p145
      $region30: #{bottleneck_forward.1} parent=11 // pred_check_branch
        %242 = sbr.rel (%p240) target = $region32
      $region31: #{bottleneck_forward.1} parent=11 // pred_region
        _
      $region32: #{bottleneck_forward.1} parent=11 // pred_fallthru
        _
      // Predicated region
      $region33: #{bottleneck_forward.1} parent=11 // pred_check
        %p243 = pneg %p166
      $region34: #{bottleneck_forward.1} parent=11 // pred_check_branch
        %245 = sbr.rel (%p243) target = $region36
      $region35: #{bottleneck_forward.1} parent=11 // pred_region
        _
      $region36: #{bottleneck_forward.1} parent=11 // pred_fallthru
        _
      // Predicated region
      $region37: #{bottleneck_forward.1} parent=11 // pred_check
        %p246 = pneg %p187
      $region38: #{bottleneck_forward.1} parent=11 // pred_check_branch
        %248 = sbr.rel (%p246) target = $region40
      $region39: #{bottleneck_forward.1} parent=11 // pred_region
        _
      $region40: #{bottleneck_forward.1} parent=11 // pred_fallthru
        _
    $region12: #{bottleneck_forward.1} parent=5 // pred_fallthru
      _
    %p249 = scmp.lt.s32.totalorder %s14, 4
    // Predicated region
    $region41: #{bottleneck_forward.1} parent=5 // pred_check
      %p250 = pneg %p249
    $region42: #{bottleneck_forward.1} parent=5 // pred_check_branch
      %252 = sbr.rel (%p250) target = $region44
    $region43: #{bottleneck_forward.1} parent=5 // pred_region
      // Predicated region
      $region45: #{bottleneck_forward.1} parent=43 // pred_check
        %p253 = pneg %p34
      $region46: #{bottleneck_forward.1} parent=43 // pred_check_branch
        %255 = sbr.rel (%p253) target = $region48
      $region47: #{bottleneck_forward.1} parent=43 // pred_region
        %p256 = scmp.lt.s32.totalorder %s14, 3
        %s257 = scalar_select %p256, %s14, 3
        %s258 = smul.addr %s257, 16
        %s259 = smul.addr %s258, 8
        %s260 = scalar_lea.vmem %s0, %s259
      $region48: #{bottleneck_forward.1} parent=43 // pred_fallthru
        _
    $region44: #{bottleneck_forward.1} parent=5 // pred_fallthru
      _
    %p261 = scmp.le.s32.totalorder 1, %s14
    %p262 = scmp.lt.s32.totalorder %s14, 5
    %p263 = pnand %p261, %p262
    %p264 = pneg %p263
    // Predicated region
    $region49: #{bottleneck_forward.1} parent=5 // pred_check
      _
    $region50: #{bottleneck_forward.1} parent=5 // pred_check_branch
      %266 = sbr.rel (%p263) target = $region52
    $region51: #{bottleneck_forward.1} parent=5 // pred_region
      %s267 = ssub.s32 %s14, 1
      %p268 = scmp.lt.s32.totalorder %s19, 3
      %s269 = scalar_select %p268, %s19, 3
      %s270 = smul.addr %s269, 16
      %s271 = smul.addr %s270, 8
      %s272 = scalar_lea.vmem %s0, %s271
      %p273 = pneg %p40
      %p274 = pneg %p37
      %p275 = pneg %p61
      %p276 = pneg %p58
      %p277 = pneg %p82
      %p278 = pneg %p79
      %p279 = pneg %p103
      %p280 = pneg %p100
      %p281 = pneg %p124
      %p282 = pneg %p121
      %p283 = pneg %p145
      %p284 = pneg %p142
      %p285 = pneg %p166
      %p286 = pneg %p163
      %p287 = pneg %p187
      %p288 = pneg %p184
      %p289 = pneg %p213
      %p290 = pneg %p210
      %p291 = scmp.lt.s32.totalorder %s19, 3
      %s292 = scalar_select %p291, %s19, 3
      %s293 = smul.addr %s292, 16
      %s294 = smul.addr %s293, 8
      %s295 = scalar_lea.vmem %s8, %s294
      %p296 = scmp.lt.s32.totalorder %s19, 3
      %s297 = scalar_select %p296, %s19, 3
      %s298 = smul.addr %s297, 16
      %s299 = smul.addr %s298, 8
      %s300 = scalar_lea.vmem %s0, %s299
      %p301 = scmp.lt.s32.totalorder %s19, 3
      %s302 = scalar_select %p301, %s19, 3
      %s303 = smul.addr %s302, 16
      %s304 = smul.addr %s303, 8
      %s305 = scalar_lea.vmem %s8, %s304
      %v307 = vld [vmem:[%s300] sm:$0xff]
      %v308 = vld [vmem:[%s300 + $0x8] sm:$0xff]
      %v309 = vld [vmem:[%s300 + $0x10] sm:$0xff]
      %v310 = vld [vmem:[%s300 + $0x18] sm:$0xff]
      %v311 = vld [vmem:[%s300 + $0x20] sm:$0xff]
      %v312 = vld [vmem:[%s300 + $0x28] sm:$0xff]
      %v313 = vld [vmem:[%s300 + $0x30] sm:$0xff]
      %v314 = vld [vmem:[%s300 + $0x38] sm:$0xff]
      %v315 = vld [vmem:[%s300 + $0x40] sm:$0xff]
      %v316 = vld [vmem:[%s300 + $0x48] sm:$0xff]
      %v317 = vld [vmem:[%s300 + $0x50] sm:$0xff]
      %v318 = vld [vmem:[%s300 + $0x58] sm:$0xff]
      %v319 = vld [vmem:[%s300 + $0x60] sm:$0xff]
      %v320 = vld [vmem:[%s300 + $0x68] sm:$0xff]
      %v321 = vld [vmem:[%s300 + $0x70] sm:$0xff]
      %v322 = vld [vmem:[%s300 + $0x78] sm:$0xff]
      %323 = vxpose.xlu0.b32.start [1/16] %v307, 128
      %324 = vxpose.xlu0.b32.cont [2/16] %v309, 128
      %325 = vxpose.xlu0.b32.cont [3/16] %v311, 128
      %326 = vxpose.xlu0.b32.cont [4/16] %v313, 128
      %327 = vxpose.xlu0.b32.cont [5/16] %v315, 128
      %328 = vxpose.xlu0.b32.cont [6/16] %v317, 128
      %329 = vxpose.xlu0.b32.cont [7/16] %v319, 128
      %330 = vxpose.xlu0.b32.cont [8/16] %v321, 128
      %331 = vxpose.xlu0.b32.cont [9/16] 0.0, 128
      %332 = vxpose.xlu0.b32.cont [10/16] 0.0, 128
      %333 = vxpose.xlu0.b32.cont [11/16] 0.0, 128
      %334 = vxpose.xlu0.b32.cont [12/16] 0.0, 128
      %335 = vxpose.xlu0.b32.cont [13/16] 0.0, 128
      %336 = vxpose.xlu0.b32.cont [14/16] 0.0, 128
      %337 = vxpose.xlu0.b32.cont [15/16] 0.0, 128
      %338 = vxpose.xlu0.b32.end [16/16] 0.0, 128
      %v339 = vpop.trf.xlu0
      %v340 = vpop.trf.xlu0
      %v341 = vpop.trf.xlu0
      %v342 = vpop.trf.xlu0
      %v343 = vpop.trf.xlu0
      %v344 = vpop.trf.xlu0
      %v345 = vpop.trf.xlu0
      %v346 = vpop.trf.xlu0
      %v347 = vpop.trf.xlu0
      %v348 = vpop.trf.xlu0
      %v349 = vpop.trf.xlu0
      %v350 = vpop.trf.xlu0
      %v351 = vpop.trf.xlu0
      %v352 = vpop.trf.xlu0
      %v353 = vpop.trf.xlu0
      %v354 = vpop.trf.xlu0
      %355 = vxpose.xlu0.b32.start [1/16] %v308, 128
      %356 = vxpose.xlu0.b32.cont [2/16] %v310, 128
      %357 = vxpose.xlu0.b32.cont [3/16] %v312, 128
      %358 = vxpose.xlu0.b32.cont [4/16] %v314, 128
      %359 = vxpose.xlu0.b32.cont [5/16] %v316, 128
      %360 = vxpose.xlu0.b32.cont [6/16] %v318, 128
      %361 = vxpose.xlu0.b32.cont [7/16] %v320, 128
      %362 = vxpose.xlu0.b32.cont [8/16] %v322, 128
      %363 = vxpose.xlu0.b32.cont [9/16] 0.0, 128
      %364 = vxpose.xlu0.b32.cont [10/16] 0.0, 128
      %365 = vxpose.xlu0.b32.cont [11/16] 0.0, 128
      %366 = vxpose.xlu0.b32.cont [12/16] 0.0, 128
      %367 = vxpose.xlu0.b32.cont [13/16] 0.0, 128
      %368 = vxpose.xlu0.b32.cont [14/16] 0.0, 128
      %369 = vxpose.xlu0.b32.cont [15/16] 0.0, 128
      %370 = vxpose.xlu0.b32.end [16/16] 0.0, 128
      %v371 = vpop.trf.xlu0
      %v372 = vpop.trf.xlu0
      %v373 = vpop.trf.xlu0
      %v374 = vpop.trf.xlu0
      %v375 = vpop.trf.xlu0
      %v376 = vpop.trf.xlu0
      %v377 = vpop.trf.xlu0
      %v378 = vpop.trf.xlu0
      %v379 = vpop.trf.xlu0
      %v380 = vpop.trf.xlu0
      %v381 = vpop.trf.xlu0
      %v382 = vpop.trf.xlu0
      %v383 = vpop.trf.xlu0
      %v384 = vpop.trf.xlu0
      %v385 = vpop.trf.xlu0
      %v386 = vpop.trf.xlu0
      %v387 = vld [vmem:[%s5] sm:$0xf]
      %v388 = vld [vmem:[%s6] sm:$0xf]
      %v389 = vld [vmem:[%s7] sm:$0xf]
      %v390 = vpack.c.bf16 %v340, %v339
      %v391 = vpack.c.bf16 %v342, %v341
      %v392 = vpack.c.bf16 %v344, %v343
      %v393 = vpack.c.bf16 %v346, %v345
      %v394 = vpack.c.bf16 %v348, %v347
      %v395 = vpack.c.bf16 %v350, %v349
      %v396 = vpack.c.bf16 %v352, %v351
      %v397 = vpack.c.bf16 %v354, %v353
      %v398 = vpack.c.bf16 %v372, %v371
      %v399 = vpack.c.bf16 %v374, %v373
      %v400 = vpack.c.bf16 %v376, %v375
      %v401 = vpack.c.bf16 %v378, %v377
      %v402 = vpack.c.bf16 %v380, %v379
      %v403 = vpack.c.bf16 %v382, %v381
      %v404 = vpack.c.bf16 %v384, %v383
      %v405 = vpack.c.bf16 %v386, %v385
      %v406 = vld [vmem:[%s2] sm:$0xf]
      %v407 = vld [vmem:[%s2 + $0x4] sm:$0xf]
      %v408 = vld [vmem:[%s2 + $0x8] sm:$0xf]
      %v409 = vld [vmem:[%s2 + $0xc] sm:$0xf]
      %v410 = vld [vmem:[%s2 + $0x10] sm:$0xf]
      %v411 = vld [vmem:[%s2 + $0x14] sm:$0xf]
      %v412 = vld [vmem:[%s2 + $0x18] sm:$0xf]
      %v413 = vld [vmem:[%s2 + $0x1c] sm:$0xf]
      %v422 = vunpack.c.l.b16 %v406
      %v423 = vunpack.c.l.b16 %v407
      %v424 = vunpack.c.l.b16 %v408
      %v425 = vunpack.c.l.b16 %v409
      %v426 = vunpack.c.l.b16 %v410
      %v427 = vunpack.c.l.b16 %v411
      %v428 = vunpack.c.l.b16 %v412
      %v429 = vunpack.c.l.b16 %v413
      %v430 = vpack.c.b16 %v423, %v422
      %v431 = vpack.c.b16 %v425, %v424
      %v432 = vpack.c.b16 %v427, %v426
      %v433 = vpack.c.b16 %v429, %v428
      %vm438 = vcmask 523264
      %v440 = vsel %vm438, %v390, 0
      %v443 = vsel %vm438, %v391, 0
      %v446 = vsel %vm438, %v392, 0
      %v449 = vsel %vm438, %v393, 0
      %v452 = vsel %vm438, %v394, 0
      %v455 = vsel %vm438, %v395, 0
      %v458 = vsel %vm438, %v396, 0
      %v461 = vsel %vm438, %v397, 0
      %v464 = vsel %vm438, %v398, 0
      %v467 = vsel %vm438, %v399, 0
      %v470 = vsel %vm438, %v400, 0
      %v473 = vsel %vm438, %v401, 0
      %v476 = vsel %vm438, %v402, 0
      %v479 = vsel %vm438, %v403, 0
      %v482 = vsel %vm438, %v404, 0
      %v485 = vsel %vm438, %v405, 0
      %487 = vmatprep.subr.bf16.mxu0 0
      %488 = vmatpush1.bf16.msra.mxu0 0
      %489 = vmatprep.subr.bf16.mxu0 0
      %490 = vmatpush1.bf16.msra.mxu0 0
      %491 = vmatprep.subr.bf16.mxu0 0
      %492 = vmatpush1.bf16.msra.mxu0 0
      %493 = vmatprep.subr.bf16.mxu0 0
      %494 = vmatpush1.bf16.msra.mxu0 0
      %495 = vmatprep.subr.bf16.mxu0 0
      %496 = vmatpush1.bf16.msra.mxu0 %v433
      %497 = vmatprep.subr.bf16.mxu0 0
      %498 = vmatpush1.bf16.msra.mxu0 %v432
      %499 = vmatprep.subr.bf16.mxu0 0
      %500 = vmatpush1.bf16.msra.mxu0 %v431
      %501 = vmatprep.subr.bf16.mxu0 0
      %502 = vmatpush1.bf16.msra.mxu0 %v430
      %503 = vmatprep.subr.bf16.mxu0 0
      %504 = vmatpush2.bf16.msra.mxu0 0
      %505 = vmatprep.subr.bf16.mxu0 0
      %506 = vmatpush2.bf16.msra.mxu0 0
      %507 = vmatprep.subr.bf16.mxu0 0
      %508 = vmatpush2.bf16.msra.mxu0 0
      %509 = vmatprep.subr.bf16.mxu0 0
      %510 = vmatpush2.bf16.msra.mxu0 0
      %511 = vmatprep.subr.bf16.mxu0 0
      %512 = vmatpush2.bf16.msra.mxu0 0
      %513 = vmatprep.subr.bf16.mxu0 0
      %514 = vmatpush2.bf16.msra.mxu0 0
      %515 = vmatprep.subr.bf16.mxu0 0
      %516 = vmatpush2.bf16.msra.mxu0 0
      %517 = vmatprep.subr.bf16.mxu0 0
      %518 = vmatpush2.bf16.msra.mxu0 0
      %519 = vmatprep.mubr.bf16.mxu0 0
      %520 = vmatmul.mubr.bf16.gmra.mxu0 %v440
      %v521 = vpop.f32.mrf.mxu0
      %v522 = vadd.f32 0.0, %v521
      %v523 = vpop.f32.mrf.mxu0
      %v524 = vpop.f32.mrf.mxu0
      %v525 = vadd.f32 0.0, %v524
      %v526 = vpop.f32.mrf.mxu0
      %527 = vmatprep.mubr.bf16.mxu0 0
      %528 = vmatmul.mubr.bf16.gmra.mxu0 %v443
      %v529 = vpop.f32.mrf.mxu0
      %v530 = vadd.f32 0.0, %v529
      %v531 = vpop.f32.mrf.mxu0
      %v532 = vpop.f32.mrf.mxu0
      %v533 = vadd.f32 0.0, %v532
      %v534 = vpop.f32.mrf.mxu0
      %535 = vmatprep.mubr.bf16.mxu0 0
      %536 = vmatmul.mubr.bf16.gmra.mxu0 %v446
      %v537 = vpop.f32.mrf.mxu0
      %v538 = vadd.f32 0.0, %v537
      %v539 = vpop.f32.mrf.mxu0
      %v540 = vpop.f32.mrf.mxu0
      %v541 = vadd.f32 0.0, %v540
      %v542 = vpop.f32.mrf.mxu0
      %543 = vmatprep.mubr.bf16.mxu0 0
      %544 = vmatmul.mubr.bf16.gmra.mxu0 %v449
      %v545 = vpop.f32.mrf.mxu0
      %v546 = vadd.f32 0.0, %v545
      %v547 = vpop.f32.mrf.mxu0
      %v548 = vpop.f32.mrf.mxu0
      %v549 = vadd.f32 0.0, %v548
      %v550 = vpop.f32.mrf.mxu0
      %551 = vmatprep.mubr.bf16.mxu0 0
      %552 = vmatmul.mubr.bf16.gmra.mxu0 %v452
      %v553 = vpop.f32.mrf.mxu0
      %v554 = vadd.f32 0.0, %v553
      %v555 = vpop.f32.mrf.mxu0
      %v556 = vpop.f32.mrf.mxu0
      %v557 = vadd.f32 0.0, %v556
      %v558 = vpop.f32.mrf.mxu0
      %559 = vmatprep.mubr.bf16.mxu0 0
      %560 = vmatmul.mubr.bf16.gmra.mxu0 %v455
      %v561 = vpop.f32.mrf.mxu0
      %v562 = vadd.f32 0.0, %v561
      %v563 = vpop.f32.mrf.mxu0
      %v564 = vpop.f32.mrf.mxu0
      %v565 = vadd.f32 0.0, %v564
      %v566 = vpop.f32.mrf.mxu0
      %567 = vmatprep.mubr.bf16.mxu0 0
      %568 = vmatmul.mubr.bf16.gmra.mxu0 %v458
      %v569 = vpop.f32.mrf.mxu0
      %v570 = vadd.f32 0.0, %v569
      %v571 = vpop.f32.mrf.mxu0
      %v572 = vpop.f32.mrf.mxu0
      %v573 = vadd.f32 0.0, %v572
      %v574 = vpop.f32.mrf.mxu0
      %575 = vmatprep.mubr.bf16.mxu0 0
      %576 = vmatmul.mubr.bf16.gmra.mxu0 %v461
      %v577 = vpop.f32.mrf.mxu0
      %v578 = vadd.f32 0.0, %v577
      %v579 = vpop.f32.mrf.mxu0
      %v580 = vpop.f32.mrf.mxu0
      %v581 = vadd.f32 0.0, %v580
      %v582 = vpop.f32.mrf.mxu0
      %583 = vmatprep.mubr.bf16.mxu0 0
      %584 = vmatmul.mubr.bf16.gmra.mxu0 %v464
      %v585 = vpop.f32.mrf.mxu0
      %v586 = vadd.f32 0.0, %v585
      %v587 = vpop.f32.mrf.mxu0
      %v588 = vpop.f32.mrf.mxu0
      %v589 = vadd.f32 0.0, %v588
      %v590 = vpop.f32.mrf.mxu0
      %591 = vmatprep.mubr.bf16.mxu0 0
      %592 = vmatmul.mubr.bf16.gmra.mxu0 %v467
      %v593 = vpop.f32.mrf.mxu0
      %v594 = vadd.f32 0.0, %v593
      %v595 = vpop.f32.mrf.mxu0
      %v596 = vpop.f32.mrf.mxu0
      %v597 = vadd.f32 0.0, %v596
      %v598 = vpop.f32.mrf.mxu0
      %599 = vmatprep.mubr.bf16.mxu0 0
      %600 = vmatmul.mubr.bf16.gmra.mxu0 %v470
      %v601 = vpop.f32.mrf.mxu0
      %v602 = vadd.f32 0.0, %v601
      %v603 = vpop.f32.mrf.mxu0
      %v604 = vpop.f32.mrf.mxu0
      %v605 = vadd.f32 0.0, %v604
      %v606 = vpop.f32.mrf.mxu0
      %607 = vmatprep.mubr.bf16.mxu0 0
      %608 = vmatmul.mubr.bf16.gmra.mxu0 %v473
      %v609 = vpop.f32.mrf.mxu0
      %v610 = vadd.f32 0.0, %v609
      %v611 = vpop.f32.mrf.mxu0
      %v612 = vpop.f32.mrf.mxu0
      %v613 = vadd.f32 0.0, %v612
      %v614 = vpop.f32.mrf.mxu0
      %615 = vmatprep.mubr.bf16.mxu0 0
      %616 = vmatmul.mubr.bf16.gmra.mxu0 %v476
      %v617 = vpop.f32.mrf.mxu0
      %v618 = vadd.f32 0.0, %v617
      %v619 = vpop.f32.mrf.mxu0
      %v620 = vpop.f32.mrf.mxu0
      %v621 = vadd.f32 0.0, %v620
      %v622 = vpop.f32.mrf.mxu0
      %623 = vmatprep.mubr.bf16.mxu0 0
      %624 = vmatmul.mubr.bf16.gmra.mxu0 %v479
      %v625 = vpop.f32.mrf.mxu0
      %v626 = vadd.f32 0.0, %v625
      %v627 = vpop.f32.mrf.mxu0
      %v628 = vpop.f32.mrf.mxu0
      %v629 = vadd.f32 0.0, %v628
      %v630 = vpop.f32.mrf.mxu0
      %631 = vmatprep.mubr.bf16.mxu0 0
      %632 = vmatmul.mubr.bf16.gmra.mxu0 %v482
      %v633 = vpop.f32.mrf.mxu0
      %v634 = vadd.f32 0.0, %v633
      %v635 = vpop.f32.mrf.mxu0
      %v636 = vpop.f32.mrf.mxu0
      %v637 = vadd.f32 0.0, %v636
      %v638 = vpop.f32.mrf.mxu0
      %639 = vmatprep.mubr.bf16.mxu0 0
      %640 = vmatmul.mubr.bf16.gmra.mxu0 %v485
      %v641 = vpop.f32.mrf.mxu0
      %v642 = vadd.f32 0.0, %v641
      %v643 = vpop.f32.mrf.mxu0
      %v644 = vpop.f32.mrf.mxu0
      %v645 = vadd.f32 0.0, %v644
      %v646 = vpop.f32.mrf.mxu0
      %647 = vdwg.mxu0
      %v648 = vlaneseq
      %v649 = vshrl.u32 %v648, 7
      %v650 = vsub.s32 0, %v649
      %v651 = vrot.slane %v387, %v650
      %v652 = vmul.f32 %v522, %v651
      %v653 = vmul.f32 %v525, %v651
      %v654 = vmul.f32 %v530, %v651
      %v655 = vmul.f32 %v533, %v651
      %v656 = vmul.f32 %v538, %v651
      %v657 = vmul.f32 %v541, %v651
      %v658 = vmul.f32 %v546, %v651
      %v659 = vmul.f32 %v549, %v651
      %v660 = vmul.f32 %v554, %v651
      %v661 = vmul.f32 %v557, %v651
      %v662 = vmul.f32 %v562, %v651
      %v663 = vmul.f32 %v565, %v651
      %v664 = vmul.f32 %v570, %v651
      %v665 = vmul.f32 %v573, %v651
      %v666 = vmul.f32 %v578, %v651
      %v667 = vmul.f32 %v581, %v651
      %v668 = vmul.f32 %v586, %v651
      %v669 = vmul.f32 %v589, %v651
      %v670 = vmul.f32 %v594, %v651
      %v671 = vmul.f32 %v597, %v651
      %v672 = vmul.f32 %v602, %v651
      %v673 = vmul.f32 %v605, %v651
      %v674 = vmul.f32 %v610, %v651
      %v675 = vmul.f32 %v613, %v651
      %v676 = vmul.f32 %v618, %v651
      %v677 = vmul.f32 %v621, %v651
      %v678 = vmul.f32 %v626, %v651
      %v679 = vmul.f32 %v629, %v651
      %v680 = vmul.f32 %v634, %v651
      %v681 = vmul.f32 %v637, %v651
      %v682 = vmul.f32 %v642, %v651
      %v683 = vmul.f32 %v645, %v651
      %v684 = vlaneseq
      %v685 = vshrl.u32 %v684, 7
      %v686 = vsub.s32 1, %v685
      %v687 = vrot.slane %v387, %v686
      %v688 = vadd.f32 %v652, %v687
      %v689 = vadd.f32 %v653, %v687
      %v690 = vadd.f32 %v654, %v687
      %v691 = vadd.f32 %v655, %v687
      %v692 = vadd.f32 %v656, %v687
      %v693 = vadd.f32 %v657, %v687
      %v694 = vadd.f32 %v658, %v687
      %v695 = vadd.f32 %v659, %v687
      %v696 = vadd.f32 %v660, %v687
      %v697 = vadd.f32 %v661, %v687
      %v698 = vadd.f32 %v662, %v687
      %v699 = vadd.f32 %v663, %v687
      %v700 = vadd.f32 %v664, %v687
      %v701 = vadd.f32 %v665, %v687
      %v702 = vadd.f32 %v666, %v687
      %v703 = vadd.f32 %v667, %v687
      %v704 = vadd.f32 %v668, %v687
      %v705 = vadd.f32 %v669, %v687
      %v706 = vadd.f32 %v670, %v687
      %v707 = vadd.f32 %v671, %v687
      %v708 = vadd.f32 %v672, %v687
      %v709 = vadd.f32 %v673, %v687
      %v710 = vadd.f32 %v674, %v687
      %v711 = vadd.f32 %v675, %v687
      %v712 = vadd.f32 %v676, %v687
      %v713 = vadd.f32 %v677, %v687
      %v714 = vadd.f32 %v678, %v687
      %v715 = vadd.f32 %v679, %v687
      %v716 = vadd.f32 %v680, %v687
      %v717 = vadd.f32 %v681, %v687
      %v718 = vadd.f32 %v682, %v687
      %v719 = vadd.f32 %v683, %v687
      %vm720 = vcmask 130048
      %v721 = vsel %vm720, %v688, 0.0
      %v722 = vsel %vm720, %v689, 0.0
      %v723 = vadd.f32 %v721, %v722
      %v724 = vsel %vm720, %v690, 0.0
      %v725 = vadd.f32 %v723, %v724
      %v726 = vsel %vm720, %v691, 0.0
      %v727 = vadd.f32 %v725, %v726
      %v728 = vsel %vm720, %v692, 0.0
      %v729 = vadd.f32 %v727, %v728
      %v730 = vsel %vm720, %v693, 0.0
      %v731 = vadd.f32 %v729, %v730
      %v732 = vsel %vm720, %v694, 0.0
      %v733 = vadd.f32 %v731, %v732
      %v734 = vsel %vm720, %v695, 0.0
      %v735 = vadd.f32 %v733, %v734
      %v736 = vsel %vm720, %v696, 0.0
      %v737 = vadd.f32 %v735, %v736
      %v738 = vsel %vm720, %v697, 0.0
      %v739 = vadd.f32 %v737, %v738
      %v740 = vsel %vm720, %v698, 0.0
      %v741 = vadd.f32 %v739, %v740
      %v742 = vsel %vm720, %v699, 0.0
      %v743 = vadd.f32 %v741, %v742
      %v744 = vsel %vm720, %v700, 0.0
      %v745 = vadd.f32 %v743, %v744
      %v746 = vsel %vm720, %v701, 0.0
      %v747 = vadd.f32 %v745, %v746
      %v748 = vsel %vm720, %v702, 0.0
      %v749 = vadd.f32 %v747, %v748
      %v750 = vsel %vm720, %v703, 0.0
      %v751 = vadd.f32 %v749, %v750
      %v752 = vsel %vm720, %v704, 0.0
      %v753 = vadd.f32 %v751, %v752
      %v754 = vsel %vm720, %v705, 0.0
      %v755 = vadd.f32 %v753, %v754
      %v756 = vsel %vm720, %v706, 0.0
      %v757 = vadd.f32 %v755, %v756
      %v758 = vsel %vm720, %v707, 0.0
      %v759 = vadd.f32 %v757, %v758
      %v760 = vsel %vm720, %v708, 0.0
      %v761 = vadd.f32 %v759, %v760
      %v762 = vsel %vm720, %v709, 0.0
      %v763 = vadd.f32 %v761, %v762
      %v764 = vsel %vm720, %v710, 0.0
      %v765 = vadd.f32 %v763, %v764
      %v766 = vsel %vm720, %v711, 0.0
      %v767 = vadd.f32 %v765, %v766
      %v768 = vsel %vm720, %v712, 0.0
      %v769 = vadd.f32 %v767, %v768
      %v770 = vsel %vm720, %v713, 0.0
      %v771 = vadd.f32 %v769, %v770
      %v772 = vsel %vm720, %v714, 0.0
      %v773 = vadd.f32 %v771, %v772
      %v774 = vsel %vm720, %v715, 0.0
      %v775 = vadd.f32 %v773, %v774
      %v776 = vsel %vm720, %v716, 0.0
      %v777 = vadd.f32 %v775, %v776
      %v778 = vsel %vm720, %v717, 0.0
      %v779 = vadd.f32 %v777, %v778
      %v780 = vsel %vm720, %v718, 0.0
      %v781 = vadd.f32 %v779, %v780
      %v782 = vsel %vm720, %v719, 0.0
      %v783 = vadd.f32 %v781, %v782
      %v784 = vrot.slane %v783, 4
      %v785 = vadd.f32 %v783, %v784
      %v786 = vrot.slane %v785, 2
      %v787 = vadd.f32 %v785, %v786
      %v788 = vrot.slane %v787, 1
      %v789 = vadd.f32 %v787, %v788
      %v790 = vrcp.pop 256.0
      %v791 = vmul.f32 %v789, %v790
      %v792 = vsel %vm720, %v791, 0.0
      %793 = vadd.xlane.f32.xlu0 %v792
      %v794 = vpop.xlane.xlu0 %793
      %v795 = vrcp.pop 16.0
      %v796 = vmul.f32 %v794, %v795
      %v797 = vsub.f32 %v791, %v796
      %v798 = vmul.f32 %v797, %v797
      %v799 = vsel %vm720, %v798, 0.0
      %800 = vadd.xlane.f32.xlu0 %v799
      %v801 = vpop.xlane.xlu0 %800
      %v802 = vmul.f32 %v801, %v795
      %v803 = vadd.f32 %v802, 1e-06
      %v804 = vrsqrt.pop %v803
      %v805 = vmul.f32 %v797, %v804
      %v806 = vmul.f32 %v805, %v387
      %v808 = vrot.slane %v387, 1
      %v810 = vadd.f32 %v806, %v808
      %v811 = vlaneseq
      %v812 = vshrl.u32 %v811, 7
      %v813 = vsub.s32 2, %v812
      %v814 = vrot.slane %v810, %v813
      %v815 = vadd.f32 %v814, %v688
      %v816 = vadd.f32 %v814, %v689
      %v817 = vadd.f32 %v814, %v690
      %v818 = vadd.f32 %v814, %v691
      %v819 = vadd.f32 %v814, %v692
      %v820 = vadd.f32 %v814, %v693
      %v821 = vadd.f32 %v814, %v694
      %v822 = vadd.f32 %v814, %v695
      %v823 = vadd.f32 %v814, %v696
      %v824 = vadd.f32 %v814, %v697
      %v825 = vadd.f32 %v814, %v698
      %v826 = vadd.f32 %v814, %v699
      %v827 = vadd.f32 %v814, %v700
      %v828 = vadd.f32 %v814, %v701
      %v829 = vadd.f32 %v814, %v702
      %v830 = vadd.f32 %v814, %v703
      %v831 = vadd.f32 %v814, %v704
      %v832 = vadd.f32 %v814, %v705
      %v833 = vadd.f32 %v814, %v706
      %v834 = vadd.f32 %v814, %v707
      %v835 = vadd.f32 %v814, %v708
      %v836 = vadd.f32 %v814, %v709
      %v837 = vadd.f32 %v814, %v710
      %v838 = vadd.f32 %v814, %v711
      %v839 = vadd.f32 %v814, %v712
      %v840 = vadd.f32 %v814, %v713
      %v841 = vadd.f32 %v814, %v714
      %v842 = vadd.f32 %v814, %v715
      %v843 = vadd.f32 %v814, %v716
      %v844 = vadd.f32 %v814, %v717
      %v845 = vadd.f32 %v814, %v718
      %v846 = vadd.f32 %v814, %v719
      %v847 = vxor.u32 %v815, 2147483648
      %v848 = vxor.u32 %v816, 2147483648
      %v849 = vxor.u32 %v817, 2147483648
      %v850 = vxor.u32 %v818, 2147483648
      %v851 = vxor.u32 %v819, 2147483648
      %v852 = vxor.u32 %v820, 2147483648
      %v853 = vxor.u32 %v821, 2147483648
      %v854 = vxor.u32 %v822, 2147483648
      %v855 = vxor.u32 %v823, 2147483648
      %v856 = vxor.u32 %v824, 2147483648
      %v857 = vxor.u32 %v825, 2147483648
      %v858 = vxor.u32 %v826, 2147483648
      %v859 = vxor.u32 %v827, 2147483648
      %v860 = vxor.u32 %v828, 2147483648
      %v861 = vxor.u32 %v829, 2147483648
      %v862 = vxor.u32 %v830, 2147483648
      %v863 = vxor.u32 %v831, 2147483648
      %v864 = vxor.u32 %v832, 2147483648
      %v865 = vxor.u32 %v833, 2147483648
      %v866 = vxor.u32 %v834, 2147483648
      %v867 = vxor.u32 %v835, 2147483648
      %v868 = vxor.u32 %v836, 2147483648
      %v869 = vxor.u32 %v837, 2147483648
      %v870 = vxor.u32 %v838, 2147483648
      %v871 = vxor.u32 %v839, 2147483648
      %v872 = vxor.u32 %v840, 2147483648
      %v873 = vxor.u32 %v841, 2147483648
      %v874 = vxor.u32 %v842, 2147483648
      %v875 = vxor.u32 %v843, 2147483648
      %v876 = vxor.u32 %v844, 2147483648
      %v877 = vxor.u32 %v845, 2147483648
      %v878 = vxor.u32 %v846, 2147483648
      %v879 = vmul.f32 %v847, 1.442695
      %v880 = vpow.pop %v879
      %v881 = vmul.f32 %v848, 1.442695
      %v882 = vpow.pop %v881
      %v883 = vmul.f32 %v849, 1.442695
      %v884 = vpow.pop %v883
      %v885 = vmul.f32 %v850, 1.442695
      %v886 = vpow.pop %v885
      %v887 = vmul.f32 %v851, 1.442695
      %v888 = vpow.pop %v887
      %v889 = vmul.f32 %v852, 1.442695
      %v890 = vpow.pop %v889
      %v891 = vmul.f32 %v853, 1.442695
      %v892 = vpow.pop %v891
      %v893 = vmul.f32 %v854, 1.442695
      %v894 = vpow.pop %v893
      %v895 = vmul.f32 %v855, 1.442695
      %v896 = vpow.pop %v895
      %v897 = vmul.f32 %v856, 1.442695
      %v898 = vpow.pop %v897
      %v899 = vmul.f32 %v857, 1.442695
      %v900 = vpow.pop %v899
      %v901 = vmul.f32 %v858, 1.442695
      %v902 = vpow.pop %v901
      %v903 = vmul.f32 %v859, 1.442695
      %v904 = vpow.pop %v903
      %v905 = vmul.f32 %v860, 1.442695
      %v906 = vpow.pop %v905
      %v907 = vmul.f32 %v861, 1.442695
      %v908 = vpow.pop %v907
      %v909 = vmul.f32 %v862, 1.442695
      %v910 = vpow.pop %v909
      %v911 = vmul.f32 %v863, 1.442695
      %v912 = vpow.pop %v911
      %v913 = vmul.f32 %v864, 1.442695
      %v914 = vpow.pop %v913
      %v915 = vmul.f32 %v865, 1.442695
      %v916 = vpow.pop %v915
      %v917 = vmul.f32 %v866, 1.442695
      %v918 = vpow.pop %v917
      %v919 = vmul.f32 %v867, 1.442695
      %v920 = vpow.pop %v919
      %v921 = vmul.f32 %v868, 1.442695
      %v922 = vpow.pop %v921
      %v923 = vmul.f32 %v869, 1.442695
      %v924 = vpow.pop %v923
      %v925 = vmul.f32 %v870, 1.442695
      %v926 = vpow.pop %v925
      %v927 = vmul.f32 %v871, 1.442695
      %v928 = vpow.pop %v927
      %v929 = vmul.f32 %v872, 1.442695
      %v930 = vpow.pop %v929
      %v931 = vmul.f32 %v873, 1.442695
      %v932 = vpow.pop %v931
      %v933 = vmul.f32 %v874, 1.442695
      %v934 = vpow.pop %v933
      %v935 = vmul.f32 %v875, 1.442695
      %v936 = vpow.pop %v935
      %v937 = vmul.f32 %v876, 1.442695
      %v938 = vpow.pop %v937
      %v939 = vmul.f32 %v877, 1.442695
      %v940 = vpow.pop %v939
      %v941 = vmul.f32 %v878, 1.442695
      %v942 = vpow.pop %v941
      %v943 = vadd.f32 %v880, 1.0
      %v944 = vadd.f32 %v882, 1.0
      %v945 = vadd.f32 %v884, 1.0
      %v946 = vadd.f32 %v886, 1.0
      %v947 = vadd.f32 %v888, 1.0
      %v948 = vadd.f32 %v890, 1.0
      %v949 = vadd.f32 %v892, 1.0
      %v950 = vadd.f32 %v894, 1.0
      %v951 = vadd.f32 %v896, 1.0
      %v952 = vadd.f32 %v898, 1.0
      %v953 = vadd.f32 %v900, 1.0
      %v954 = vadd.f32 %v902, 1.0
      %v955 = vadd.f32 %v904, 1.0
      %v956 = vadd.f32 %v906, 1.0
      %v957 = vadd.f32 %v908, 1.0
      %v958 = vadd.f32 %v910, 1.0
      %v959 = vadd.f32 %v912, 1.0
      %v960 = vadd.f32 %v914, 1.0
      %v961 = vadd.f32 %v916, 1.0
      %v962 = vadd.f32 %v918, 1.0
      %v963 = vadd.f32 %v920, 1.0
      %v964 = vadd.f32 %v922, 1.0
      %v965 = vadd.f32 %v924, 1.0
      %v966 = vadd.f32 %v926, 1.0
      %v967 = vadd.f32 %v928, 1.0
      %v968 = vadd.f32 %v930, 1.0
      %v969 = vadd.f32 %v932, 1.0
      %v970 = vadd.f32 %v934, 1.0
      %v971 = vadd.f32 %v936, 1.0
      %v972 = vadd.f32 %v938, 1.0
      %v973 = vadd.f32 %v940, 1.0
      %v974 = vadd.f32 %v942, 1.0
      %v975 = vrcp.pop %v943
      %v976 = vmul.f32 1.0, %v975
      %v977 = vrcp.pop %v944
      %v978 = vmul.f32 1.0, %v977
      %v979 = vrcp.pop %v945
      %v980 = vmul.f32 1.0, %v979
      %v981 = vrcp.pop %v946
      %v982 = vmul.f32 1.0, %v981
      %v983 = vrcp.pop %v947
      %v984 = vmul.f32 1.0, %v983
      %v985 = vrcp.pop %v948
      %v986 = vmul.f32 1.0, %v985
      %v987 = vrcp.pop %v949
      %v988 = vmul.f32 1.0, %v987
      %v989 = vrcp.pop %v950
      %v990 = vmul.f32 1.0, %v989
      %v991 = vrcp.pop %v951
      %v992 = vmul.f32 1.0, %v991
      %v993 = vrcp.pop %v952
      %v994 = vmul.f32 1.0, %v993
      %v995 = vrcp.pop %v953
      %v996 = vmul.f32 1.0, %v995
      %v997 = vrcp.pop %v954
      %v998 = vmul.f32 1.0, %v997
      %v999 = vrcp.pop %v955
      %v1000 = vmul.f32 1.0, %v999
      %v1001 = vrcp.pop %v956
      %v1002 = vmul.f32 1.0, %v1001
      %v1003 = vrcp.pop %v957
      %v1004 = vmul.f32 1.0, %v1003
      %v1005 = vrcp.pop %v958
      %v1006 = vmul.f32 1.0, %v1005
      %v1007 = vrcp.pop %v959
      %v1008 = vmul.f32 1.0, %v1007
      %v1009 = vrcp.pop %v960
      %v1010 = vmul.f32 1.0, %v1009
      %v1011 = vrcp.pop %v961
      %v1012 = vmul.f32 1.0, %v1011
      %v1013 = vrcp.pop %v962
      %v1014 = vmul.f32 1.0, %v1013
      %v1015 = vrcp.pop %v963
      %v1016 = vmul.f32 1.0, %v1015
      %v1017 = vrcp.pop %v964
      %v1018 = vmul.f32 1.0, %v1017
      %v1019 = vrcp.pop %v965
      %v1020 = vmul.f32 1.0, %v1019
      %v1021 = vrcp.pop %v966
      %v1022 = vmul.f32 1.0, %v1021
      %v1023 = vrcp.pop %v967
      %v1024 = vmul.f32 1.0, %v1023
      %v1025 = vrcp.pop %v968
      %v1026 = vmul.f32 1.0, %v1025
      %v1027 = vrcp.pop %v969
      %v1028 = vmul.f32 1.0, %v1027
      %v1029 = vrcp.pop %v970
      %v1030 = vmul.f32 1.0, %v1029
      %v1031 = vrcp.pop %v971
      %v1032 = vmul.f32 1.0, %v1031
      %v1033 = vrcp.pop %v972
      %v1034 = vmul.f32 1.0, %v1033
      %v1035 = vrcp.pop %v973
      %v1036 = vmul.f32 1.0, %v1035
      %v1037 = vrcp.pop %v974
      %v1038 = vmul.f32 1.0, %v1037
      %v1039 = vmul.f32 %v976, %v688
      %v1040 = vmul.f32 %v978, %v689
      %v1041 = vmul.f32 %v980, %v690
      %v1042 = vmul.f32 %v982, %v691
      %v1043 = vmul.f32 %v984, %v692
      %v1044 = vmul.f32 %v986, %v693
      %v1045 = vmul.f32 %v988, %v694
      %v1046 = vmul.f32 %v990, %v695
      %v1047 = vmul.f32 %v992, %v696
      %v1048 = vmul.f32 %v994, %v697
      %v1049 = vmul.f32 %v996, %v698
      %v1050 = vmul.f32 %v998, %v699
      %v1051 = vmul.f32 %v1000, %v700
      %v1052 = vmul.f32 %v1002, %v701
      %v1053 = vmul.f32 %v1004, %v702
      %v1054 = vmul.f32 %v1006, %v703
      %v1055 = vmul.f32 %v1008, %v704
      %v1056 = vmul.f32 %v1010, %v705
      %v1057 = vmul.f32 %v1012, %v706
      %v1058 = vmul.f32 %v1014, %v707
      %v1059 = vmul.f32 %v1016, %v708
      %v1060 = vmul.f32 %v1018, %v709
      %v1061 = vmul.f32 %v1020, %v710
      %v1062 = vmul.f32 %v1022, %v711
      %v1063 = vmul.f32 %v1024, %v712
      %v1064 = vmul.f32 %v1026, %v713
      %v1065 = vmul.f32 %v1028, %v714
      %v1066 = vmul.f32 %v1030, %v715
      %v1067 = vmul.f32 %v1032, %v716
      %v1068 = vmul.f32 %v1034, %v717
      %v1069 = vmul.f32 %v1036, %v718
      %v1070 = vmul.f32 %v1038, %v719
      %vm1074 = vcmask 1040384
      %v1075 = vrot.slane %v1068, 7
      %v1076 = vrot.slane %v1069, 7
      %v1077 = vsel %vm1074, %v1075, %v1076
      %v1078 = vrot.slane %v1070, 7
      %v1079 = vsel %vm1074, %v1076, %v1078
      %v1112 = vrot.slane %v1039, 7
      %v1113 = vrot.slane %v1040, 7
      %v1114 = vsel %vm1074, %v1112, %v1113
      %v1115 = vrot.slane %v1041, 7
      %v1116 = vsel %vm1074, %v1113, %v1115
      %v1117 = vrot.slane %v1042, 7
      %v1118 = vsel %vm1074, %v1115, %v1117
      %v1119 = vrot.slane %v1043, 7
      %v1120 = vsel %vm1074, %v1117, %v1119
      %v1121 = vrot.slane %v1044, 7
      %v1122 = vsel %vm1074, %v1119, %v1121
      %v1123 = vrot.slane %v1045, 7
      %v1124 = vsel %vm1074, %v1121, %v1123
      %v1125 = vrot.slane %v1046, 7
      %v1126 = vsel %vm1074, %v1123, %v1125
      %v1127 = vrot.slane %v1047, 7
      %v1128 = vsel %vm1074, %v1125, %v1127
      %v1129 = vrot.slane %v1048, 7
      %v1130 = vsel %vm1074, %v1127, %v1129
      %v1131 = vrot.slane %v1049, 7
      %v1132 = vsel %vm1074, %v1129, %v1131
      %v1133 = vrot.slane %v1050, 7
      %v1134 = vsel %vm1074, %v1131, %v1133
      %v1135 = vrot.slane %v1051, 7
      %v1136 = vsel %vm1074, %v1133, %v1135
      %v1137 = vrot.slane %v1052, 7
      %v1138 = vsel %vm1074, %v1135, %v1137
      %v1139 = vrot.slane %v1053, 7
      %v1140 = vsel %vm1074, %v1137, %v1139
      %v1141 = vrot.slane %v1054, 7
      %v1142 = vsel %vm1074, %v1139, %v1141
      %v1143 = vrot.slane %v1055, 7
      %v1144 = vsel %vm1074, %v1141, %v1143
      %v1145 = vrot.slane %v1056, 7
      %v1146 = vsel %vm1074, %v1143, %v1145
      %v1147 = vrot.slane %v1057, 7
      %v1148 = vsel %vm1074, %v1145, %v1147
      %v1149 = vrot.slane %v1058, 7
      %v1150 = vsel %vm1074, %v1147, %v1149
      %v1151 = vrot.slane %v1059, 7
      %v1152 = vsel %vm1074, %v1149, %v1151
      %v1153 = vrot.slane %v1060, 7
      %v1154 = vsel %vm1074, %v1151, %v1153
      %v1155 = vrot.slane %v1061, 7
      %v1156 = vsel %vm1074, %v1153, %v1155
      %v1157 = vrot.slane %v1062, 7
      %v1158 = vsel %vm1074, %v1155, %v1157
      %v1159 = vrot.slane %v1063, 7
      %v1160 = vsel %vm1074, %v1157, %v1159
      %v1161 = vrot.slane %v1064, 7
      %v1162 = vsel %vm1074, %v1159, %v1161
      %v1163 = vrot.slane %v1065, 7
      %v1164 = vsel %vm1074, %v1161, %v1163
      %v1165 = vrot.slane %v1066, 7
      %v1166 = vsel %vm1074, %v1163, %v1165
      %v1167 = vrot.slane %v1067, 7
      %v1168 = vsel %vm1074, %v1165, %v1167
      %v1169 = vsel %vm1074, %v1167, %v1075
      %v1200 = vsel %vm1074, %v1078, %v1112
      %vm1201 = vcmask 1046528
      %v1202 = vrot.slane %v1069, 1
      %v1203 = vrot.slane %v1070, 1
      %v1204 = vsel %vm1201, %v1202, %v1203
      %v1206 = vrot.slane %v1039, 1
      %v1207 = vrot.slane %v1040, 1
      %v1208 = vsel %vm1201, %v1206, %v1207
      %v1209 = vrot.slane %v1041, 1
      %v1210 = vsel %vm1201, %v1207, %v1209
      %v1211 = vrot.slane %v1042, 1
      %v1212 = vsel %vm1201, %v1209, %v1211
      %v1213 = vrot.slane %v1043, 1
      %v1214 = vsel %vm1201, %v1211, %v1213
      %v1215 = vrot.slane %v1044, 1
      %v1216 = vsel %vm1201, %v1213, %v1215
      %v1217 = vrot.slane %v1045, 1
      %v1218 = vsel %vm1201, %v1215, %v1217
      %v1219 = vrot.slane %v1046, 1
      %v1220 = vsel %vm1201, %v1217, %v1219
      %v1221 = vrot.slane %v1047, 1
      %v1222 = vsel %vm1201, %v1219, %v1221
      %v1223 = vrot.slane %v1048, 1
      %v1224 = vsel %vm1201, %v1221, %v1223
      %v1225 = vrot.slane %v1049, 1
      %v1226 = vsel %vm1201, %v1223, %v1225
      %v1227 = vrot.slane %v1050, 1
      %v1228 = vsel %vm1201, %v1225, %v1227
      %v1229 = vrot.slane %v1051, 1
      %v1230 = vsel %vm1201, %v1227, %v1229
      %v1231 = vrot.slane %v1052, 1
      %v1232 = vsel %vm1201, %v1229, %v1231
      %v1233 = vrot.slane %v1053, 1
      %v1234 = vsel %vm1201, %v1231, %v1233
      %v1235 = vrot.slane %v1054, 1
      %v1236 = vsel %vm1201, %v1233, %v1235
      %v1237 = vrot.slane %v1055, 1
      %v1238 = vsel %vm1201, %v1235, %v1237
      %v1239 = vrot.slane %v1056, 1
      %v1240 = vsel %vm1201, %v1237, %v1239
      %v1241 = vrot.slane %v1057, 1
      %v1242 = vsel %vm1201, %v1239, %v1241
      %v1243 = vrot.slane %v1058, 1
      %v1244 = vsel %vm1201, %v1241, %v1243
      %v1245 = vrot.slane %v1059, 1
      %v1246 = vsel %vm1201, %v1243, %v1245
      %v1247 = vrot.slane %v1060, 1
      %v1248 = vsel %vm1201, %v1245, %v1247
      %v1249 = vrot.slane %v1061, 1
      %v1250 = vsel %vm1201, %v1247, %v1249
      %v1251 = vrot.slane %v1062, 1
      %v1252 = vsel %vm1201, %v1249, %v1251
      %v1253 = vrot.slane %v1063, 1
      %v1254 = vsel %vm1201, %v1251, %v1253
      %v1255 = vrot.slane %v1064, 1
      %v1256 = vsel %vm1201, %v1253, %v1255
      %v1257 = vrot.slane %v1065, 1
      %v1258 = vsel %vm1201, %v1255, %v1257
      %v1259 = vrot.slane %v1066, 1
      %v1260 = vsel %vm1201, %v1257, %v1259
      %v1261 = vrot.slane %v1067, 1
      %v1262 = vsel %vm1201, %v1259, %v1261
      %v1263 = vrot.slane %v1068, 1
      %v1264 = vsel %vm1201, %v1261, %v1263
      %v1265 = vsel %vm1201, %v1263, %v1202
      %v1267 = vsel %vm1201, %v1203, %v1206
      %1299 = vrot.lane.b32.xlu0 %v1069, 16
      %v1300 = vpop.permute.xlu0 %1299
      %1301 = vrot.lane.b32.xlu0 %v1070, 16
      %v1302 = vpop.permute.xlu0 %1301
      %1303 = vrot.lane.b32.xlu0 %v1039, 16
      %v1304 = vpop.permute.xlu0 %1303
      %1305 = vrot.lane.b32.xlu0 %v1040, 16
      %v1306 = vpop.permute.xlu0 %1305
      %1307 = vrot.lane.b32.xlu0 %v1041, 16
      %v1308 = vpop.permute.xlu0 %1307
      %1309 = vrot.lane.b32.xlu0 %v1042, 16
      %v1310 = vpop.permute.xlu0 %1309
      %1311 = vrot.lane.b32.xlu0 %v1043, 16
      %v1312 = vpop.permute.xlu0 %1311
      %1313 = vrot.lane.b32.xlu0 %v1044, 16
      %v1314 = vpop.permute.xlu0 %1313
      %1315 = vrot.lane.b32.xlu0 %v1045, 16
      %v1316 = vpop.permute.xlu0 %1315
      %1317 = vrot.lane.b32.xlu0 %v1046, 16
      %v1318 = vpop.permute.xlu0 %1317
      %1319 = vrot.lane.b32.xlu0 %v1047, 16
      %v1320 = vpop.permute.xlu0 %1319
      %1321 = vrot.lane.b32.xlu0 %v1048, 16
      %v1322 = vpop.permute.xlu0 %1321
      %1323 = vrot.lane.b32.xlu0 %v1049, 16
      %v1324 = vpop.permute.xlu0 %1323
      %1325 = vrot.lane.b32.xlu0 %v1050, 16
      %v1326 = vpop.permute.xlu0 %1325
      %1327 = vrot.lane.b32.xlu0 %v1051, 16
      %v1328 = vpop.permute.xlu0 %1327
      %1329 = vrot.lane.b32.xlu0 %v1052, 16
      %v1330 = vpop.permute.xlu0 %1329
      %1331 = vrot.lane.b32.xlu0 %v1053, 16
      %v1332 = vpop.permute.xlu0 %1331
      %1333 = vrot.lane.b32.xlu0 %v1054, 16
      %v1334 = vpop.permute.xlu0 %1333
      %1335 = vrot.lane.b32.xlu0 %v1055, 16
      %v1336 = vpop.permute.xlu0 %1335
      %1337 = vrot.lane.b32.xlu0 %v1056, 16
      %v1338 = vpop.permute.xlu0 %1337
      %1339 = vrot.lane.b32.xlu0 %v1057, 16
      %v1340 = vpop.permute.xlu0 %1339
      %1341 = vrot.lane.b32.xlu0 %v1058, 16
      %v1342 = vpop.permute.xlu0 %1341
      %1343 = vrot.lane.b32.xlu0 %v1059, 16
      %v1344 = vpop.permute.xlu0 %1343
      %1345 = vrot.lane.b32.xlu0 %v1060, 16
      %v1346 = vpop.permute.xlu0 %1345
      %1347 = vrot.lane.b32.xlu0 %v1061, 16
      %v1348 = vpop.permute.xlu0 %1347
      %1349 = vrot.lane.b32.xlu0 %v1062, 16
      %v1350 = vpop.permute.xlu0 %1349
      %1351 = vrot.lane.b32.xlu0 %v1063, 16
      %v1352 = vpop.permute.xlu0 %1351
      %1353 = vrot.lane.b32.xlu0 %v1064, 16
      %v1354 = vpop.permute.xlu0 %1353
      %1355 = vrot.lane.b32.xlu0 %v1065, 16
      %v1356 = vpop.permute.xlu0 %1355
      %1357 = vrot.lane.b32.xlu0 %v1066, 16
      %v1358 = vpop.permute.xlu0 %1357
      %1359 = vrot.lane.b32.xlu0 %v1067, 16
      %v1360 = vpop.permute.xlu0 %1359
      %1361 = vrot.lane.b32.xlu0 %v1068, 16
      %v1362 = vpop.permute.xlu0 %1361
      %1396 = vrot.lane.b32.xlu0 %v1204, 32
      %v1397 = vpop.permute.xlu0 %1396
      %1398 = vrot.lane.b32.xlu0 %v1267, 32
      %v1399 = vpop.permute.xlu0 %1398
      %1400 = vrot.lane.b32.xlu0 %v1208, 32
      %v1401 = vpop.permute.xlu0 %1400
      %1402 = vrot.lane.b32.xlu0 %v1210, 32
      %v1403 = vpop.permute.xlu0 %1402
      %1404 = vrot.lane.b32.xlu0 %v1212, 32
      %v1405 = vpop.permute.xlu0 %1404
      %1406 = vrot.lane.b32.xlu0 %v1214, 32
      %v1407 = vpop.permute.xlu0 %1406
      %1408 = vrot.lane.b32.xlu0 %v1216, 32
      %v1409 = vpop.permute.xlu0 %1408
      %1410 = vrot.lane.b32.xlu0 %v1218, 32
      %v1411 = vpop.permute.xlu0 %1410
      %1412 = vrot.lane.b32.xlu0 %v1220, 32
      %v1413 = vpop.permute.xlu0 %1412
      %1414 = vrot.lane.b32.xlu0 %v1222, 32
      %v1415 = vpop.permute.xlu0 %1414
      %1416 = vrot.lane.b32.xlu0 %v1224, 32
      %v1417 = vpop.permute.xlu0 %1416
      %1418 = vrot.lane.b32.xlu0 %v1226, 32
      %v1419 = vpop.permute.xlu0 %1418
      %1420 = vrot.lane.b32.xlu0 %v1228, 32
      %v1421 = vpop.permute.xlu0 %1420
      %1422 = vrot.lane.b32.xlu0 %v1230, 32
      %v1423 = vpop.permute.xlu0 %1422
      %1424 = vrot.lane.b32.xlu0 %v1232, 32
      %v1425 = vpop.permute.xlu0 %1424
      %1426 = vrot.lane.b32.xlu0 %v1234, 32
      %v1427 = vpop.permute.xlu0 %1426
      %1428 = vrot.lane.b32.xlu0 %v1236, 32
      %v1429 = vpop.permute.xlu0 %1428
      %1430 = vrot.lane.b32.xlu0 %v1238, 32
      %v1431 = vpop.permute.xlu0 %1430
      %1432 = vrot.lane.b32.xlu0 %v1240, 32
      %v1433 = vpop.permute.xlu0 %1432
      %1434 = vrot.lane.b32.xlu0 %v1242, 32
      %v1435 = vpop.permute.xlu0 %1434
      %1436 = vrot.lane.b32.xlu0 %v1244, 32
      %v1437 = vpop.permute.xlu0 %1436
      %1438 = vrot.lane.b32.xlu0 %v1246, 32
      %v1439 = vpop.permute.xlu0 %1438
      %1440 = vrot.lane.b32.xlu0 %v1248, 32
      %v1441 = vpop.permute.xlu0 %1440
      %1442 = vrot.lane.b32.xlu0 %v1250, 32
      %v1443 = vpop.permute.xlu0 %1442
      %1444 = vrot.lane.b32.xlu0 %v1252, 32
      %v1445 = vpop.permute.xlu0 %1444
      %1446 = vrot.lane.b32.xlu0 %v1254, 32
      %v1447 = vpop.permute.xlu0 %1446
      %1448 = vrot.lane.b32.xlu0 %v1256, 32
      %v1449 = vpop.permute.xlu0 %1448
      %1450 = vrot.lane.b32.xlu0 %v1258, 32
      %v1451 = vpop.permute.xlu0 %1450
      %1452 = vrot.lane.b32.xlu0 %v1260, 32
      %v1453 = vpop.permute.xlu0 %1452
      %1454 = vrot.lane.b32.xlu0 %v1262, 32
      %v1455 = vpop.permute.xlu0 %1454
      %1456 = vrot.lane.b32.xlu0 %v1264, 32
      %v1457 = vpop.permute.xlu0 %1456
      %1458 = vrot.lane.b32.xlu0 %v1265, 32
      %v1459 = vpop.permute.xlu0 %1458
      %1493 = vrot.lane.b32.xlu0 %v1200, 48
      %v1494 = vpop.permute.xlu0 %1493
      %1495 = vrot.lane.b32.xlu0 %v1114, 48
      %v1496 = vpop.permute.xlu0 %1495
      %1497 = vrot.lane.b32.xlu0 %v1116, 48
      %v1498 = vpop.permute.xlu0 %1497
      %1499 = vrot.lane.b32.xlu0 %v1118, 48
      %v1500 = vpop.permute.xlu0 %1499
      %1501 = vrot.lane.b32.xlu0 %v1120, 48
      %v1502 = vpop.permute.xlu0 %1501
      %1503 = vrot.lane.b32.xlu0 %v1122, 48
      %v1504 = vpop.permute.xlu0 %1503
      %1505 = vrot.lane.b32.xlu0 %v1124, 48
      %v1506 = vpop.permute.xlu0 %1505
      %1507 = vrot.lane.b32.xlu0 %v1126, 48
      %v1508 = vpop.permute.xlu0 %1507
      %1509 = vrot.lane.b32.xlu0 %v1128, 48
      %v1510 = vpop.permute.xlu0 %1509
      %1511 = vrot.lane.b32.xlu0 %v1130, 48
      %v1512 = vpop.permute.xlu0 %1511
      %1513 = vrot.lane.b32.xlu0 %v1132, 48
      %v1514 = vpop.permute.xlu0 %1513
      %1515 = vrot.lane.b32.xlu0 %v1134, 48
      %v1516 = vpop.permute.xlu0 %1515
      %1517 = vrot.lane.b32.xlu0 %v1136, 48
      %v1518 = vpop.permute.xlu0 %1517
      %1519 = vrot.lane.b32.xlu0 %v1138, 48
      %v1520 = vpop.permute.xlu0 %1519
      %1521 = vrot.lane.b32.xlu0 %v1140, 48
      %v1522 = vpop.permute.xlu0 %1521
      %1523 = vrot.lane.b32.xlu0 %v1142, 48
      %v1524 = vpop.permute.xlu0 %1523
      %1525 = vrot.lane.b32.xlu0 %v1144, 48
      %v1526 = vpop.permute.xlu0 %1525
      %1527 = vrot.lane.b32.xlu0 %v1146, 48
      %v1528 = vpop.permute.xlu0 %1527
      %1529 = vrot.lane.b32.xlu0 %v1148, 48
      %v1530 = vpop.permute.xlu0 %1529
      %1531 = vrot.lane.b32.xlu0 %v1150, 48
      %v1532 = vpop.permute.xlu0 %1531
      %1533 = vrot.lane.b32.xlu0 %v1152, 48
      %v1534 = vpop.permute.xlu0 %1533
      %1535 = vrot.lane.b32.xlu0 %v1154, 48
      %v1536 = vpop.permute.xlu0 %1535
      %1537 = vrot.lane.b32.xlu0 %v1156, 48
      %v1538 = vpop.permute.xlu0 %1537
      %1539 = vrot.lane.b32.xlu0 %v1158, 48
      %v1540 = vpop.permute.xlu0 %1539
      %1541 = vrot.lane.b32.xlu0 %v1160, 48
      %v1542 = vpop.permute.xlu0 %1541
      %1543 = vrot.lane.b32.xlu0 %v1162, 48
      %v1544 = vpop.permute.xlu0 %1543
      %1545 = vrot.lane.b32.xlu0 %v1164, 48
      %v1546 = vpop.permute.xlu0 %1545
      %1547 = vrot.lane.b32.xlu0 %v1166, 48
      %v1548 = vpop.permute.xlu0 %1547
      %1549 = vrot.lane.b32.xlu0 %v1168, 48
      %v1550 = vpop.permute.xlu0 %1549
      %1551 = vrot.lane.b32.xlu0 %v1169, 48
      %v1552 = vpop.permute.xlu0 %1551
      %1553 = vrot.lane.b32.xlu0 %v1077, 48
      %v1554 = vpop.permute.xlu0 %1553
      %1555 = vrot.lane.b32.xlu0 %v1079, 48
      %v1556 = vpop.permute.xlu0 %1555
      %1589 = vrot.lane.b32.xlu0 %v1039, 64
      %v1590 = vpop.permute.xlu0 %1589
      %1591 = vrot.lane.b32.xlu0 %v1040, 64
      %v1592 = vpop.permute.xlu0 %1591
      %1593 = vrot.lane.b32.xlu0 %v1041, 64
      %v1594 = vpop.permute.xlu0 %1593
      %1595 = vrot.lane.b32.xlu0 %v1042, 64
      %v1596 = vpop.permute.xlu0 %1595
      %1597 = vrot.lane.b32.xlu0 %v1043, 64
      %v1598 = vpop.permute.xlu0 %1597
      %1599 = vrot.lane.b32.xlu0 %v1044, 64
      %v1600 = vpop.permute.xlu0 %1599
      %1601 = vrot.lane.b32.xlu0 %v1045, 64
      %v1602 = vpop.permute.xlu0 %1601
      %1603 = vrot.lane.b32.xlu0 %v1046, 64
      %v1604 = vpop.permute.xlu0 %1603
      %1605 = vrot.lane.b32.xlu0 %v1047, 64
      %v1606 = vpop.permute.xlu0 %1605
      %1607 = vrot.lane.b32.xlu0 %v1048, 64
      %v1608 = vpop.permute.xlu0 %1607
      %1609 = vrot.lane.b32.xlu0 %v1049, 64
      %v1610 = vpop.permute.xlu0 %1609
      %1611 = vrot.lane.b32.xlu0 %v1050, 64
      %v1612 = vpop.permute.xlu0 %1611
      %1613 = vrot.lane.b32.xlu0 %v1051, 64
      %v1614 = vpop.permute.xlu0 %1613
      %1615 = vrot.lane.b32.xlu0 %v1052, 64
      %v1616 = vpop.permute.xlu0 %1615
      %1617 = vrot.lane.b32.xlu0 %v1053, 64
      %v1618 = vpop.permute.xlu0 %1617
      %1619 = vrot.lane.b32.xlu0 %v1054, 64
      %v1620 = vpop.permute.xlu0 %1619
      %1621 = vrot.lane.b32.xlu0 %v1055, 64
      %v1622 = vpop.permute.xlu0 %1621
      %1623 = vrot.lane.b32.xlu0 %v1056, 64
      %v1624 = vpop.permute.xlu0 %1623
      %1625 = vrot.lane.b32.xlu0 %v1057, 64
      %v1626 = vpop.permute.xlu0 %1625
      %1627 = vrot.lane.b32.xlu0 %v1058, 64
      %v1628 = vpop.permute.xlu0 %1627
      %1629 = vrot.lane.b32.xlu0 %v1059, 64
      %v1630 = vpop.permute.xlu0 %1629
      %1631 = vrot.lane.b32.xlu0 %v1060, 64
      %v1632 = vpop.permute.xlu0 %1631
      %1633 = vrot.lane.b32.xlu0 %v1061, 64
      %v1634 = vpop.permute.xlu0 %1633
      %1635 = vrot.lane.b32.xlu0 %v1062, 64
      %v1636 = vpop.permute.xlu0 %1635
      %1637 = vrot.lane.b32.xlu0 %v1063, 64
      %v1638 = vpop.permute.xlu0 %1637
      %1639 = vrot.lane.b32.xlu0 %v1064, 64
      %v1640 = vpop.permute.xlu0 %1639
      %1641 = vrot.lane.b32.xlu0 %v1065, 64
      %v1642 = vpop.permute.xlu0 %1641
      %1643 = vrot.lane.b32.xlu0 %v1066, 64
      %v1644 = vpop.permute.xlu0 %1643
      %1645 = vrot.lane.b32.xlu0 %v1067, 64
      %v1646 = vpop.permute.xlu0 %1645
      %1647 = vrot.lane.b32.xlu0 %v1068, 64
      %v1648 = vpop.permute.xlu0 %1647
      %1649 = vrot.lane.b32.xlu0 %v1069, 64
      %v1650 = vpop.permute.xlu0 %1649
      %1651 = vrot.lane.b32.xlu0 %v1070, 64
      %v1652 = vpop.permute.xlu0 %1651
      %1685 = vrot.lane.b32.xlu0 %v1208, 80
      %v1686 = vpop.permute.xlu0 %1685
      %1687 = vrot.lane.b32.xlu0 %v1210, 80
      %v1688 = vpop.permute.xlu0 %1687
      %1689 = vrot.lane.b32.xlu0 %v1212, 80
      %v1690 = vpop.permute.xlu0 %1689
      %1691 = vrot.lane.b32.xlu0 %v1214, 80
      %v1692 = vpop.permute.xlu0 %1691
      %1693 = vrot.lane.b32.xlu0 %v1216, 80
      %v1694 = vpop.permute.xlu0 %1693
      %1695 = vrot.lane.b32.xlu0 %v1218, 80
      %v1696 = vpop.permute.xlu0 %1695
      %1697 = vrot.lane.b32.xlu0 %v1220, 80
      %v1698 = vpop.permute.xlu0 %1697
      %1699 = vrot.lane.b32.xlu0 %v1222, 80
      %v1700 = vpop.permute.xlu0 %1699
      %1701 = vrot.lane.b32.xlu0 %v1224, 80
      %v1702 = vpop.permute.xlu0 %1701
      %1703 = vrot.lane.b32.xlu0 %v1226, 80
      %v1704 = vpop.permute.xlu0 %1703
      %1705 = vrot.lane.b32.xlu0 %v1228, 80
      %v1706 = vpop.permute.xlu0 %1705
      %1707 = vrot.lane.b32.xlu0 %v1230, 80
      %v1708 = vpop.permute.xlu0 %1707
      %1709 = vrot.lane.b32.xlu0 %v1232, 80
      %v1710 = vpop.permute.xlu0 %1709
      %1711 = vrot.lane.b32.xlu0 %v1234, 80
      %v1712 = vpop.permute.xlu0 %1711
      %1713 = vrot.lane.b32.xlu0 %v1236, 80
      %v1714 = vpop.permute.xlu0 %1713
      %1715 = vrot.lane.b32.xlu0 %v1238, 80
      %v1716 = vpop.permute.xlu0 %1715
      %1717 = vrot.lane.b32.xlu0 %v1240, 80
      %v1718 = vpop.permute.xlu0 %1717
      %1719 = vrot.lane.b32.xlu0 %v1242, 80
      %v1720 = vpop.permute.xlu0 %1719
      %1721 = vrot.lane.b32.xlu0 %v1244, 80
      %v1722 = vpop.permute.xlu0 %1721
      %1723 = vrot.lane.b32.xlu0 %v1246, 80
      %v1724 = vpop.permute.xlu0 %1723
      %1725 = vrot.lane.b32.xlu0 %v1248, 80
      %v1726 = vpop.permute.xlu0 %1725
      %1727 = vrot.lane.b32.xlu0 %v1250, 80
      %v1728 = vpop.permute.xlu0 %1727
      %1729 = vrot.lane.b32.xlu0 %v1252, 80
      %v1730 = vpop.permute.xlu0 %1729
      %1731 = vrot.lane.b32.xlu0 %v1254, 80
      %v1732 = vpop.permute.xlu0 %1731
      %1733 = vrot.lane.b32.xlu0 %v1256, 80
      %v1734 = vpop.permute.xlu0 %1733
      %1735 = vrot.lane.b32.xlu0 %v1258, 80
      %v1736 = vpop.permute.xlu0 %1735
      %1737 = vrot.lane.b32.xlu0 %v1260, 80
      %v1738 = vpop.permute.xlu0 %1737
      %1739 = vrot.lane.b32.xlu0 %v1262, 80
      %v1740 = vpop.permute.xlu0 %1739
      %1741 = vrot.lane.b32.xlu0 %v1264, 80
      %v1742 = vpop.permute.xlu0 %1741
      %1743 = vrot.lane.b32.xlu0 %v1265, 80
      %v1744 = vpop.permute.xlu0 %1743
      %1745 = vrot.lane.b32.xlu0 %v1204, 80
      %v1746 = vpop.permute.xlu0 %1745
      %1747 = vrot.lane.b32.xlu0 %v1267, 80
      %v1748 = vpop.permute.xlu0 %1747
      %1781 = vrot.lane.b32.xlu0 %v1116, 96
      %v1782 = vpop.permute.xlu0 %1781
      %1783 = vrot.lane.b32.xlu0 %v1118, 96
      %v1784 = vpop.permute.xlu0 %1783
      %1785 = vrot.lane.b32.xlu0 %v1120, 96
      %v1786 = vpop.permute.xlu0 %1785
      %1787 = vrot.lane.b32.xlu0 %v1122, 96
      %v1788 = vpop.permute.xlu0 %1787
      %1789 = vrot.lane.b32.xlu0 %v1124, 96
      %v1790 = vpop.permute.xlu0 %1789
      %1791 = vrot.lane.b32.xlu0 %v1126, 96
      %v1792 = vpop.permute.xlu0 %1791
      %1793 = vrot.lane.b32.xlu0 %v1128, 96
      %v1794 = vpop.permute.xlu0 %1793
      %1795 = vrot.lane.b32.xlu0 %v1130, 96
      %v1796 = vpop.permute.xlu0 %1795
      %1797 = vrot.lane.b32.xlu0 %v1132, 96
      %v1798 = vpop.permute.xlu0 %1797
      %1799 = vrot.lane.b32.xlu0 %v1134, 96
      %v1800 = vpop.permute.xlu0 %1799
      %1801 = vrot.lane.b32.xlu0 %v1136, 96
      %v1802 = vpop.permute.xlu0 %1801
      %1803 = vrot.lane.b32.xlu0 %v1138, 96
      %v1804 = vpop.permute.xlu0 %1803
      %1805 = vrot.lane.b32.xlu0 %v1140, 96
      %v1806 = vpop.permute.xlu0 %1805
      %1807 = vrot.lane.b32.xlu0 %v1142, 96
      %v1808 = vpop.permute.xlu0 %1807
      %1809 = vrot.lane.b32.xlu0 %v1144, 96
      %v1810 = vpop.permute.xlu0 %1809
      %1811 = vrot.lane.b32.xlu0 %v1146, 96
      %v1812 = vpop.permute.xlu0 %1811
      %1813 = vrot.lane.b32.xlu0 %v1148, 96
      %v1814 = vpop.permute.xlu0 %1813
      %1815 = vrot.lane.b32.xlu0 %v1150, 96
      %v1816 = vpop.permute.xlu0 %1815
      %1817 = vrot.lane.b32.xlu0 %v1152, 96
      %v1818 = vpop.permute.xlu0 %1817
      %1819 = vrot.lane.b32.xlu0 %v1154, 96
      %v1820 = vpop.permute.xlu0 %1819
      %1821 = vrot.lane.b32.xlu0 %v1156, 96
      %v1822 = vpop.permute.xlu0 %1821
      %1823 = vrot.lane.b32.xlu0 %v1158, 96
      %v1824 = vpop.permute.xlu0 %1823
      %1825 = vrot.lane.b32.xlu0 %v1160, 96
      %v1826 = vpop.permute.xlu0 %1825
      %1827 = vrot.lane.b32.xlu0 %v1162, 96
      %v1828 = vpop.permute.xlu0 %1827
      %1829 = vrot.lane.b32.xlu0 %v1164, 96
      %v1830 = vpop.permute.xlu0 %1829
      %1831 = vrot.lane.b32.xlu0 %v1166, 96
      %v1832 = vpop.permute.xlu0 %1831
      %1833 = vrot.lane.b32.xlu0 %v1168, 96
      %v1834 = vpop.permute.xlu0 %1833
      %1835 = vrot.lane.b32.xlu0 %v1169, 96
      %v1836 = vpop.permute.xlu0 %1835
      %1837 = vrot.lane.b32.xlu0 %v1077, 96
      %v1838 = vpop.permute.xlu0 %1837
      %1839 = vrot.lane.b32.xlu0 %v1079, 96
      %v1840 = vpop.permute.xlu0 %1839
      %1841 = vrot.lane.b32.xlu0 %v1200, 96
      %v1842 = vpop.permute.xlu0 %1841
      %1843 = vrot.lane.b32.xlu0 %v1114, 96
      %v1844 = vpop.permute.xlu0 %1843
      %1877 = vrot.lane.b32.xlu0 %v1041, 112
      %v1878 = vpop.permute.xlu0 %1877
      %1879 = vrot.lane.b32.xlu0 %v1042, 112
      %v1880 = vpop.permute.xlu0 %1879
      %1881 = vrot.lane.b32.xlu0 %v1043, 112
      %v1882 = vpop.permute.xlu0 %1881
      %1883 = vrot.lane.b32.xlu0 %v1044, 112
      %v1884 = vpop.permute.xlu0 %1883
      %1885 = vrot.lane.b32.xlu0 %v1045, 112
      %v1886 = vpop.permute.xlu0 %1885
      %1887 = vrot.lane.b32.xlu0 %v1046, 112
      %v1888 = vpop.permute.xlu0 %1887
      %1889 = vrot.lane.b32.xlu0 %v1047, 112
      %v1890 = vpop.permute.xlu0 %1889
      %1891 = vrot.lane.b32.xlu0 %v1048, 112
      %v1892 = vpop.permute.xlu0 %1891
      %1893 = vrot.lane.b32.xlu0 %v1049, 112
      %v1894 = vpop.permute.xlu0 %1893
      %1895 = vrot.lane.b32.xlu0 %v1050, 112
      %v1896 = vpop.permute.xlu0 %1895
      %1897 = vrot.lane.b32.xlu0 %v1051, 112
      %v1898 = vpop.permute.xlu0 %1897
      %1899 = vrot.lane.b32.xlu0 %v1052, 112
      %v1900 = vpop.permute.xlu0 %1899
      %1901 = vrot.lane.b32.xlu0 %v1053, 112
      %v1902 = vpop.permute.xlu0 %1901
      %1903 = vrot.lane.b32.xlu0 %v1054, 112
      %v1904 = vpop.permute.xlu0 %1903
      %1905 = vrot.lane.b32.xlu0 %v1055, 112
      %v1906 = vpop.permute.xlu0 %1905
      %1907 = vrot.lane.b32.xlu0 %v1056, 112
      %v1908 = vpop.permute.xlu0 %1907
      %1909 = vrot.lane.b32.xlu0 %v1057, 112
      %v1910 = vpop.permute.xlu0 %1909
      %1911 = vrot.lane.b32.xlu0 %v1058, 112
      %v1912 = vpop.permute.xlu0 %1911
      %1913 = vrot.lane.b32.xlu0 %v1059, 112
      %v1914 = vpop.permute.xlu0 %1913
      %1915 = vrot.lane.b32.xlu0 %v1060, 112
      %v1916 = vpop.permute.xlu0 %1915
      %1917 = vrot.lane.b32.xlu0 %v1061, 112
      %v1918 = vpop.permute.xlu0 %1917
      %1919 = vrot.lane.b32.xlu0 %v1062, 112
      %v1920 = vpop.permute.xlu0 %1919
      %1921 = vrot.lane.b32.xlu0 %v1063, 112
      %v1922 = vpop.permute.xlu0 %1921
      %1923 = vrot.lane.b32.xlu0 %v1064, 112
      %v1924 = vpop.permute.xlu0 %1923
      %1925 = vrot.lane.b32.xlu0 %v1065, 112
      %v1926 = vpop.permute.xlu0 %1925
      %1927 = vrot.lane.b32.xlu0 %v1066, 112
      %v1928 = vpop.permute.xlu0 %1927
      %1929 = vrot.lane.b32.xlu0 %v1067, 112
      %v1930 = vpop.permute.xlu0 %1929
      %1931 = vrot.lane.b32.xlu0 %v1068, 112
      %v1932 = vpop.permute.xlu0 %1931
      %1933 = vrot.lane.b32.xlu0 %v1069, 112
      %v1934 = vpop.permute.xlu0 %1933
      %1935 = vrot.lane.b32.xlu0 %v1070, 112
      %v1936 = vpop.permute.xlu0 %1935
      %1937 = vrot.lane.b32.xlu0 %v1039, 112
      %v1938 = vpop.permute.xlu0 %1937
      %1939 = vrot.lane.b32.xlu0 %v1040, 112
      %v1940 = vpop.permute.xlu0 %1939
      %v1973 = vsel %vm720, %v1077, %v1300
      %v1974 = vsel %vm720, %v1079, %v1302
      %v1975 = vsel %vm720, %v1200, %v1304
      %v1976 = vsel %vm720, %v1114, %v1306
      %v1977 = vsel %vm720, %v1116, %v1308
      %v1978 = vsel %vm720, %v1118, %v1310
      %v1979 = vsel %vm720, %v1120, %v1312
      %v1980 = vsel %vm720, %v1122, %v1314
      %v1981 = vsel %vm720, %v1124, %v1316
      %v1982 = vsel %vm720, %v1126, %v1318
      %v1983 = vsel %vm720, %v1128, %v1320
      %v1984 = vsel %vm720, %v1130, %v1322
      %v1985 = vsel %vm720, %v1132, %v1324
      %v1986 = vsel %vm720, %v1134, %v1326
      %v1987 = vsel %vm720, %v1136, %v1328
      %v1988 = vsel %vm720, %v1138, %v1330
      %v1989 = vsel %vm720, %v1140, %v1332
      %v1990 = vsel %vm720, %v1142, %v1334
      %v1991 = vsel %vm720, %v1144, %v1336
      %v1992 = vsel %vm720, %v1146, %v1338
      %v1993 = vsel %vm720, %v1148, %v1340
      %v1994 = vsel %vm720, %v1150, %v1342
      %v1995 = vsel %vm720, %v1152, %v1344
      %v1996 = vsel %vm720, %v1154, %v1346
      %v1997 = vsel %vm720, %v1156, %v1348
      %v1998 = vsel %vm720, %v1158, %v1350
      %v1999 = vsel %vm720, %v1160, %v1352
      %v2000 = vsel %vm720, %v1162, %v1354
      %v2001 = vsel %vm720, %v1164, %v1356
      %v2002 = vsel %vm720, %v1166, %v1358
      %v2003 = vsel %vm720, %v1168, %v1360
      %v2004 = vsel %vm720, %v1169, %v1362
      %vm2005 = vcmask 261120
      %v2006 = vsel %vm2005, %v1973, %v1397
      %v2007 = vsel %vm2005, %v1974, %v1399
      %v2008 = vsel %vm2005, %v1975, %v1401
      %v2009 = vsel %vm2005, %v1976, %v1403
      %v2010 = vsel %vm2005, %v1977, %v1405
      %v2011 = vsel %vm2005, %v1978, %v1407
      %v2012 = vsel %vm2005, %v1979, %v1409
      %v2013 = vsel %vm2005, %v1980, %v1411
      %v2014 = vsel %vm2005, %v1981, %v1413
      %v2015 = vsel %vm2005, %v1982, %v1415
      %v2016 = vsel %vm2005, %v1983, %v1417
      %v2017 = vsel %vm2005, %v1984, %v1419
      %v2018 = vsel %vm2005, %v1985, %v1421
      %v2019 = vsel %vm2005, %v1986, %v1423
      %v2020 = vsel %vm2005, %v1987, %v1425
      %v2021 = vsel %vm2005, %v1988, %v1427
      %v2022 = vsel %vm2005, %v1989, %v1429
      %v2023 = vsel %vm2005, %v1990, %v1431
      %v2024 = vsel %vm2005, %v1991, %v1433
      %v2025 = vsel %vm2005, %v1992, %v1435
      %v2026 = vsel %vm2005, %v1993, %v1437
      %v2027 = vsel %vm2005, %v1994, %v1439
      %v2028 = vsel %vm2005, %v1995, %v1441
      %v2029 = vsel %vm2005, %v1996, %v1443
      %v2030 = vsel %vm2005, %v1997, %v1445
      %v2031 = vsel %vm2005, %v1998, %v1447
      %v2032 = vsel %vm2005, %v1999, %v1449
      %v2033 = vsel %vm2005, %v2000, %v1451
      %v2034 = vsel %vm2005, %v2001, %v1453
      %v2035 = vsel %vm2005, %v2002, %v1455
      %v2036 = vsel %vm2005, %v2003, %v1457
      %v2037 = vsel %vm2005, %v2004, %v1459
      %vm2038 = vcmask 392192
      %v2039 = vsel %vm2038, %v2006, %v1494
      %v2040 = vsel %vm2038, %v2007, %v1496
      %v2041 = vsel %vm2038, %v2008, %v1498
      %v2042 = vsel %vm2038, %v2009, %v1500
      %v2043 = vsel %vm2038, %v2010, %v1502
      %v2044 = vsel %vm2038, %v2011, %v1504
      %v2045 = vsel %vm2038, %v2012, %v1506
      %v2046 = vsel %vm2038, %v2013, %v1508
      %v2047 = vsel %vm2038, %v2014, %v1510
      %v2048 = vsel %vm2038, %v2015, %v1512
      %v2049 = vsel %vm2038, %v2016, %v1514
      %v2050 = vsel %vm2038, %v2017, %v1516
      %v2051 = vsel %vm2038, %v2018, %v1518
      %v2052 = vsel %vm2038, %v2019, %v1520
      %v2053 = vsel %vm2038, %v2020, %v1522
      %v2054 = vsel %vm2038, %v2021, %v1524
      %v2055 = vsel %vm2038, %v2022, %v1526
      %v2056 = vsel %vm2038, %v2023, %v1528
      %v2057 = vsel %vm2038, %v2024, %v1530
      %v2058 = vsel %vm2038, %v2025, %v1532
      %v2059 = vsel %vm2038, %v2026, %v1534
      %v2060 = vsel %vm2038, %v2027, %v1536
      %v2061 = vsel %vm2038, %v2028, %v1538
      %v2062 = vsel %vm2038, %v2029, %v1540
      %v2063 = vsel %vm2038, %v2030, %v1542
      %v2064 = vsel %vm2038, %v2031, %v1544
      %v2065 = vsel %vm2038, %v2032, %v1546
      %v2066 = vsel %vm2038, %v2033, %v1548
      %v2067 = vsel %vm2038, %v2034, %v1550
      %v2068 = vsel %vm2038, %v2035, %v1552
      %v2069 = vsel %vm2038, %v2036, %v1554
      %v2070 = vsel %vm2038, %v2037, %v1556
      %v2071 = vsel %vm438, %v2039, %v1590
      %v2072 = vsel %vm438, %v2040, %v1592
      %v2073 = vsel %vm438, %v2041, %v1594
      %v2074 = vsel %vm438, %v2042, %v1596
      %v2075 = vsel %vm438, %v2043, %v1598
      %v2076 = vsel %vm438, %v2044, %v1600
      %v2077 = vsel %vm438, %v2045, %v1602
      %v2078 = vsel %vm438, %v2046, %v1604
      %v2079 = vsel %vm438, %v2047, %v1606
      %v2080 = vsel %vm438, %v2048, %v1608
      %v2081 = vsel %vm438, %v2049, %v1610
      %v2082 = vsel %vm438, %v2050, %v1612
      %v2083 = vsel %vm438, %v2051, %v1614
      %v2084 = vsel %vm438, %v2052, %v1616
      %v2085 = vsel %vm438, %v2053, %v1618
      %v2086 = vsel %vm438, %v2054, %v1620
      %v2087 = vsel %vm438, %v2055, %v1622
      %v2088 = vsel %vm438, %v2056, %v1624
      %v2089 = vsel %vm438, %v2057, %v1626
      %v2090 = vsel %vm438, %v2058, %v1628
      %v2091 = vsel %vm438, %v2059, %v1630
      %v2092 = vsel %vm438, %v2060, %v1632
      %v2093 = vsel %vm438, %v2061, %v1634
      %v2094 = vsel %vm438, %v2062, %v1636
      %v2095 = vsel %vm438, %v2063, %v1638
      %v2096 = vsel %vm438, %v2064, %v1640
      %v2097 = vsel %vm438, %v2065, %v1642
      %v2098 = vsel %vm438, %v2066, %v1644
      %v2099 = vsel %vm438, %v2067, %v1646
      %v2100 = vsel %vm438, %v2068, %v1648
      %v2101 = vsel %vm438, %v2069, %v1650
      %v2102 = vsel %vm438, %v2070, %v1652
      %vm2103 = vcmask 654336
      %v2104 = vsel %vm2103, %v2071, %v1686
      %v2105 = vsel %vm2103, %v2072, %v1688
      %v2106 = vsel %vm2103, %v2073, %v1690
      %v2107 = vsel %vm2103, %v2074, %v1692
      %v2108 = vsel %vm2103, %v2075, %v1694
      %v2109 = vsel %vm2103, %v2076, %v1696
      %v2110 = vsel %vm2103, %v2077, %v1698
      %v2111 = vsel %vm2103, %v2078, %v1700
      %v2112 = vsel %vm2103, %v2079, %v1702
      %v2113 = vsel %vm2103, %v2080, %v1704
      %v2114 = vsel %vm2103, %v2081, %v1706
      %v2115 = vsel %vm2103, %v2082, %v1708
      %v2116 = vsel %vm2103, %v2083, %v1710
      %v2117 = vsel %vm2103, %v2084, %v1712
      %v2118 = vsel %vm2103, %v2085, %v1714
      %v2119 = vsel %vm2103, %v2086, %v1716
      %v2120 = vsel %vm2103, %v2087, %v1718
      %v2121 = vsel %vm2103, %v2088, %v1720
      %v2122 = vsel %vm2103, %v2089, %v1722
      %v2123 = vsel %vm2103, %v2090, %v1724
      %v2124 = vsel %vm2103, %v2091, %v1726
      %v2125 = vsel %vm2103, %v2092, %v1728
      %v2126 = vsel %vm2103, %v2093, %v1730
      %v2127 = vsel %vm2103, %v2094, %v1732
      %v2128 = vsel %vm2103, %v2095, %v1734
      %v2129 = vsel %vm2103, %v2096, %v1736
      %v2130 = vsel %vm2103, %v2097, %v1738
      %v2131 = vsel %vm2103, %v2098, %v1740
      %v2132 = vsel %vm2103, %v2099, %v1742
      %v2133 = vsel %vm2103, %v2100, %v1744
      %v2134 = vsel %vm2103, %v2101, %v1746
      %v2135 = vsel %vm2103, %v2102, %v1748
      %vm2136 = vcmask 785408
      %v2137 = vsel %vm2136, %v2104, %v1782
      %v2138 = vsel %vm2136, %v2105, %v1784
      %v2139 = vsel %vm2136, %v2106, %v1786
      %v2140 = vsel %vm2136, %v2107, %v1788
      %v2141 = vsel %vm2136, %v2108, %v1790
      %v2142 = vsel %vm2136, %v2109, %v1792
      %v2143 = vsel %vm2136, %v2110, %v1794
      %v2144 = vsel %vm2136, %v2111, %v1796
      %v2145 = vsel %vm2136, %v2112, %v1798
      %v2146 = vsel %vm2136, %v2113, %v1800
      %v2147 = vsel %vm2136, %v2114, %v1802
      %v2148 = vsel %vm2136, %v2115, %v1804
      %v2149 = vsel %vm2136, %v2116, %v1806
      %v2150 = vsel %vm2136, %v2117, %v1808
      %v2151 = vsel %vm2136, %v2118, %v1810
      %v2152 = vsel %vm2136, %v2119, %v1812
      %v2153 = vsel %vm2136, %v2120, %v1814
      %v2154 = vsel %vm2136, %v2121, %v1816
      %v2155 = vsel %vm2136, %v2122, %v1818
      %v2156 = vsel %vm2136, %v2123, %v1820
      %v2157 = vsel %vm2136, %v2124, %v1822
      %v2158 = vsel %vm2136, %v2125, %v1824
      %v2159 = vsel %vm2136, %v2126, %v1826
      %v2160 = vsel %vm2136, %v2127, %v1828
      %v2161 = vsel %vm2136, %v2128, %v1830
      %v2162 = vsel %vm2136, %v2129, %v1832
      %v2163 = vsel %vm2136, %v2130, %v1834
      %v2164 = vsel %vm2136, %v2131, %v1836
      %v2165 = vsel %vm2136, %v2132, %v1838
      %v2166 = vsel %vm2136, %v2133, %v1840
      %v2167 = vsel %vm2136, %v2134, %v1842
      %v2168 = vsel %vm2136, %v2135, %v1844
      %vm2169 = vcmask 916480
      %v2170 = vsel %vm2169, %v2137, %v1878
      %v2171 = vsel %vm2169, %v2138, %v1880
      %v2172 = vsel %vm2169, %v2139, %v1882
      %v2173 = vsel %vm2169, %v2140, %v1884
      %v2174 = vsel %vm2169, %v2141, %v1886
      %v2175 = vsel %vm2169, %v2142, %v1888
      %v2176 = vsel %vm2169, %v2143, %v1890
      %v2177 = vsel %vm2169, %v2144, %v1892
      %v2178 = vsel %vm2169, %v2145, %v1894
      %v2179 = vsel %vm2169, %v2146, %v1896
      %v2180 = vsel %vm2169, %v2147, %v1898
      %v2181 = vsel %vm2169, %v2148, %v1900
      %v2182 = vsel %vm2169, %v2149, %v1902
      %v2183 = vsel %vm2169, %v2150, %v1904
      %v2184 = vsel %vm2169, %v2151, %v1906
      %v2185 = vsel %vm2169, %v2152, %v1908
      %v2186 = vsel %vm2169, %v2153, %v1910
      %v2187 = vsel %vm2169, %v2154, %v1912
      %v2188 = vsel %vm2169, %v2155, %v1914
      %v2189 = vsel %vm2169, %v2156, %v1916
      %v2190 = vsel %vm2169, %v2157, %v1918
      %v2191 = vsel %vm2169, %v2158, %v1920
      %v2192 = vsel %vm2169, %v2159, %v1922
      %v2193 = vsel %vm2169, %v2160, %v1924
      %v2194 = vsel %vm2169, %v2161, %v1926
      %v2195 = vsel %vm2169, %v2162, %v1928
      %v2196 = vsel %vm2169, %v2163, %v1930
      %v2197 = vsel %vm2169, %v2164, %v1932
      %v2198 = vsel %vm2169, %v2165, %v1934
      %v2199 = vsel %vm2169, %v2166, %v1936
      %v2200 = vsel %vm2169, %v2167, %v1938
      %v2201 = vsel %vm2169, %v2168, %v1940
      %v2202 = vld [vmem:[%s1] sm:$0xff]
      %v2203 = vld [vmem:[%s1 + $0x8] sm:$0xff]
      %v2204 = vld [vmem:[%s1 + $0x10] sm:$0xff]
      %v2205 = vld [vmem:[%s1 + $0x18] sm:$0xff]
      %v2206 = vld [vmem:[%s1 + $0x20] sm:$0xff]
      %v2207 = vld [vmem:[%s1 + $0x28] sm:$0xff]
      %v2208 = vld [vmem:[%s1 + $0x30] sm:$0xff]
      %v2209 = vld [vmem:[%s1 + $0x38] sm:$0xff]
      %v2210 = vld [vmem:[%s1 + $0x40] sm:$0xff]
      %v2211 = vld [vmem:[%s1 + $0x48] sm:$0xff]
      %v2212 = vld [vmem:[%s1 + $0x50] sm:$0xff]
      %v2213 = vld [vmem:[%s1 + $0x58] sm:$0xff]
      %v2214 = vld [vmem:[%s1 + $0x60] sm:$0xff]
      %v2215 = vld [vmem:[%s1 + $0x68] sm:$0xff]
      %v2216 = vld [vmem:[%s1 + $0x70] sm:$0xff]
      %v2217 = vld [vmem:[%s1 + $0x78] sm:$0xff]
      %v2218 = vld [vmem:[%s1 + $0x80] sm:$0xff]
      %v2219 = vld [vmem:[%s1 + $0x88] sm:$0xff]
      %v2220 = vld [vmem:[%s1 + $0x90] sm:$0xff]
      %v2221 = vld [vmem:[%s1 + $0x98] sm:$0xff]
      %v2222 = vld [vmem:[%s1 + $0xa0] sm:$0xff]
      %v2223 = vld [vmem:[%s1 + $0xa8] sm:$0xff]
      %v2224 = vld [vmem:[%s1 + $0xb0] sm:$0xff]
      %v2225 = vld [vmem:[%s1 + $0xb8] sm:$0xff]
      %v2226 = vld [vmem:[%s1 + $0xc0] sm:$0xff]
      %v2227 = vld [vmem:[%s1 + $0xc8] sm:$0xff]
      %v2228 = vld [vmem:[%s1 + $0xd0] sm:$0xff]
      %v2229 = vld [vmem:[%s1 + $0xd8] sm:$0xff]
      %v2230 = vld [vmem:[%s1 + $0xe0] sm:$0xff]
      %v2231 = vld [vmem:[%s1 + $0xe8] sm:$0xff]
      %v2232 = vld [vmem:[%s1 + $0xf0] sm:$0xff]
      %v2233 = vld [vmem:[%s1 + $0xf8] sm:$0xff]
      %v2234 = vld [vmem:[%s1 + $0x100] sm:$0xff]
      %v2235 = vld [vmem:[%s1 + $0x108] sm:$0xff]
      %v2236 = vld [vmem:[%s1 + $0x110] sm:$0xff]
      %v2237 = vld [vmem:[%s1 + $0x118] sm:$0xff]
      %v2238 = vld [vmem:[%s1 + $0x120] sm:$0xff]
      %v2239 = vld [vmem:[%s1 + $0x128] sm:$0xff]
      %v2240 = vld [vmem:[%s1 + $0x130] sm:$0xff]
      %v2241 = vld [vmem:[%s1 + $0x138] sm:$0xff]
      %v2242 = vld [vmem:[%s1 + $0x140] sm:$0xff]
      %v2243 = vld [vmem:[%s1 + $0x148] sm:$0xff]
      %v2244 = vld [vmem:[%s1 + $0x150] sm:$0xff]
      %v2245 = vld [vmem:[%s1 + $0x158] sm:$0xff]
      %v2246 = vld [vmem:[%s1 + $0x160] sm:$0xff]
      %v2247 = vld [vmem:[%s1 + $0x168] sm:$0xff]
      %v2248 = vld [vmem:[%s1 + $0x170] sm:$0xff]
      %v2249 = vld [vmem:[%s1 + $0x178] sm:$0xff]
      %v2250 = vld [vmem:[%s1 + $0x180] sm:$0xff]
      %v2251 = vld [vmem:[%s1 + $0x188] sm:$0xff]
      %v2252 = vld [vmem:[%s1 + $0x190] sm:$0xff]
      %v2253 = vld [vmem:[%s1 + $0x198] sm:$0xff]
      %v2254 = vld [vmem:[%s1 + $0x1a0] sm:$0xff]
      %v2255 = vld [vmem:[%s1 + $0x1a8] sm:$0xff]
      %v2256 = vld [vmem:[%s1 + $0x1b0] sm:$0xff]
      %v2257 = vld [vmem:[%s1 + $0x1b8] sm:$0xff]
      %v2258 = vld [vmem:[%s1 + $0x1c0] sm:$0xff]
      %v2259 = vld [vmem:[%s1 + $0x1c8] sm:$0xff]
      %v2260 = vld [vmem:[%s1 + $0x1d0] sm:$0xff]
      %v2261 = vld [vmem:[%s1 + $0x1d8] sm:$0xff]
      %v2262 = vld [vmem:[%s1 + $0x1e0] sm:$0xff]
      %v2263 = vld [vmem:[%s1 + $0x1e8] sm:$0xff]
      %v2264 = vld [vmem:[%s1 + $0x1f0] sm:$0xff]
      %v2265 = vld [vmem:[%s1 + $0x1f8] sm:$0xff]
      %v2266 = vmul.f32 %v2170, %v2202
      %v2267 = vmul.f32 %v1212, %v2203
      %v2268 = vmul.f32 %v2171, %v2204
      %v2269 = vmul.f32 %v1214, %v2205
      %v2270 = vmul.f32 %v2172, %v2206
      %v2271 = vmul.f32 %v1216, %v2207
      %v2272 = vmul.f32 %v2173, %v2208
      %v2273 = vmul.f32 %v1218, %v2209
      %v2274 = vmul.f32 %v2174, %v2210
      %v2275 = vmul.f32 %v1220, %v2211
      %v2276 = vmul.f32 %v2175, %v2212
      %v2277 = vmul.f32 %v1222, %v2213
      %v2278 = vmul.f32 %v2176, %v2214
      %v2279 = vmul.f32 %v1224, %v2215
      %v2280 = vmul.f32 %v2177, %v2216
      %v2281 = vmul.f32 %v1226, %v2217
      %v2282 = vmul.f32 %v2178, %v2218
      %v2283 = vmul.f32 %v1228, %v2219
      %v2284 = vmul.f32 %v2179, %v2220
      %v2285 = vmul.f32 %v1230, %v2221
      %v2286 = vmul.f32 %v2180, %v2222
      %v2287 = vmul.f32 %v1232, %v2223
      %v2288 = vmul.f32 %v2181, %v2224
      %v2289 = vmul.f32 %v1234, %v2225
      %v2290 = vmul.f32 %v2182, %v2226
      %v2291 = vmul.f32 %v1236, %v2227
      %v2292 = vmul.f32 %v2183, %v2228
      %v2293 = vmul.f32 %v1238, %v2229
      %v2294 = vmul.f32 %v2184, %v2230
      %v2295 = vmul.f32 %v1240, %v2231
      %v2296 = vmul.f32 %v2185, %v2232
      %v2297 = vmul.f32 %v1242, %v2233
      %v2298 = vmul.f32 %v2186, %v2234
      %v2299 = vmul.f32 %v1244, %v2235
      %v2300 = vmul.f32 %v2187, %v2236
      %v2301 = vmul.f32 %v1246, %v2237
      %v2302 = vmul.f32 %v2188, %v2238
      %v2303 = vmul.f32 %v1248, %v2239
      %v2304 = vmul.f32 %v2189, %v2240
      %v2305 = vmul.f32 %v1250, %v2241
      %v2306 = vmul.f32 %v2190, %v2242
      %v2307 = vmul.f32 %v1252, %v2243
      %v2308 = vmul.f32 %v2191, %v2244
      %v2309 = vmul.f32 %v1254, %v2245
      %v2310 = vmul.f32 %v2192, %v2246
      %v2311 = vmul.f32 %v1256, %v2247
      %v2312 = vmul.f32 %v2193, %v2248
      %v2313 = vmul.f32 %v1258, %v2249
      %v2314 = vmul.f32 %v2194, %v2250
      %v2315 = vmul.f32 %v1260, %v2251
      %v2316 = vmul.f32 %v2195, %v2252
      %v2317 = vmul.f32 %v1262, %v2253
      %v2318 = vmul.f32 %v2196, %v2254
      %v2319 = vmul.f32 %v1264, %v2255
      %v2320 = vmul.f32 %v2197, %v2256
      %v2321 = vmul.f32 %v1265, %v2257
      %v2322 = vmul.f32 %v2198, %v2258
      %v2323 = vmul.f32 %v1204, %v2259
      %v2324 = vmul.f32 %v2199, %v2260
      %v2325 = vmul.f32 %v1267, %v2261
      %v2326 = vmul.f32 %v2200, %v2262
      %v2327 = vmul.f32 %v1208, %v2263
      %v2328 = vmul.f32 %v2201, %v2264
      %v2329 = vmul.f32 %v1210, %v2265
      %v2330 = vpack.c.bf16 %v2268, %v2266
      %v2331 = vpack.c.bf16 %v2269, %v2267
      %v2332 = vpack.c.bf16 %v2272, %v2270
      %v2333 = vpack.c.bf16 %v2273, %v2271
      %v2334 = vpack.c.bf16 %v2276, %v2274
      %v2335 = vpack.c.bf16 %v2277, %v2275
      %v2336 = vpack.c.bf16 %v2280, %v2278
      %v2337 = vpack.c.bf16 %v2281, %v2279
      %v2338 = vpack.c.bf16 %v2284, %v2282
      %v2339 = vpack.c.bf16 %v2285, %v2283
      %v2340 = vpack.c.bf16 %v2288, %v2286
      %v2341 = vpack.c.bf16 %v2289, %v2287
      %v2342 = vpack.c.bf16 %v2292, %v2290
      %v2343 = vpack.c.bf16 %v2293, %v2291
      %v2344 = vpack.c.bf16 %v2296, %v2294
      %v2345 = vpack.c.bf16 %v2297, %v2295
      %v2346 = vpack.c.bf16 %v2300, %v2298
      %v2347 = vpack.c.bf16 %v2301, %v2299
      %v2348 = vpack.c.bf16 %v2304, %v2302
      %v2349 = vpack.c.bf16 %v2305, %v2303
      %v2350 = vpack.c.bf16 %v2308, %v2306
      %v2351 = vpack.c.bf16 %v2309, %v2307
      %v2352 = vpack.c.bf16 %v2312, %v2310
      %v2353 = vpack.c.bf16 %v2313, %v2311
      %v2354 = vpack.c.bf16 %v2316, %v2314
      %v2355 = vpack.c.bf16 %v2317, %v2315
      %v2356 = vpack.c.bf16 %v2320, %v2318
      %v2357 = vpack.c.bf16 %v2321, %v2319
      %v2358 = vpack.c.bf16 %v2324, %v2322
      %v2359 = vpack.c.bf16 %v2325, %v2323
      %v2360 = vpack.c.bf16 %v2328, %v2326
      %v2361 = vpack.c.bf16 %v2329, %v2327
      %v2362 = vld [vmem:[%s3] sm:$0xf]
      %v2363 = vld [vmem:[%s3 + $0x4] sm:$0xf]
      %v2364 = vld [vmem:[%s3 + $0x8] sm:$0xf]
      %v2365 = vld [vmem:[%s3 + $0xc] sm:$0xf]
      %v2366 = vld [vmem:[%s3 + $0x10] sm:$0xf]
      %v2367 = vld [vmem:[%s3 + $0x14] sm:$0xf]
      %v2368 = vld [vmem:[%s3 + $0x18] sm:$0xf]
      %v2369 = vld [vmem:[%s3 + $0x1c] sm:$0xf]
      %v2370 = vld [vmem:[%s3 + $0x20] sm:$0xf]
      %v2371 = vld [vmem:[%s3 + $0x24] sm:$0xf]
      %v2372 = vld [vmem:[%s3 + $0x28] sm:$0xf]
      %v2373 = vld [vmem:[%s3 + $0x2c] sm:$0xf]
      %v2374 = vld [vmem:[%s3 + $0x30] sm:$0xf]
      %v2375 = vld [vmem:[%s3 + $0x34] sm:$0xf]
      %v2376 = vld [vmem:[%s3 + $0x38] sm:$0xf]
      %v2377 = vld [vmem:[%s3 + $0x3c] sm:$0xf]
      %v2378 = vld [vmem:[%s3 + $0x40] sm:$0xf]
      %v2379 = vld [vmem:[%s3 + $0x44] sm:$0xf]
      %v2398 = vunpack.c.l.b16 %v2362
      %v2399 = vunpack.c.l.b16 %v2363
      %v2400 = vunpack.c.l.b16 %v2364
      %v2401 = vunpack.c.l.b16 %v2365
      %v2402 = vunpack.c.l.b16 %v2366
      %v2403 = vunpack.c.l.b16 %v2367
      %v2404 = vunpack.c.l.b16 %v2368
      %v2405 = vunpack.c.l.b16 %v2369
      %v2406 = vunpack.c.l.b16 %v2370
      %v2407 = vunpack.c.l.b16 %v2371
      %v2408 = vunpack.c.l.b16 %v2372
      %v2409 = vunpack.c.l.b16 %v2373
      %v2410 = vunpack.c.l.b16 %v2374
      %v2411 = vunpack.c.l.b16 %v2375
      %v2412 = vunpack.c.l.b16 %v2376
      %v2413 = vunpack.c.l.b16 %v2377
      %v2414 = vunpack.c.l.b16 %v2378
      %v2415 = vunpack.c.l.b16 %v2379
      %v2416 = vpack.c.b16 %v2399, %v2398
      %v2417 = vpack.c.b16 %v2401, %v2400
      %v2418 = vpack.c.b16 %v2403, %v2402
      %v2419 = vpack.c.b16 %v2405, %v2404
      %v2420 = vpack.c.b16 %v2407, %v2406
      %v2421 = vpack.c.b16 %v2409, %v2408
      %v2422 = vpack.c.b16 %v2411, %v2410
      %v2423 = vpack.c.b16 %v2413, %v2412
      %v2424 = vpack.c.b16 %v2415, %v2414
      %v2435 = vsel %vm720, %v2331, 0
      %v2438 = vsel %vm720, %v2333, 0
      %v2441 = vsel %vm720, %v2335, 0
      %v2444 = vsel %vm720, %v2337, 0
      %v2447 = vsel %vm720, %v2339, 0
      %v2450 = vsel %vm720, %v2341, 0
      %v2453 = vsel %vm720, %v2343, 0
      %v2456 = vsel %vm720, %v2345, 0
      %v2459 = vsel %vm720, %v2347, 0
      %v2462 = vsel %vm720, %v2349, 0
      %v2465 = vsel %vm720, %v2351, 0
      %v2468 = vsel %vm720, %v2353, 0
      %v2471 = vsel %vm720, %v2355, 0
      %v2474 = vsel %vm720, %v2357, 0
      %v2477 = vsel %vm720, %v2359, 0
      %v2480 = vsel %vm720, %v2361, 0
      %2482 = vmatprep.subr.bf16.mxu0 0
      %2483 = vmatpush1.bf16.msra.mxu0 %v2423
      %2484 = vmatprep.subr.bf16.mxu0 0
      %2485 = vmatpush1.bf16.msra.mxu0 %v2422
      %2486 = vmatprep.subr.bf16.mxu0 0
      %2487 = vmatpush1.bf16.msra.mxu0 %v2421
      %2488 = vmatprep.subr.bf16.mxu0 0
      %2489 = vmatpush1.bf16.msra.mxu0 %v2420
      %2490 = vmatprep.subr.bf16.mxu0 0
      %2491 = vmatpush1.bf16.msra.mxu0 %v2419
      %2492 = vmatprep.subr.bf16.mxu0 0
      %2493 = vmatpush1.bf16.msra.mxu0 %v2418
      %2494 = vmatprep.subr.bf16.mxu0 0
      %2495 = vmatpush1.bf16.msra.mxu0 %v2417
      %2496 = vmatprep.subr.bf16.mxu0 0
      %2497 = vmatpush1.bf16.msra.mxu0 %v2416
      %2498 = vmatprep.subr.bf16.mxu0 0
      %2499 = vmatpush2.bf16.msra.mxu0 0
      %2500 = vmatprep.subr.bf16.mxu0 0
      %2501 = vmatpush2.bf16.msra.mxu0 0
      %2502 = vmatprep.subr.bf16.mxu0 0
      %2503 = vmatpush2.bf16.msra.mxu0 0
      %2504 = vmatprep.subr.bf16.mxu0 0
      %2505 = vmatpush2.bf16.msra.mxu0 0
      %2506 = vmatprep.subr.bf16.mxu0 0
      %2507 = vmatpush2.bf16.msra.mxu0 0
      %2508 = vmatprep.subr.bf16.mxu0 0
      %2509 = vmatpush2.bf16.msra.mxu0 0
      %2510 = vmatprep.subr.bf16.mxu0 0
      %2511 = vmatpush2.bf16.msra.mxu0 0
      %2512 = vmatprep.subr.bf16.mxu0 0
      %2513 = vmatpush2.bf16.msra.mxu0 %v2424
      %2514 = vmatprep.mubr.bf16.mxu0 %v2435
      %2515 = vmatmul.mubr.bf16.gmra.mxu0 %v2330
      %v2516 = vpop.f32.mrf.mxu0
      %v2517 = vadd.f32 0.0, %v2516
      %v2518 = vpop.f32.mrf.mxu0
      %v2519 = vpop.f32.mrf.mxu0
      %v2520 = vadd.f32 0.0, %v2519
      %v2521 = vpop.f32.mrf.mxu0
      %2522 = vmatprep.mubr.bf16.mxu0 %v2438
      %2523 = vmatmul.mubr.bf16.gmra.mxu0 %v2332
      %v2524 = vpop.f32.mrf.mxu0
      %v2525 = vadd.f32 0.0, %v2524
      %v2526 = vpop.f32.mrf.mxu0
      %v2527 = vpop.f32.mrf.mxu0
      %v2528 = vadd.f32 0.0, %v2527
      %v2529 = vpop.f32.mrf.mxu0
      %2530 = vmatprep.mubr.bf16.mxu0 %v2441
      %2531 = vmatmul.mubr.bf16.gmra.mxu0 %v2334
      %v2532 = vpop.f32.mrf.mxu0
      %v2533 = vadd.f32 0.0, %v2532
      %v2534 = vpop.f32.mrf.mxu0
      %v2535 = vpop.f32.mrf.mxu0
      %v2536 = vadd.f32 0.0, %v2535
      %v2537 = vpop.f32.mrf.mxu0
      %2538 = vmatprep.mubr.bf16.mxu0 %v2444
      %2539 = vmatmul.mubr.bf16.gmra.mxu0 %v2336
      %v2540 = vpop.f32.mrf.mxu0
      %v2541 = vadd.f32 0.0, %v2540
      %v2542 = vpop.f32.mrf.mxu0
      %v2543 = vpop.f32.mrf.mxu0
      %v2544 = vadd.f32 0.0, %v2543
      %v2545 = vpop.f32.mrf.mxu0
      %2546 = vmatprep.mubr.bf16.mxu0 %v2447
      %2547 = vmatmul.mubr.bf16.gmra.mxu0 %v2338
      %v2548 = vpop.f32.mrf.mxu0
      %v2549 = vadd.f32 0.0, %v2548
      %v2550 = vpop.f32.mrf.mxu0
      %v2551 = vpop.f32.mrf.mxu0
      %v2552 = vadd.f32 0.0, %v2551
      %v2553 = vpop.f32.mrf.mxu0
      %2554 = vmatprep.mubr.bf16.mxu0 %v2450
      %2555 = vmatmul.mubr.bf16.gmra.mxu0 %v2340
      %v2556 = vpop.f32.mrf.mxu0
      %v2557 = vadd.f32 0.0, %v2556
      %v2558 = vpop.f32.mrf.mxu0
      %v2559 = vpop.f32.mrf.mxu0
      %v2560 = vadd.f32 0.0, %v2559
      %v2561 = vpop.f32.mrf.mxu0
      %2562 = vmatprep.mubr.bf16.mxu0 %v2453
      %2563 = vmatmul.mubr.bf16.gmra.mxu0 %v2342
      %v2564 = vpop.f32.mrf.mxu0
      %v2565 = vadd.f32 0.0, %v2564
      %v2566 = vpop.f32.mrf.mxu0
      %v2567 = vpop.f32.mrf.mxu0
      %v2568 = vadd.f32 0.0, %v2567
      %v2569 = vpop.f32.mrf.mxu0
      %2570 = vmatprep.mubr.bf16.mxu0 %v2456
      %2571 = vmatmul.mubr.bf16.gmra.mxu0 %v2344
      %v2572 = vpop.f32.mrf.mxu0
      %v2573 = vadd.f32 0.0, %v2572
      %v2574 = vpop.f32.mrf.mxu0
      %v2575 = vpop.f32.mrf.mxu0
      %v2576 = vadd.f32 0.0, %v2575
      %v2577 = vpop.f32.mrf.mxu0
      %2578 = vmatprep.mubr.bf16.mxu0 %v2459
      %2579 = vmatmul.mubr.bf16.gmra.mxu0 %v2346
      %v2580 = vpop.f32.mrf.mxu0
      %v2581 = vadd.f32 0.0, %v2580
      %v2582 = vpop.f32.mrf.mxu0
      %v2583 = vpop.f32.mrf.mxu0
      %v2584 = vadd.f32 0.0, %v2583
      %v2585 = vpop.f32.mrf.mxu0
      %2586 = vmatprep.mubr.bf16.mxu0 %v2462
      %2587 = vmatmul.mubr.bf16.gmra.mxu0 %v2348
      %v2588 = vpop.f32.mrf.mxu0
      %v2589 = vadd.f32 0.0, %v2588
      %v2590 = vpop.f32.mrf.mxu0
      %v2591 = vpop.f32.mrf.mxu0
      %v2592 = vadd.f32 0.0, %v2591
      %v2593 = vpop.f32.mrf.mxu0
      %2594 = vmatprep.mubr.bf16.mxu0 %v2465
      %2595 = vmatmul.mubr.bf16.gmra.mxu0 %v2350
      %v2596 = vpop.f32.mrf.mxu0
      %v2597 = vadd.f32 0.0, %v2596
      %v2598 = vpop.f32.mrf.mxu0
      %v2599 = vpop.f32.mrf.mxu0
      %v2600 = vadd.f32 0.0, %v2599
      %v2601 = vpop.f32.mrf.mxu0
      %2602 = vmatprep.mubr.bf16.mxu0 %v2468
      %2603 = vmatmul.mubr.bf16.gmra.mxu0 %v2352
      %v2604 = vpop.f32.mrf.mxu0
      %v2605 = vadd.f32 0.0, %v2604
      %v2606 = vpop.f32.mrf.mxu0
      %v2607 = vpop.f32.mrf.mxu0
      %v2608 = vadd.f32 0.0, %v2607
      %v2609 = vpop.f32.mrf.mxu0
      %2610 = vmatprep.mubr.bf16.mxu0 %v2471
      %2611 = vmatmul.mubr.bf16.gmra.mxu0 %v2354
      %v2612 = vpop.f32.mrf.mxu0
      %v2613 = vadd.f32 0.0, %v2612
      %v2614 = vpop.f32.mrf.mxu0
      %v2615 = vpop.f32.mrf.mxu0
      %v2616 = vadd.f32 0.0, %v2615
      %v2617 = vpop.f32.mrf.mxu0
      %2618 = vmatprep.mubr.bf16.mxu0 %v2474
      %2619 = vmatmul.mubr.bf16.gmra.mxu0 %v2356
      %v2620 = vpop.f32.mrf.mxu0
      %v2621 = vadd.f32 0.0, %v2620
      %v2622 = vpop.f32.mrf.mxu0
      %v2623 = vpop.f32.mrf.mxu0
      %v2624 = vadd.f32 0.0, %v2623
      %v2625 = vpop.f32.mrf.mxu0
      %2626 = vmatprep.mubr.bf16.mxu0 %v2477
      %2627 = vmatmul.mubr.bf16.gmra.mxu0 %v2358
      %v2628 = vpop.f32.mrf.mxu0
      %v2629 = vadd.f32 0.0, %v2628
      %v2630 = vpop.f32.mrf.mxu0
      %v2631 = vpop.f32.mrf.mxu0
      %v2632 = vadd.f32 0.0, %v2631
      %v2633 = vpop.f32.mrf.mxu0
      %2634 = vmatprep.mubr.bf16.mxu0 %v2480
      %2635 = vmatmul.mubr.bf16.gmra.mxu0 %v2360
      %v2636 = vpop.f32.mrf.mxu0
      %v2637 = vadd.f32 0.0, %v2636
      %v2638 = vpop.f32.mrf.mxu0
      %v2639 = vpop.f32.mrf.mxu0
      %v2640 = vadd.f32 0.0, %v2639
      %v2641 = vpop.f32.mrf.mxu0
      %2642 = vdwg.mxu0
      %v2643 = vlaneseq
      %v2644 = vshrl.u32 %v2643, 7
      %v2645 = vsub.s32 0, %v2644
      %v2646 = vrot.slane %v388, %v2645
      %v2647 = vmul.f32 %v2517, %v2646
      %v2648 = vmul.f32 %v2520, %v2646
      %v2649 = vmul.f32 %v2525, %v2646
      %v2650 = vmul.f32 %v2528, %v2646
      %v2651 = vmul.f32 %v2533, %v2646
      %v2652 = vmul.f32 %v2536, %v2646
      %v2653 = vmul.f32 %v2541, %v2646
      %v2654 = vmul.f32 %v2544, %v2646
      %v2655 = vmul.f32 %v2549, %v2646
      %v2656 = vmul.f32 %v2552, %v2646
      %v2657 = vmul.f32 %v2557, %v2646
      %v2658 = vmul.f32 %v2560, %v2646
      %v2659 = vmul.f32 %v2565, %v2646
      %v2660 = vmul.f32 %v2568, %v2646
      %v2661 = vmul.f32 %v2573, %v2646
      %v2662 = vmul.f32 %v2576, %v2646
      %v2663 = vmul.f32 %v2581, %v2646
      %v2664 = vmul.f32 %v2584, %v2646
      %v2665 = vmul.f32 %v2589, %v2646
      %v2666 = vmul.f32 %v2592, %v2646
      %v2667 = vmul.f32 %v2597, %v2646
      %v2668 = vmul.f32 %v2600, %v2646
      %v2669 = vmul.f32 %v2605, %v2646
      %v2670 = vmul.f32 %v2608, %v2646
      %v2671 = vmul.f32 %v2613, %v2646
      %v2672 = vmul.f32 %v2616, %v2646
      %v2673 = vmul.f32 %v2621, %v2646
      %v2674 = vmul.f32 %v2624, %v2646
      %v2675 = vmul.f32 %v2629, %v2646
      %v2676 = vmul.f32 %v2632, %v2646
      %v2677 = vmul.f32 %v2637, %v2646
      %v2678 = vmul.f32 %v2640, %v2646
      %v2679 = vlaneseq
      %v2680 = vshrl.u32 %v2679, 7
      %v2681 = vsub.s32 1, %v2680
      %v2682 = vrot.slane %v388, %v2681
      %v2683 = vadd.f32 %v2647, %v2682
      %v2684 = vadd.f32 %v2648, %v2682
      %v2685 = vadd.f32 %v2649, %v2682
      %v2686 = vadd.f32 %v2650, %v2682
      %v2687 = vadd.f32 %v2651, %v2682
      %v2688 = vadd.f32 %v2652, %v2682
      %v2689 = vadd.f32 %v2653, %v2682
      %v2690 = vadd.f32 %v2654, %v2682
      %v2691 = vadd.f32 %v2655, %v2682
      %v2692 = vadd.f32 %v2656, %v2682
      %v2693 = vadd.f32 %v2657, %v2682
      %v2694 = vadd.f32 %v2658, %v2682
      %v2695 = vadd.f32 %v2659, %v2682
      %v2696 = vadd.f32 %v2660, %v2682
      %v2697 = vadd.f32 %v2661, %v2682
      %v2698 = vadd.f32 %v2662, %v2682
      %v2699 = vadd.f32 %v2663, %v2682
      %v2700 = vadd.f32 %v2664, %v2682
      %v2701 = vadd.f32 %v2665, %v2682
      %v2702 = vadd.f32 %v2666, %v2682
      %v2703 = vadd.f32 %v2667, %v2682
      %v2704 = vadd.f32 %v2668, %v2682
      %v2705 = vadd.f32 %v2669, %v2682
      %v2706 = vadd.f32 %v2670, %v2682
      %v2707 = vadd.f32 %v2671, %v2682
      %v2708 = vadd.f32 %v2672, %v2682
      %v2709 = vadd.f32 %v2673, %v2682
      %v2710 = vadd.f32 %v2674, %v2682
      %v2711 = vadd.f32 %v2675, %v2682
      %v2712 = vadd.f32 %v2676, %v2682
      %v2713 = vadd.f32 %v2677, %v2682
      %v2714 = vadd.f32 %v2678, %v2682
      %v2715 = vsel %vm720, %v2683, 0.0
      %v2716 = vsel %vm720, %v2684, 0.0
      %v2717 = vadd.f32 %v2715, %v2716
      %v2718 = vsel %vm720, %v2685, 0.0
      %v2719 = vadd.f32 %v2717, %v2718
      %v2720 = vsel %vm720, %v2686, 0.0
      %v2721 = vadd.f32 %v2719, %v2720
      %v2722 = vsel %vm720, %v2687, 0.0
      %v2723 = vadd.f32 %v2721, %v2722
      %v2724 = vsel %vm720, %v2688, 0.0
      %v2725 = vadd.f32 %v2723, %v2724
      %v2726 = vsel %vm720, %v2689, 0.0
      %v2727 = vadd.f32 %v2725, %v2726
      %v2728 = vsel %vm720, %v2690, 0.0
      %v2729 = vadd.f32 %v2727, %v2728
      %v2730 = vsel %vm720, %v2691, 0.0
      %v2731 = vadd.f32 %v2729, %v2730
      %v2732 = vsel %vm720, %v2692, 0.0
      %v2733 = vadd.f32 %v2731, %v2732
      %v2734 = vsel %vm720, %v2693, 0.0
      %v2735 = vadd.f32 %v2733, %v2734
      %v2736 = vsel %vm720, %v2694, 0.0
      %v2737 = vadd.f32 %v2735, %v2736
      %v2738 = vsel %vm720, %v2695, 0.0
      %v2739 = vadd.f32 %v2737, %v2738
      %v2740 = vsel %vm720, %v2696, 0.0
      %v2741 = vadd.f32 %v2739, %v2740
      %v2742 = vsel %vm720, %v2697, 0.0
      %v2743 = vadd.f32 %v2741, %v2742
      %v2744 = vsel %vm720, %v2698, 0.0
      %v2745 = vadd.f32 %v2743, %v2744
      %v2746 = vsel %vm720, %v2699, 0.0
      %v2747 = vadd.f32 %v2745, %v2746
      %v2748 = vsel %vm720, %v2700, 0.0
      %v2749 = vadd.f32 %v2747, %v2748
      %v2750 = vsel %vm720, %v2701, 0.0
      %v2751 = vadd.f32 %v2749, %v2750
      %v2752 = vsel %vm720, %v2702, 0.0
      %v2753 = vadd.f32 %v2751, %v2752
      %v2754 = vsel %vm720, %v2703, 0.0
      %v2755 = vadd.f32 %v2753, %v2754
      %v2756 = vsel %vm720, %v2704, 0.0
      %v2757 = vadd.f32 %v2755, %v2756
      %v2758 = vsel %vm720, %v2705, 0.0
      %v2759 = vadd.f32 %v2757, %v2758
      %v2760 = vsel %vm720, %v2706, 0.0
      %v2761 = vadd.f32 %v2759, %v2760
      %v2762 = vsel %vm720, %v2707, 0.0
      %v2763 = vadd.f32 %v2761, %v2762
      %v2764 = vsel %vm720, %v2708, 0.0
      %v2765 = vadd.f32 %v2763, %v2764
      %v2766 = vsel %vm720, %v2709, 0.0
      %v2767 = vadd.f32 %v2765, %v2766
      %v2768 = vsel %vm720, %v2710, 0.0
      %v2769 = vadd.f32 %v2767, %v2768
      %v2770 = vsel %vm720, %v2711, 0.0
      %v2771 = vadd.f32 %v2769, %v2770
      %v2772 = vsel %vm720, %v2712, 0.0
      %v2773 = vadd.f32 %v2771, %v2772
      %v2774 = vsel %vm720, %v2713, 0.0
      %v2775 = vadd.f32 %v2773, %v2774
      %v2776 = vsel %vm720, %v2714, 0.0
      %v2777 = vadd.f32 %v2775, %v2776
      %v2778 = vrot.slane %v2777, 4
      %v2779 = vadd.f32 %v2777, %v2778
      %v2780 = vrot.slane %v2779, 2
      %v2781 = vadd.f32 %v2779, %v2780
      %v2782 = vrot.slane %v2781, 1
      %v2783 = vadd.f32 %v2781, %v2782
      %v2784 = vmul.f32 %v2783, %v790
      %v2785 = vsel %vm720, %v2784, 0.0
      %2786 = vadd.xlane.f32.xlu0 %v2785
      %v2787 = vpop.xlane.xlu0 %2786
      %v2788 = vmul.f32 %v2787, %v795
      %v2789 = vsub.f32 %v2784, %v2788
      %v2790 = vmul.f32 %v2789, %v2789
      %v2791 = vsel %vm720, %v2790, 0.0
      %2792 = vadd.xlane.f32.xlu0 %v2791
      %v2793 = vpop.xlane.xlu0 %2792
      %v2794 = vmul.f32 %v2793, %v795
      %v2795 = vadd.f32 %v2794, 1e-06
      %v2796 = vrsqrt.pop %v2795
      %v2797 = vmul.f32 %v2789, %v2796
      %v2798 = vmul.f32 %v2797, %v388
      %v2800 = vrot.slane %v388, 1
      %v2802 = vadd.f32 %v2798, %v2800
      %v2803 = vlaneseq
      %v2804 = vshrl.u32 %v2803, 7
      %v2805 = vsub.s32 2, %v2804
      %v2806 = vrot.slane %v2802, %v2805
      %v2807 = vadd.f32 %v2806, %v2683
      %v2808 = vadd.f32 %v2806, %v2684
      %v2809 = vadd.f32 %v2806, %v2685
      %v2810 = vadd.f32 %v2806, %v2686
      %v2811 = vadd.f32 %v2806, %v2687
      %v2812 = vadd.f32 %v2806, %v2688
      %v2813 = vadd.f32 %v2806, %v2689
      %v2814 = vadd.f32 %v2806, %v2690
      %v2815 = vadd.f32 %v2806, %v2691
      %v2816 = vadd.f32 %v2806, %v2692
      %v2817 = vadd.f32 %v2806, %v2693
      %v2818 = vadd.f32 %v2806, %v2694
      %v2819 = vadd.f32 %v2806, %v2695
      %v2820 = vadd.f32 %v2806, %v2696
      %v2821 = vadd.f32 %v2806, %v2697
      %v2822 = vadd.f32 %v2806, %v2698
      %v2823 = vadd.f32 %v2806, %v2699
      %v2824 = vadd.f32 %v2806, %v2700
      %v2825 = vadd.f32 %v2806, %v2701
      %v2826 = vadd.f32 %v2806, %v2702
      %v2827 = vadd.f32 %v2806, %v2703
      %v2828 = vadd.f32 %v2806, %v2704
      %v2829 = vadd.f32 %v2806, %v2705
      %v2830 = vadd.f32 %v2806, %v2706
      %v2831 = vadd.f32 %v2806, %v2707
      %v2832 = vadd.f32 %v2806, %v2708
      %v2833 = vadd.f32 %v2806, %v2709
      %v2834 = vadd.f32 %v2806, %v2710
      %v2835 = vadd.f32 %v2806, %v2711
      %v2836 = vadd.f32 %v2806, %v2712
      %v2837 = vadd.f32 %v2806, %v2713
      %v2838 = vadd.f32 %v2806, %v2714
      %v2839 = vxor.u32 %v2807, 2147483648
      %v2840 = vxor.u32 %v2808, 2147483648
      %v2841 = vxor.u32 %v2809, 2147483648
      %v2842 = vxor.u32 %v2810, 2147483648
      %v2843 = vxor.u32 %v2811, 2147483648
      %v2844 = vxor.u32 %v2812, 2147483648
      %v2845 = vxor.u32 %v2813, 2147483648
      %v2846 = vxor.u32 %v2814, 2147483648
      %v2847 = vxor.u32 %v2815, 2147483648
      %v2848 = vxor.u32 %v2816, 2147483648
      %v2849 = vxor.u32 %v2817, 2147483648
      %v2850 = vxor.u32 %v2818, 2147483648
      %v2851 = vxor.u32 %v2819, 2147483648
      %v2852 = vxor.u32 %v2820, 2147483648
      %v2853 = vxor.u32 %v2821, 2147483648
      %v2854 = vxor.u32 %v2822, 2147483648
      %v2855 = vxor.u32 %v2823, 2147483648
      %v2856 = vxor.u32 %v2824, 2147483648
      %v2857 = vxor.u32 %v2825, 2147483648
      %v2858 = vxor.u32 %v2826, 2147483648
      %v2859 = vxor.u32 %v2827, 2147483648
      %v2860 = vxor.u32 %v2828, 2147483648
      %v2861 = vxor.u32 %v2829, 2147483648
      %v2862 = vxor.u32 %v2830, 2147483648
      %v2863 = vxor.u32 %v2831, 2147483648
      %v2864 = vxor.u32 %v2832, 2147483648
      %v2865 = vxor.u32 %v2833, 2147483648
      %v2866 = vxor.u32 %v2834, 2147483648
      %v2867 = vxor.u32 %v2835, 2147483648
      %v2868 = vxor.u32 %v2836, 2147483648
      %v2869 = vxor.u32 %v2837, 2147483648
      %v2870 = vxor.u32 %v2838, 2147483648
      %v2871 = vmul.f32 %v2839, 1.442695
      %v2872 = vpow.pop %v2871
      %v2873 = vmul.f32 %v2840, 1.442695
      %v2874 = vpow.pop %v2873
      %v2875 = vmul.f32 %v2841, 1.442695
      %v2876 = vpow.pop %v2875
      %v2877 = vmul.f32 %v2842, 1.442695
      %v2878 = vpow.pop %v2877
      %v2879 = vmul.f32 %v2843, 1.442695
      %v2880 = vpow.pop %v2879
      %v2881 = vmul.f32 %v2844, 1.442695
      %v2882 = vpow.pop %v2881
      %v2883 = vmul.f32 %v2845, 1.442695
      %v2884 = vpow.pop %v2883
      %v2885 = vmul.f32 %v2846, 1.442695
      %v2886 = vpow.pop %v2885
      %v2887 = vmul.f32 %v2847, 1.442695
      %v2888 = vpow.pop %v2887
      %v2889 = vmul.f32 %v2848, 1.442695
      %v2890 = vpow.pop %v2889
      %v2891 = vmul.f32 %v2849, 1.442695
      %v2892 = vpow.pop %v2891
      %v2893 = vmul.f32 %v2850, 1.442695
      %v2894 = vpow.pop %v2893
      %v2895 = vmul.f32 %v2851, 1.442695
      %v2896 = vpow.pop %v2895
      %v2897 = vmul.f32 %v2852, 1.442695
      %v2898 = vpow.pop %v2897
      %v2899 = vmul.f32 %v2853, 1.442695
      %v2900 = vpow.pop %v2899
      %v2901 = vmul.f32 %v2854, 1.442695
      %v2902 = vpow.pop %v2901
      %v2903 = vmul.f32 %v2855, 1.442695
      %v2904 = vpow.pop %v2903
      %v2905 = vmul.f32 %v2856, 1.442695
      %v2906 = vpow.pop %v2905
      %v2907 = vmul.f32 %v2857, 1.442695
      %v2908 = vpow.pop %v2907
      %v2909 = vmul.f32 %v2858, 1.442695
      %v2910 = vpow.pop %v2909
      %v2911 = vmul.f32 %v2859, 1.442695
      %v2912 = vpow.pop %v2911
      %v2913 = vmul.f32 %v2860, 1.442695
      %v2914 = vpow.pop %v2913
      %v2915 = vmul.f32 %v2861, 1.442695
      %v2916 = vpow.pop %v2915
      %v2917 = vmul.f32 %v2862, 1.442695
      %v2918 = vpow.pop %v2917
      %v2919 = vmul.f32 %v2863, 1.442695
      %v2920 = vpow.pop %v2919
      %v2921 = vmul.f32 %v2864, 1.442695
      %v2922 = vpow.pop %v2921
      %v2923 = vmul.f32 %v2865, 1.442695
      %v2924 = vpow.pop %v2923
      %v2925 = vmul.f32 %v2866, 1.442695
      %v2926 = vpow.pop %v2925
      %v2927 = vmul.f32 %v2867, 1.442695
      %v2928 = vpow.pop %v2927
      %v2929 = vmul.f32 %v2868, 1.442695
      %v2930 = vpow.pop %v2929
      %v2931 = vmul.f32 %v2869, 1.442695
      %v2932 = vpow.pop %v2931
      %v2933 = vmul.f32 %v2870, 1.442695
      %v2934 = vpow.pop %v2933
      %v2935 = vadd.f32 %v2872, 1.0
      %v2936 = vadd.f32 %v2874, 1.0
      %v2937 = vadd.f32 %v2876, 1.0
      %v2938 = vadd.f32 %v2878, 1.0
      %v2939 = vadd.f32 %v2880, 1.0
      %v2940 = vadd.f32 %v2882, 1.0
      %v2941 = vadd.f32 %v2884, 1.0
      %v2942 = vadd.f32 %v2886, 1.0
      %v2943 = vadd.f32 %v2888, 1.0
      %v2944 = vadd.f32 %v2890, 1.0
      %v2945 = vadd.f32 %v2892, 1.0
      %v2946 = vadd.f32 %v2894, 1.0
      %v2947 = vadd.f32 %v2896, 1.0
      %v2948 = vadd.f32 %v2898, 1.0
      %v2949 = vadd.f32 %v2900, 1.0
      %v2950 = vadd.f32 %v2902, 1.0
      %v2951 = vadd.f32 %v2904, 1.0
      %v2952 = vadd.f32 %v2906, 1.0
      %v2953 = vadd.f32 %v2908, 1.0
      %v2954 = vadd.f32 %v2910, 1.0
      %v2955 = vadd.f32 %v2912, 1.0
      %v2956 = vadd.f32 %v2914, 1.0
      %v2957 = vadd.f32 %v2916, 1.0
      %v2958 = vadd.f32 %v2918, 1.0
      %v2959 = vadd.f32 %v2920, 1.0
      %v2960 = vadd.f32 %v2922, 1.0
      %v2961 = vadd.f32 %v2924, 1.0
      %v2962 = vadd.f32 %v2926, 1.0
      %v2963 = vadd.f32 %v2928, 1.0
      %v2964 = vadd.f32 %v2930, 1.0
      %v2965 = vadd.f32 %v2932, 1.0
      %v2966 = vadd.f32 %v2934, 1.0
      %v2967 = vrcp.pop %v2935
      %v2968 = vmul.f32 1.0, %v2967
      %v2969 = vrcp.pop %v2936
      %v2970 = vmul.f32 1.0, %v2969
      %v2971 = vrcp.pop %v2937
      %v2972 = vmul.f32 1.0, %v2971
      %v2973 = vrcp.pop %v2938
      %v2974 = vmul.f32 1.0, %v2973
      %v2975 = vrcp.pop %v2939
      %v2976 = vmul.f32 1.0, %v2975
      %v2977 = vrcp.pop %v2940
      %v2978 = vmul.f32 1.0, %v2977
      %v2979 = vrcp.pop %v2941
      %v2980 = vmul.f32 1.0, %v2979
      %v2981 = vrcp.pop %v2942
      %v2982 = vmul.f32 1.0, %v2981
      %v2983 = vrcp.pop %v2943
      %v2984 = vmul.f32 1.0, %v2983
      %v2985 = vrcp.pop %v2944
      %v2986 = vmul.f32 1.0, %v2985
      %v2987 = vrcp.pop %v2945
      %v2988 = vmul.f32 1.0, %v2987
      %v2989 = vrcp.pop %v2946
      %v2990 = vmul.f32 1.0, %v2989
      %v2991 = vrcp.pop %v2947
      %v2992 = vmul.f32 1.0, %v2991
      %v2993 = vrcp.pop %v2948
      %v2994 = vmul.f32 1.0, %v2993
      %v2995 = vrcp.pop %v2949
      %v2996 = vmul.f32 1.0, %v2995
      %v2997 = vrcp.pop %v2950
      %v2998 = vmul.f32 1.0, %v2997
      %v2999 = vrcp.pop %v2951
      %v3000 = vmul.f32 1.0, %v2999
      %v3001 = vrcp.pop %v2952
      %v3002 = vmul.f32 1.0, %v3001
      %v3003 = vrcp.pop %v2953
      %v3004 = vmul.f32 1.0, %v3003
      %v3005 = vrcp.pop %v2954
      %v3006 = vmul.f32 1.0, %v3005
      %v3007 = vrcp.pop %v2955
      %v3008 = vmul.f32 1.0, %v3007
      %v3009 = vrcp.pop %v2956
      %v3010 = vmul.f32 1.0, %v3009
      %v3011 = vrcp.pop %v2957
      %v3012 = vmul.f32 1.0, %v3011
      %v3013 = vrcp.pop %v2958
      %v3014 = vmul.f32 1.0, %v3013
      %v3015 = vrcp.pop %v2959
      %v3016 = vmul.f32 1.0, %v3015
      %v3017 = vrcp.pop %v2960
      %v3018 = vmul.f32 1.0, %v3017
      %v3019 = vrcp.pop %v2961
      %v3020 = vmul.f32 1.0, %v3019
      %v3021 = vrcp.pop %v2962
      %v3022 = vmul.f32 1.0, %v3021
      %v3023 = vrcp.pop %v2963
      %v3024 = vmul.f32 1.0, %v3023
      %v3025 = vrcp.pop %v2964
      %v3026 = vmul.f32 1.0, %v3025
      %v3027 = vrcp.pop %v2965
      %v3028 = vmul.f32 1.0, %v3027
      %v3029 = vrcp.pop %v2966
      %v3030 = vmul.f32 1.0, %v3029
      %v3031 = vmul.f32 %v2968, %v2683
      %v3032 = vmul.f32 %v2970, %v2684
      %v3033 = vmul.f32 %v2972, %v2685
      %v3034 = vmul.f32 %v2974, %v2686
      %v3035 = vmul.f32 %v2976, %v2687
      %v3036 = vmul.f32 %v2978, %v2688
      %v3037 = vmul.f32 %v2980, %v2689
      %v3038 = vmul.f32 %v2982, %v2690
      %v3039 = vmul.f32 %v2984, %v2691
      %v3040 = vmul.f32 %v2986, %v2692
      %v3041 = vmul.f32 %v2988, %v2693
      %v3042 = vmul.f32 %v2990, %v2694
      %v3043 = vmul.f32 %v2992, %v2695
      %v3044 = vmul.f32 %v2994, %v2696
      %v3045 = vmul.f32 %v2996, %v2697
      %v3046 = vmul.f32 %v2998, %v2698
      %v3047 = vmul.f32 %v3000, %v2699
      %v3048 = vmul.f32 %v3002, %v2700
      %v3049 = vmul.f32 %v3004, %v2701
      %v3050 = vmul.f32 %v3006, %v2702
      %v3051 = vmul.f32 %v3008, %v2703
      %v3052 = vmul.f32 %v3010, %v2704
      %v3053 = vmul.f32 %v3012, %v2705
      %v3054 = vmul.f32 %v3014, %v2706
      %v3055 = vmul.f32 %v3016, %v2707
      %v3056 = vmul.f32 %v3018, %v2708
      %v3057 = vmul.f32 %v3020, %v2709
      %v3058 = vmul.f32 %v3022, %v2710
      %v3059 = vmul.f32 %v3024, %v2711
      %v3060 = vmul.f32 %v3026, %v2712
      %v3061 = vmul.f32 %v3028, %v2713
      %v3062 = vmul.f32 %v3030, %v2714
      %v3063 = vpack.c.bf16 %v3032, %v3031
      %v3064 = vpack.c.bf16 %v3034, %v3033
      %v3065 = vpack.c.bf16 %v3036, %v3035
      %v3066 = vpack.c.bf16 %v3038, %v3037
      %v3067 = vpack.c.bf16 %v3040, %v3039
      %v3068 = vpack.c.bf16 %v3042, %v3041
      %v3069 = vpack.c.bf16 %v3044, %v3043
      %v3070 = vpack.c.bf16 %v3046, %v3045
      %v3071 = vpack.c.bf16 %v3048, %v3047
      %v3072 = vpack.c.bf16 %v3050, %v3049
      %v3073 = vpack.c.bf16 %v3052, %v3051
      %v3074 = vpack.c.bf16 %v3054, %v3053
      %v3075 = vpack.c.bf16 %v3056, %v3055
      %v3076 = vpack.c.bf16 %v3058, %v3057
      %v3077 = vpack.c.bf16 %v3060, %v3059
      %v3078 = vpack.c.bf16 %v3062, %v3061
      %v3079 = vld [vmem:[%s4] sm:$0xf]
      %v3080 = vld [vmem:[%s4 + $0x4] sm:$0xf]
      %v3083 = vunpack.c.l.b16 %v3079
      %v3084 = vunpack.c.l.b16 %v3080
      %v3085 = vpack.c.b16 %v3084, %v3083
      %v3088 = vsel %vm720, %v3063, 0
      %v3091 = vsel %vm720, %v3064, 0
      %v3094 = vsel %vm720, %v3065, 0
      %v3097 = vsel %vm720, %v3066, 0
      %v3100 = vsel %vm720, %v3067, 0
      %v3103 = vsel %vm720, %v3068, 0
      %v3106 = vsel %vm720, %v3069, 0
      %v3109 = vsel %vm720, %v3070, 0
      %v3112 = vsel %vm720, %v3071, 0
      %v3115 = vsel %vm720, %v3072, 0
      %v3118 = vsel %vm720, %v3073, 0
      %v3121 = vsel %vm720, %v3074, 0
      %v3124 = vsel %vm720, %v3075, 0
      %v3127 = vsel %vm720, %v3076, 0
      %v3130 = vsel %vm720, %v3077, 0
      %v3133 = vsel %vm720, %v3078, 0
      %3135 = vmatprep.subr.bf16.mxu0 0
      %3136 = vmatpush1.bf16.msra.mxu0 0
      %3137 = vmatprep.subr.bf16.mxu0 0
      %3138 = vmatpush1.bf16.msra.mxu0 0
      %3139 = vmatprep.subr.bf16.mxu0 0
      %3140 = vmatpush1.bf16.msra.mxu0 0
      %3141 = vmatprep.subr.bf16.mxu0 0
      %3142 = vmatpush1.bf16.msra.mxu0 0
      %3143 = vmatprep.subr.bf16.mxu0 0
      %3144 = vmatpush1.bf16.msra.mxu0 0
      %3145 = vmatprep.subr.bf16.mxu0 0
      %3146 = vmatpush1.bf16.msra.mxu0 0
      %3147 = vmatprep.subr.bf16.mxu0 0
      %3148 = vmatpush1.bf16.msra.mxu0 0
      %3149 = vmatprep.subr.bf16.mxu0 0
      %3150 = vmatpush1.bf16.msra.mxu0 %v3085
      %3151 = vmatprep.subr.bf16.mxu0 0
      %3152 = vmatpush2.bf16.msra.mxu0 0
      %3153 = vmatprep.subr.bf16.mxu0 0
      %3154 = vmatpush2.bf16.msra.mxu0 0
      %3155 = vmatprep.subr.bf16.mxu0 0
      %3156 = vmatpush2.bf16.msra.mxu0 0
      %3157 = vmatprep.subr.bf16.mxu0 0
      %3158 = vmatpush2.bf16.msra.mxu0 0
      %3159 = vmatprep.subr.bf16.mxu0 0
      %3160 = vmatpush2.bf16.msra.mxu0 0
      %3161 = vmatprep.subr.bf16.mxu0 0
      %3162 = vmatpush2.bf16.msra.mxu0 0
      %3163 = vmatprep.subr.bf16.mxu0 0
      %3164 = vmatpush2.bf16.msra.mxu0 0
      %3165 = vmatprep.subr.bf16.mxu0 0
      %3166 = vmatpush2.bf16.msra.mxu0 0
      %3167 = vmatprep.mubr.bf16.mxu0 0
      %3168 = vmatmul.mubr.bf16.gmra.mxu0 %v3088
      %v3169 = vpop.f32.mrf.mxu0
      %v3170 = vadd.f32 0.0, %v3169
      %v3171 = vpop.f32.mrf.mxu0
      %v3172 = vpop.f32.mrf.mxu0
      %v3173 = vadd.f32 0.0, %v3172
      %v3174 = vpop.f32.mrf.mxu0
      %3175 = vmatprep.mubr.bf16.mxu0 0
      %3176 = vmatmul.mubr.bf16.gmra.mxu0 %v3091
      %v3177 = vpop.f32.mrf.mxu0
      %v3178 = vadd.f32 0.0, %v3177
      %v3179 = vpop.f32.mrf.mxu0
      %v3180 = vpop.f32.mrf.mxu0
      %v3181 = vadd.f32 0.0, %v3180
      %v3182 = vpop.f32.mrf.mxu0
      %3183 = vmatprep.mubr.bf16.mxu0 0
      %3184 = vmatmul.mubr.bf16.gmra.mxu0 %v3094
      %v3185 = vpop.f32.mrf.mxu0
      %v3186 = vadd.f32 0.0, %v3185
      %v3187 = vpop.f32.mrf.mxu0
      %v3188 = vpop.f32.mrf.mxu0
      %v3189 = vadd.f32 0.0, %v3188
      %v3190 = vpop.f32.mrf.mxu0
      %3191 = vmatprep.mubr.bf16.mxu0 0
      %3192 = vmatmul.mubr.bf16.gmra.mxu0 %v3097
      %v3193 = vpop.f32.mrf.mxu0
      %v3194 = vadd.f32 0.0, %v3193
      %v3195 = vpop.f32.mrf.mxu0
      %v3196 = vpop.f32.mrf.mxu0
      %v3197 = vadd.f32 0.0, %v3196
      %v3198 = vpop.f32.mrf.mxu0
      %3199 = vmatprep.mubr.bf16.mxu0 0
      %3200 = vmatmul.mubr.bf16.gmra.mxu0 %v3100
      %v3201 = vpop.f32.mrf.mxu0
      %v3202 = vadd.f32 0.0, %v3201
      %v3203 = vpop.f32.mrf.mxu0
      %v3204 = vpop.f32.mrf.mxu0
      %v3205 = vadd.f32 0.0, %v3204
      %v3206 = vpop.f32.mrf.mxu0
      %3207 = vmatprep.mubr.bf16.mxu0 0
      %3208 = vmatmul.mubr.bf16.gmra.mxu0 %v3103
      %v3209 = vpop.f32.mrf.mxu0
      %v3210 = vadd.f32 0.0, %v3209
      %v3211 = vpop.f32.mrf.mxu0
      %v3212 = vpop.f32.mrf.mxu0
      %v3213 = vadd.f32 0.0, %v3212
      %v3214 = vpop.f32.mrf.mxu0
      %3215 = vmatprep.mubr.bf16.mxu0 0
      %3216 = vmatmul.mubr.bf16.gmra.mxu0 %v3106
      %v3217 = vpop.f32.mrf.mxu0
      %v3218 = vadd.f32 0.0, %v3217
      %v3219 = vpop.f32.mrf.mxu0
      %v3220 = vpop.f32.mrf.mxu0
      %v3221 = vadd.f32 0.0, %v3220
      %v3222 = vpop.f32.mrf.mxu0
      %3223 = vmatprep.mubr.bf16.mxu0 0
      %3224 = vmatmul.mubr.bf16.gmra.mxu0 %v3109
      %v3225 = vpop.f32.mrf.mxu0
      %v3226 = vadd.f32 0.0, %v3225
      %v3227 = vpop.f32.mrf.mxu0
      %v3228 = vpop.f32.mrf.mxu0
      %v3229 = vadd.f32 0.0, %v3228
      %v3230 = vpop.f32.mrf.mxu0
      %3231 = vmatprep.mubr.bf16.mxu0 0
      %3232 = vmatmul.mubr.bf16.gmra.mxu0 %v3112
      %v3233 = vpop.f32.mrf.mxu0
      %v3234 = vadd.f32 0.0, %v3233
      %v3235 = vpop.f32.mrf.mxu0
      %v3236 = vpop.f32.mrf.mxu0
      %v3237 = vadd.f32 0.0, %v3236
      %v3238 = vpop.f32.mrf.mxu0
      %3239 = vmatprep.mubr.bf16.mxu0 0
      %3240 = vmatmul.mubr.bf16.gmra.mxu0 %v3115
      %v3241 = vpop.f32.mrf.mxu0
      %v3242 = vadd.f32 0.0, %v3241
      %v3243 = vpop.f32.mrf.mxu0
      %v3244 = vpop.f32.mrf.mxu0
      %v3245 = vadd.f32 0.0, %v3244
      %v3246 = vpop.f32.mrf.mxu0
      %3247 = vmatprep.mubr.bf16.mxu0 0
      %3248 = vmatmul.mubr.bf16.gmra.mxu0 %v3118
      %v3249 = vpop.f32.mrf.mxu0
      %v3250 = vadd.f32 0.0, %v3249
      %v3251 = vpop.f32.mrf.mxu0
      %v3252 = vpop.f32.mrf.mxu0
      %v3253 = vadd.f32 0.0, %v3252
      %v3254 = vpop.f32.mrf.mxu0
      %3255 = vmatprep.mubr.bf16.mxu0 0
      %3256 = vmatmul.mubr.bf16.gmra.mxu0 %v3121
      %v3257 = vpop.f32.mrf.mxu0
      %v3258 = vadd.f32 0.0, %v3257
      %v3259 = vpop.f32.mrf.mxu0
      %v3260 = vpop.f32.mrf.mxu0
      %v3261 = vadd.f32 0.0, %v3260
      %v3262 = vpop.f32.mrf.mxu0
      %3263 = vmatprep.mubr.bf16.mxu0 0
      %3264 = vmatmul.mubr.bf16.gmra.mxu0 %v3124
      %v3265 = vpop.f32.mrf.mxu0
      %v3266 = vadd.f32 0.0, %v3265
      %v3267 = vpop.f32.mrf.mxu0
      %v3268 = vpop.f32.mrf.mxu0
      %v3269 = vadd.f32 0.0, %v3268
      %v3270 = vpop.f32.mrf.mxu0
      %3271 = vmatprep.mubr.bf16.mxu0 0
      %3272 = vmatmul.mubr.bf16.gmra.mxu0 %v3127
      %v3273 = vpop.f32.mrf.mxu0
      %v3274 = vadd.f32 0.0, %v3273
      %v3275 = vpop.f32.mrf.mxu0
      %v3276 = vpop.f32.mrf.mxu0
      %v3277 = vadd.f32 0.0, %v3276
      %v3278 = vpop.f32.mrf.mxu0
      %3279 = vmatprep.mubr.bf16.mxu0 0
      %3280 = vmatmul.mubr.bf16.gmra.mxu0 %v3130
      %v3281 = vpop.f32.mrf.mxu0
      %v3282 = vadd.f32 0.0, %v3281
      %v3283 = vpop.f32.mrf.mxu0
      %v3284 = vpop.f32.mrf.mxu0
      %v3285 = vadd.f32 0.0, %v3284
      %v3286 = vpop.f32.mrf.mxu0
      %3287 = vmatprep.mubr.bf16.mxu0 0
      %3288 = vmatmul.mubr.bf16.gmra.mxu0 %v3133
      %v3289 = vpop.f32.mrf.mxu0
      %v3290 = vadd.f32 0.0, %v3289
      %v3291 = vpop.f32.mrf.mxu0
      %v3292 = vpop.f32.mrf.mxu0
      %v3293 = vadd.f32 0.0, %v3292
      %v3294 = vpop.f32.mrf.mxu0
      %3295 = vdwg.mxu0
      %v3296 = vlaneseq
      %v3297 = vshrl.u32 %v3296, 7
      %v3298 = vsub.s32 0, %v3297
      %v3299 = vrot.slane %v389, %v3298
      %v3300 = vmul.f32 %v3170, %v3299
      %v3301 = vmul.f32 %v3173, %v3299
      %v3302 = vmul.f32 %v3178, %v3299
      %v3303 = vmul.f32 %v3181, %v3299
      %v3304 = vmul.f32 %v3186, %v3299
      %v3305 = vmul.f32 %v3189, %v3299
      %v3306 = vmul.f32 %v3194, %v3299
      %v3307 = vmul.f32 %v3197, %v3299
      %v3308 = vmul.f32 %v3202, %v3299
      %v3309 = vmul.f32 %v3205, %v3299
      %v3310 = vmul.f32 %v3210, %v3299
      %v3311 = vmul.f32 %v3213, %v3299
      %v3312 = vmul.f32 %v3218, %v3299
      %v3313 = vmul.f32 %v3221, %v3299
      %v3314 = vmul.f32 %v3226, %v3299
      %v3315 = vmul.f32 %v3229, %v3299
      %v3316 = vmul.f32 %v3234, %v3299
      %v3317 = vmul.f32 %v3237, %v3299
      %v3318 = vmul.f32 %v3242, %v3299
      %v3319 = vmul.f32 %v3245, %v3299
      %v3320 = vmul.f32 %v3250, %v3299
      %v3321 = vmul.f32 %v3253, %v3299
      %v3322 = vmul.f32 %v3258, %v3299
      %v3323 = vmul.f32 %v3261, %v3299
      %v3324 = vmul.f32 %v3266, %v3299
      %v3325 = vmul.f32 %v3269, %v3299
      %v3326 = vmul.f32 %v3274, %v3299
      %v3327 = vmul.f32 %v3277, %v3299
      %v3328 = vmul.f32 %v3282, %v3299
      %v3329 = vmul.f32 %v3285, %v3299
      %v3330 = vmul.f32 %v3290, %v3299
      %v3331 = vmul.f32 %v3293, %v3299
      %v3332 = vlaneseq
      %v3333 = vshrl.u32 %v3332, 7
      %v3334 = vsub.s32 1, %v3333
      %v3335 = vrot.slane %v389, %v3334
      %v3336 = vadd.f32 %v3300, %v3335
      %v3337 = vadd.f32 %v3301, %v3335
      %v3338 = vadd.f32 %v3302, %v3335
      %v3339 = vadd.f32 %v3303, %v3335
      %v3340 = vadd.f32 %v3304, %v3335
      %v3341 = vadd.f32 %v3305, %v3335
      %v3342 = vadd.f32 %v3306, %v3335
      %v3343 = vadd.f32 %v3307, %v3335
      %v3344 = vadd.f32 %v3308, %v3335
      %v3345 = vadd.f32 %v3309, %v3335
      %v3346 = vadd.f32 %v3310, %v3335
      %v3347 = vadd.f32 %v3311, %v3335
      %v3348 = vadd.f32 %v3312, %v3335
      %v3349 = vadd.f32 %v3313, %v3335
      %v3350 = vadd.f32 %v3314, %v3335
      %v3351 = vadd.f32 %v3315, %v3335
      %v3352 = vadd.f32 %v3316, %v3335
      %v3353 = vadd.f32 %v3317, %v3335
      %v3354 = vadd.f32 %v3318, %v3335
      %v3355 = vadd.f32 %v3319, %v3335
      %v3356 = vadd.f32 %v3320, %v3335
      %v3357 = vadd.f32 %v3321, %v3335
      %v3358 = vadd.f32 %v3322, %v3335
      %v3359 = vadd.f32 %v3323, %v3335
      %v3360 = vadd.f32 %v3324, %v3335
      %v3361 = vadd.f32 %v3325, %v3335
      %v3362 = vadd.f32 %v3326, %v3335
      %v3363 = vadd.f32 %v3327, %v3335
      %v3364 = vadd.f32 %v3328, %v3335
      %v3365 = vadd.f32 %v3329, %v3335
      %v3366 = vadd.f32 %v3330, %v3335
      %v3367 = vadd.f32 %v3331, %v3335
      %v3368 = vadd.f32 %v3336, %v339
      %v3369 = vadd.f32 %v3337, %v340
      %v3370 = vadd.f32 %v3338, %v341
      %v3371 = vadd.f32 %v3339, %v342
      %v3372 = vadd.f32 %v3340, %v343
      %v3373 = vadd.f32 %v3341, %v344
      %v3374 = vadd.f32 %v3342, %v345
      %v3375 = vadd.f32 %v3343, %v346
      %v3376 = vadd.f32 %v3344, %v347
      %v3377 = vadd.f32 %v3345, %v348
      %v3378 = vadd.f32 %v3346, %v349
      %v3379 = vadd.f32 %v3347, %v350
      %v3380 = vadd.f32 %v3348, %v351
      %v3381 = vadd.f32 %v3349, %v352
      %v3382 = vadd.f32 %v3350, %v353
      %v3383 = vadd.f32 %v3351, %v354
      %v3384 = vadd.f32 %v3352, %v371
      %v3385 = vadd.f32 %v3353, %v372
      %v3386 = vadd.f32 %v3354, %v373
      %v3387 = vadd.f32 %v3355, %v374
      %v3388 = vadd.f32 %v3356, %v375
      %v3389 = vadd.f32 %v3357, %v376
      %v3390 = vadd.f32 %v3358, %v377
      %v3391 = vadd.f32 %v3359, %v378
      %v3392 = vadd.f32 %v3360, %v379
      %v3393 = vadd.f32 %v3361, %v380
      %v3394 = vadd.f32 %v3362, %v381
      %v3395 = vadd.f32 %v3363, %v382
      %v3396 = vadd.f32 %v3364, %v383
      %v3397 = vadd.f32 %v3365, %v384
      %v3398 = vadd.f32 %v3366, %v385
      %v3399 = vadd.f32 %v3367, %v386
      %v3400 = vsel %vm438, %v3368, 0.0
      %v3401 = vsel %vm438, %v3369, 0.0
      %v3402 = vadd.f32 %v3400, %v3401
      %v3403 = vsel %vm438, %v3370, 0.0
      %v3404 = vadd.f32 %v3402, %v3403
      %v3405 = vsel %vm438, %v3371, 0.0
      %v3406 = vadd.f32 %v3404, %v3405
      %v3407 = vsel %vm438, %v3372, 0.0
      %v3408 = vadd.f32 %v3406, %v3407
      %v3409 = vsel %vm438, %v3373, 0.0
      %v3410 = vadd.f32 %v3408, %v3409
      %v3411 = vsel %vm438, %v3374, 0.0
      %v3412 = vadd.f32 %v3410, %v3411
      %v3413 = vsel %vm438, %v3375, 0.0
      %v3414 = vadd.f32 %v3412, %v3413
      %v3415 = vsel %vm438, %v3376, 0.0
      %v3416 = vadd.f32 %v3414, %v3415
      %v3417 = vsel %vm438, %v3377, 0.0
      %v3418 = vadd.f32 %v3416, %v3417
      %v3419 = vsel %vm438, %v3378, 0.0
      %v3420 = vadd.f32 %v3418, %v3419
      %v3421 = vsel %vm438, %v3379, 0.0
      %v3422 = vadd.f32 %v3420, %v3421
      %v3423 = vsel %vm438, %v3380, 0.0
      %v3424 = vadd.f32 %v3422, %v3423
      %v3425 = vsel %vm438, %v3381, 0.0
      %v3426 = vadd.f32 %v3424, %v3425
      %v3427 = vsel %vm438, %v3382, 0.0
      %v3428 = vadd.f32 %v3426, %v3427
      %v3429 = vsel %vm438, %v3383, 0.0
      %v3430 = vadd.f32 %v3428, %v3429
      %v3431 = vsel %vm438, %v3384, 0.0
      %v3432 = vadd.f32 %v3430, %v3431
      %v3433 = vsel %vm438, %v3385, 0.0
      %v3434 = vadd.f32 %v3432, %v3433
      %v3435 = vsel %vm438, %v3386, 0.0
      %v3436 = vadd.f32 %v3434, %v3435
      %v3437 = vsel %vm438, %v3387, 0.0
      %v3438 = vadd.f32 %v3436, %v3437
      %v3439 = vsel %vm438, %v3388, 0.0
      %v3440 = vadd.f32 %v3438, %v3439
      %v3441 = vsel %vm438, %v3389, 0.0
      %v3442 = vadd.f32 %v3440, %v3441
      %v3443 = vsel %vm438, %v3390, 0.0
      %v3444 = vadd.f32 %v3442, %v3443
      %v3445 = vsel %vm438, %v3391, 0.0
      %v3446 = vadd.f32 %v3444, %v3445
      %v3447 = vsel %vm438, %v3392, 0.0
      %v3448 = vadd.f32 %v3446, %v3447
      %v3449 = vsel %vm438, %v3393, 0.0
      %v3450 = vadd.f32 %v3448, %v3449
      %v3451 = vsel %vm438, %v3394, 0.0
      %v3452 = vadd.f32 %v3450, %v3451
      %v3453 = vsel %vm438, %v3395, 0.0
      %v3454 = vadd.f32 %v3452, %v3453
      %v3455 = vsel %vm438, %v3396, 0.0
      %v3456 = vadd.f32 %v3454, %v3455
      %v3457 = vsel %vm438, %v3397, 0.0
      %v3458 = vadd.f32 %v3456, %v3457
      %v3459 = vsel %vm438, %v3398, 0.0
      %v3460 = vadd.f32 %v3458, %v3459
      %v3461 = vsel %vm438, %v3399, 0.0
      %v3462 = vadd.f32 %v3460, %v3461
      %v3463 = vrot.slane %v3462, 4
      %v3464 = vadd.f32 %v3462, %v3463
      %v3465 = vrot.slane %v3464, 2
      %v3466 = vadd.f32 %v3464, %v3465
      %v3467 = vrot.slane %v3466, 1
      %v3468 = vadd.f32 %v3466, %v3467
      %v3469 = vmul.f32 %v3468, %v790
      %v3470 = vsel %vm438, %v3469, 0.0
      %3471 = vadd.xlane.f32.xlu0 %v3470
      %v3472 = vpop.xlane.xlu0 %3471
      %v3473 = vrcp.pop 64.0
      %v3474 = vmul.f32 %v3472, %v3473
      %v3475 = vsub.f32 %v3469, %v3474
      %v3476 = vmul.f32 %v3475, %v3475
      %v3477 = vsel %vm438, %v3476, 0.0
      %3478 = vadd.xlane.f32.xlu0 %v3477
      %v3479 = vpop.xlane.xlu0 %3478
      %v3480 = vmul.f32 %v3479, %v3473
      %v3481 = vadd.f32 %v3480, 1e-06
      %v3482 = vrsqrt.pop %v3481
      %v3483 = vmul.f32 %v3475, %v3482
      %v3484 = vmul.f32 %v3483, %v389
      %v3486 = vrot.slane %v389, 1
      %v3488 = vadd.f32 %v3484, %v3486
      %v3489 = vlaneseq
      %v3490 = vshrl.u32 %v3489, 7
      %v3491 = vsub.s32 2, %v3490
      %v3492 = vrot.slane %v3488, %v3491
      %v3493 = vadd.f32 %v3492, %v3368
      %v3494 = vadd.f32 %v3492, %v3369
      %v3495 = vadd.f32 %v3492, %v3370
      %v3496 = vadd.f32 %v3492, %v3371
      %v3497 = vadd.f32 %v3492, %v3372
      %v3498 = vadd.f32 %v3492, %v3373
      %v3499 = vadd.f32 %v3492, %v3374
      %v3500 = vadd.f32 %v3492, %v3375
      %v3501 = vadd.f32 %v3492, %v3376
      %v3502 = vadd.f32 %v3492, %v3377
      %v3503 = vadd.f32 %v3492, %v3378
      %v3504 = vadd.f32 %v3492, %v3379
      %v3505 = vadd.f32 %v3492, %v3380
      %v3506 = vadd.f32 %v3492, %v3381
      %v3507 = vadd.f32 %v3492, %v3382
      %v3508 = vadd.f32 %v3492, %v3383
      %v3509 = vadd.f32 %v3492, %v3384
      %v3510 = vadd.f32 %v3492, %v3385
      %v3511 = vadd.f32 %v3492, %v3386
      %v3512 = vadd.f32 %v3492, %v3387
      %v3513 = vadd.f32 %v3492, %v3388
      %v3514 = vadd.f32 %v3492, %v3389
      %v3515 = vadd.f32 %v3492, %v3390
      %v3516 = vadd.f32 %v3492, %v3391
      %v3517 = vadd.f32 %v3492, %v3392
      %v3518 = vadd.f32 %v3492, %v3393
      %v3519 = vadd.f32 %v3492, %v3394
      %v3520 = vadd.f32 %v3492, %v3395
      %v3521 = vadd.f32 %v3492, %v3396
      %v3522 = vadd.f32 %v3492, %v3397
      %v3523 = vadd.f32 %v3492, %v3398
      %v3524 = vadd.f32 %v3492, %v3399
      %v3525 = vxor.u32 %v3493, 2147483648
      %v3526 = vxor.u32 %v3494, 2147483648
      %v3527 = vxor.u32 %v3495, 2147483648
      %v3528 = vxor.u32 %v3496, 2147483648
      %v3529 = vxor.u32 %v3497, 2147483648
      %v3530 = vxor.u32 %v3498, 2147483648
      %v3531 = vxor.u32 %v3499, 2147483648
      %v3532 = vxor.u32 %v3500, 2147483648
      %v3533 = vxor.u32 %v3501, 2147483648
      %v3534 = vxor.u32 %v3502, 2147483648
      %v3535 = vxor.u32 %v3503, 2147483648
      %v3536 = vxor.u32 %v3504, 2147483648
      %v3537 = vxor.u32 %v3505, 2147483648
      %v3538 = vxor.u32 %v3506, 2147483648
      %v3539 = vxor.u32 %v3507, 2147483648
      %v3540 = vxor.u32 %v3508, 2147483648
      %v3541 = vxor.u32 %v3509, 2147483648
      %v3542 = vxor.u32 %v3510, 2147483648
      %v3543 = vxor.u32 %v3511, 2147483648
      %v3544 = vxor.u32 %v3512, 2147483648
      %v3545 = vxor.u32 %v3513, 2147483648
      %v3546 = vxor.u32 %v3514, 2147483648
      %v3547 = vxor.u32 %v3515, 2147483648
      %v3548 = vxor.u32 %v3516, 2147483648
      %v3549 = vxor.u32 %v3517, 2147483648
      %v3550 = vxor.u32 %v3518, 2147483648
      %v3551 = vxor.u32 %v3519, 2147483648
      %v3552 = vxor.u32 %v3520, 2147483648
      %v3553 = vxor.u32 %v3521, 2147483648
      %v3554 = vxor.u32 %v3522, 2147483648
      %v3555 = vxor.u32 %v3523, 2147483648
      %v3556 = vxor.u32 %v3524, 2147483648
      %v3557 = vmul.f32 %v3525, 1.442695
      %v3558 = vpow.pop %v3557
      %v3559 = vmul.f32 %v3526, 1.442695
      %v3560 = vpow.pop %v3559
      %v3561 = vmul.f32 %v3527, 1.442695
      %v3562 = vpow.pop %v3561
      %v3563 = vmul.f32 %v3528, 1.442695
      %v3564 = vpow.pop %v3563
      %v3565 = vmul.f32 %v3529, 1.442695
      %v3566 = vpow.pop %v3565
      %v3567 = vmul.f32 %v3530, 1.442695
      %v3568 = vpow.pop %v3567
      %v3569 = vmul.f32 %v3531, 1.442695
      %v3570 = vpow.pop %v3569
      %v3571 = vmul.f32 %v3532, 1.442695
      %v3572 = vpow.pop %v3571
      %v3573 = vmul.f32 %v3533, 1.442695
      %v3574 = vpow.pop %v3573
      %v3575 = vmul.f32 %v3534, 1.442695
      %v3576 = vpow.pop %v3575
      %v3577 = vmul.f32 %v3535, 1.442695
      %v3578 = vpow.pop %v3577
      %v3579 = vmul.f32 %v3536, 1.442695
      %v3580 = vpow.pop %v3579
      %v3581 = vmul.f32 %v3537, 1.442695
      %v3582 = vpow.pop %v3581
      %v3583 = vmul.f32 %v3538, 1.442695
      %v3584 = vpow.pop %v3583
      %v3585 = vmul.f32 %v3539, 1.442695
      %v3586 = vpow.pop %v3585
      %v3587 = vmul.f32 %v3540, 1.442695
      %v3588 = vpow.pop %v3587
      %v3589 = vmul.f32 %v3541, 1.442695
      %v3590 = vpow.pop %v3589
      %v3591 = vmul.f32 %v3542, 1.442695
      %v3592 = vpow.pop %v3591
      %v3593 = vmul.f32 %v3543, 1.442695
      %v3594 = vpow.pop %v3593
      %v3595 = vmul.f32 %v3544, 1.442695
      %v3596 = vpow.pop %v3595
      %v3597 = vmul.f32 %v3545, 1.442695
      %v3598 = vpow.pop %v3597
      %v3599 = vmul.f32 %v3546, 1.442695
      %v3600 = vpow.pop %v3599
      %v3601 = vmul.f32 %v3547, 1.442695
      %v3602 = vpow.pop %v3601
      %v3603 = vmul.f32 %v3548, 1.442695
      %v3604 = vpow.pop %v3603
      %v3605 = vmul.f32 %v3549, 1.442695
      %v3606 = vpow.pop %v3605
      %v3607 = vmul.f32 %v3550, 1.442695
      %v3608 = vpow.pop %v3607
      %v3609 = vmul.f32 %v3551, 1.442695
      %v3610 = vpow.pop %v3609
      %v3611 = vmul.f32 %v3552, 1.442695
      %v3612 = vpow.pop %v3611
      %v3613 = vmul.f32 %v3553, 1.442695
      %v3614 = vpow.pop %v3613
      %v3615 = vmul.f32 %v3554, 1.442695
      %v3616 = vpow.pop %v3615
      %v3617 = vmul.f32 %v3555, 1.442695
      %v3618 = vpow.pop %v3617
      %v3619 = vmul.f32 %v3556, 1.442695
      %v3620 = vpow.pop %v3619
      %v3621 = vadd.f32 %v3558, 1.0
      %v3622 = vadd.f32 %v3560, 1.0
      %v3623 = vadd.f32 %v3562, 1.0
      %v3624 = vadd.f32 %v3564, 1.0
      %v3625 = vadd.f32 %v3566, 1.0
      %v3626 = vadd.f32 %v3568, 1.0
      %v3627 = vadd.f32 %v3570, 1.0
      %v3628 = vadd.f32 %v3572, 1.0
      %v3629 = vadd.f32 %v3574, 1.0
      %v3630 = vadd.f32 %v3576, 1.0
      %v3631 = vadd.f32 %v3578, 1.0
      %v3632 = vadd.f32 %v3580, 1.0
      %v3633 = vadd.f32 %v3582, 1.0
      %v3634 = vadd.f32 %v3584, 1.0
      %v3635 = vadd.f32 %v3586, 1.0
      %v3636 = vadd.f32 %v3588, 1.0
      %v3637 = vadd.f32 %v3590, 1.0
      %v3638 = vadd.f32 %v3592, 1.0
      %v3639 = vadd.f32 %v3594, 1.0
      %v3640 = vadd.f32 %v3596, 1.0
      %v3641 = vadd.f32 %v3598, 1.0
      %v3642 = vadd.f32 %v3600, 1.0
      %v3643 = vadd.f32 %v3602, 1.0
      %v3644 = vadd.f32 %v3604, 1.0
      %v3645 = vadd.f32 %v3606, 1.0
      %v3646 = vadd.f32 %v3608, 1.0
      %v3647 = vadd.f32 %v3610, 1.0
      %v3648 = vadd.f32 %v3612, 1.0
      %v3649 = vadd.f32 %v3614, 1.0
      %v3650 = vadd.f32 %v3616, 1.0
      %v3651 = vadd.f32 %v3618, 1.0
      %v3652 = vadd.f32 %v3620, 1.0
      %v3653 = vrcp.pop %v3621
      %v3654 = vmul.f32 1.0, %v3653
      %v3655 = vrcp.pop %v3622
      %v3656 = vmul.f32 1.0, %v3655
      %v3657 = vrcp.pop %v3623
      %v3658 = vmul.f32 1.0, %v3657
      %v3659 = vrcp.pop %v3624
      %v3660 = vmul.f32 1.0, %v3659
      %v3661 = vrcp.pop %v3625
      %v3662 = vmul.f32 1.0, %v3661
      %v3663 = vrcp.pop %v3626
      %v3664 = vmul.f32 1.0, %v3663
      %v3665 = vrcp.pop %v3627
      %v3666 = vmul.f32 1.0, %v3665
      %v3667 = vrcp.pop %v3628
      %v3668 = vmul.f32 1.0, %v3667
      %v3669 = vrcp.pop %v3629
      %v3670 = vmul.f32 1.0, %v3669
      %v3671 = vrcp.pop %v3630
      %v3672 = vmul.f32 1.0, %v3671
      %v3673 = vrcp.pop %v3631
      %v3674 = vmul.f32 1.0, %v3673
      %v3675 = vrcp.pop %v3632
      %v3676 = vmul.f32 1.0, %v3675
      %v3677 = vrcp.pop %v3633
      %v3678 = vmul.f32 1.0, %v3677
      %v3679 = vrcp.pop %v3634
      %v3680 = vmul.f32 1.0, %v3679
      %v3681 = vrcp.pop %v3635
      %v3682 = vmul.f32 1.0, %v3681
      %v3683 = vrcp.pop %v3636
      %v3684 = vmul.f32 1.0, %v3683
      %v3685 = vrcp.pop %v3637
      %v3686 = vmul.f32 1.0, %v3685
      %v3687 = vrcp.pop %v3638
      %v3688 = vmul.f32 1.0, %v3687
      %v3689 = vrcp.pop %v3639
      %v3690 = vmul.f32 1.0, %v3689
      %v3691 = vrcp.pop %v3640
      %v3692 = vmul.f32 1.0, %v3691
      %v3693 = vrcp.pop %v3641
      %v3694 = vmul.f32 1.0, %v3693
      %v3695 = vrcp.pop %v3642
      %v3696 = vmul.f32 1.0, %v3695
      %v3697 = vrcp.pop %v3643
      %v3698 = vmul.f32 1.0, %v3697
      %v3699 = vrcp.pop %v3644
      %v3700 = vmul.f32 1.0, %v3699
      %v3701 = vrcp.pop %v3645
      %v3702 = vmul.f32 1.0, %v3701
      %v3703 = vrcp.pop %v3646
      %v3704 = vmul.f32 1.0, %v3703
      %v3705 = vrcp.pop %v3647
      %v3706 = vmul.f32 1.0, %v3705
      %v3707 = vrcp.pop %v3648
      %v3708 = vmul.f32 1.0, %v3707
      %v3709 = vrcp.pop %v3649
      %v3710 = vmul.f32 1.0, %v3709
      %v3711 = vrcp.pop %v3650
      %v3712 = vmul.f32 1.0, %v3711
      %v3713 = vrcp.pop %v3651
      %v3714 = vmul.f32 1.0, %v3713
      %v3715 = vrcp.pop %v3652
      %v3716 = vmul.f32 1.0, %v3715
      %v3717 = vmul.f32 %v3654, %v3368
      %v3718 = vmul.f32 %v3656, %v3369
      %v3719 = vmul.f32 %v3658, %v3370
      %v3720 = vmul.f32 %v3660, %v3371
      %v3721 = vmul.f32 %v3662, %v3372
      %v3722 = vmul.f32 %v3664, %v3373
      %v3723 = vmul.f32 %v3666, %v3374
      %v3724 = vmul.f32 %v3668, %v3375
      %v3725 = vmul.f32 %v3670, %v3376
      %v3726 = vmul.f32 %v3672, %v3377
      %v3727 = vmul.f32 %v3674, %v3378
      %v3728 = vmul.f32 %v3676, %v3379
      %v3729 = vmul.f32 %v3678, %v3380
      %v3730 = vmul.f32 %v3680, %v3381
      %v3731 = vmul.f32 %v3682, %v3382
      %v3732 = vmul.f32 %v3684, %v3383
      %v3733 = vmul.f32 %v3686, %v3384
      %v3734 = vmul.f32 %v3688, %v3385
      %v3735 = vmul.f32 %v3690, %v3386
      %v3736 = vmul.f32 %v3692, %v3387
      %v3737 = vmul.f32 %v3694, %v3388
      %v3738 = vmul.f32 %v3696, %v3389
      %v3739 = vmul.f32 %v3698, %v3390
      %v3740 = vmul.f32 %v3700, %v3391
      %v3741 = vmul.f32 %v3702, %v3392
      %v3742 = vmul.f32 %v3704, %v3393
      %v3743 = vmul.f32 %v3706, %v3394
      %v3744 = vmul.f32 %v3708, %v3395
      %v3745 = vmul.f32 %v3710, %v3396
      %v3746 = vmul.f32 %v3712, %v3397
      %v3747 = vmul.f32 %v3714, %v3398
      %v3748 = vmul.f32 %v3716, %v3399
      %3749 = vxpose.xlu0.b32.start [1/16] %v3717, 128
      %3750 = vxpose.xlu0.b32.cont [2/16] %v3718, 128
      %3751 = vxpose.xlu0.b32.cont [3/16] %v3719, 128
      %3752 = vxpose.xlu0.b32.cont [4/16] %v3720, 128
      %3753 = vxpose.xlu0.b32.cont [5/16] %v3721, 128
      %3754 = vxpose.xlu0.b32.cont [6/16] %v3722, 128
      %3755 = vxpose.xlu0.b32.cont [7/16] %v3723, 128
      %3756 = vxpose.xlu0.b32.cont [8/16] %v3724, 128
      %3757 = vxpose.xlu0.b32.cont [9/16] %v3725, 128
      %3758 = vxpose.xlu0.b32.cont [10/16] %v3726, 128
      %3759 = vxpose.xlu0.b32.cont [11/16] %v3727, 128
      %3760 = vxpose.xlu0.b32.cont [12/16] %v3728, 128
      %3761 = vxpose.xlu0.b32.cont [13/16] %v3729, 128
      %3762 = vxpose.xlu0.b32.cont [14/16] %v3730, 128
      %3763 = vxpose.xlu0.b32.cont [15/16] %v3731, 128
      %3764 = vxpose.xlu0.b32.end [16/16] %v3732, 128
      %v3765 = vpop.trf.xlu0
      %v3766 = vpop.trf.xlu0
      %v3767 = vpop.trf.xlu0
      %v3768 = vpop.trf.xlu0
      %v3769 = vpop.trf.xlu0
      %v3770 = vpop.trf.xlu0
      %v3771 = vpop.trf.xlu0
      %v3772 = vpop.trf.xlu0
      %v3773 = vpop.trf.xlu0
      %v3774 = vpop.trf.xlu0
      %v3775 = vpop.trf.xlu0
      %v3776 = vpop.trf.xlu0
      %v3777 = vpop.trf.xlu0
      %v3778 = vpop.trf.xlu0
      %v3779 = vpop.trf.xlu0
      %v3780 = vpop.trf.xlu0
      %3781 = vxpose.xlu0.b32.start [1/16] %v3733, 128
      %3782 = vxpose.xlu0.b32.cont [2/16] %v3734, 128
      %3783 = vxpose.xlu0.b32.cont [3/16] %v3735, 128
      %3784 = vxpose.xlu0.b32.cont [4/16] %v3736, 128
      %3785 = vxpose.xlu0.b32.cont [5/16] %v3737, 128
      %3786 = vxpose.xlu0.b32.cont [6/16] %v3738, 128
      %3787 = vxpose.xlu0.b32.cont [7/16] %v3739, 128
      %3788 = vxpose.xlu0.b32.cont [8/16] %v3740, 128
      %3789 = vxpose.xlu0.b32.cont [9/16] %v3741, 128
      %3790 = vxpose.xlu0.b32.cont [10/16] %v3742, 128
      %3791 = vxpose.xlu0.b32.cont [11/16] %v3743, 128
      %3792 = vxpose.xlu0.b32.cont [12/16] %v3744, 128
      %3793 = vxpose.xlu0.b32.cont [13/16] %v3745, 128
      %3794 = vxpose.xlu0.b32.cont [14/16] %v3746, 128
      %3795 = vxpose.xlu0.b32.cont [15/16] %v3747, 128
      %3796 = vxpose.xlu0.b32.end [16/16] %v3748, 128
      %v3797 = vpop.trf.xlu0
      %v3798 = vpop.trf.xlu0
      %v3799 = vpop.trf.xlu0
      %v3800 = vpop.trf.xlu0
      %v3801 = vpop.trf.xlu0
      %v3802 = vpop.trf.xlu0
      %v3803 = vpop.trf.xlu0
      %v3804 = vpop.trf.xlu0
      %v3805 = vpop.trf.xlu0
      %v3806 = vpop.trf.xlu0
      %v3807 = vpop.trf.xlu0
      %v3808 = vpop.trf.xlu0
      %v3809 = vpop.trf.xlu0
      %v3810 = vpop.trf.xlu0
      %v3811 = vpop.trf.xlu0
      %v3812 = vpop.trf.xlu0
      %3813 = vst [vmem:[%s305] sm:$0xff] %v3765
      %3814 = vst [vmem:[%s305 + $0x8] sm:$0xff] %v3797
      %3815 = vst [vmem:[%s305 + $0x10] sm:$0xff] %v3766
      %3816 = vst [vmem:[%s305 + $0x18] sm:$0xff] %v3798
      %3817 = vst [vmem:[%s305 + $0x20] sm:$0xff] %v3767
      %3818 = vst [vmem:[%s305 + $0x28] sm:$0xff] %v3799
      %3819 = vst [vmem:[%s305 + $0x30] sm:$0xff] %v3768
      %3820 = vst [vmem:[%s305 + $0x38] sm:$0xff] %v3800
      %3821 = vst [vmem:[%s305 + $0x40] sm:$0xff] %v3769
      %3822 = vst [vmem:[%s305 + $0x48] sm:$0xff] %v3801
      %3823 = vst [vmem:[%s305 + $0x50] sm:$0xff] %v3770
      %3824 = vst [vmem:[%s305 + $0x58] sm:$0xff] %v3802
      %3825 = vst [vmem:[%s305 + $0x60] sm:$0xff] %v3771
      %3826 = vst [vmem:[%s305 + $0x68] sm:$0xff] %v3803
      %3827 = vst [vmem:[%s305 + $0x70] sm:$0xff] %v3772
      %3828 = vst [vmem:[%s305 + $0x78] sm:$0xff] %v3804
      %p3829 = scmp.lt.s32.totalorder %s19, 3
      %s3830 = scalar_select %p3829, %s19, 3
      %s3831 = smul.addr %s3830, 16
      %s3832 = smul.addr %s3831, 8
      %s3833 = scalar_lea.vmem %s8, %s3832
      // Predicated region
      $region53: #{bottleneck_forward.1} parent=51 // pred_check
        %p3834 = pneg %p210
      $region54: #{bottleneck_forward.1} parent=51 // pred_check_branch
        %3836 = sbr.rel (%p3834) target = $region56
      $region55: #{bottleneck_forward.1} parent=51 // pred_region
        _
      $region56: #{bottleneck_forward.1} parent=51 // pred_fallthru
        _
    $region52: #{bottleneck_forward.1} parent=5 // pred_fallthru
      _
    %p3837 = scmp.le.s32.totalorder 2, %s14
    // Predicated region
    $region57: #{bottleneck_forward.1} parent=5 // pred_check
      %p3838 = pneg %p3837
    $region58: #{bottleneck_forward.1} parent=5 // pred_check_branch
      %3840 = sbr.rel (%p3838) target = $region60
    $region59: #{bottleneck_forward.1} parent=5 // pred_region
      %s3841 = ssub.s32 %s14, 2
      // Predicated region
      $region61: #{bottleneck_forward.1} parent=59 // pred_check
        %p3842 = pneg %p216
      $region62: #{bottleneck_forward.1} parent=59 // pred_check_branch
        %3844 = sbr.rel (%p3842) target = $region64
      $region63: #{bottleneck_forward.1} parent=59 // pred_region
        %p3845 = scmp.lt.s32.totalorder %s20, 3
        %s3846 = scalar_select %p3845, %s20, 3
        %s3847 = smul.addr %s3846, 16
        %s3848 = smul.addr %s3847, 8
        %s3849 = scalar_lea.vmem %s8, %s3848
      $region64: #{bottleneck_forward.1} parent=59 // pred_fallthru
        _
    $region60: #{bottleneck_forward.1} parent=5 // pred_fallthru
      _
  $region6: #{bottleneck_forward.1} parent=0 // loop_footer
    %s18 = sadd.s32 1, %s14
  $region7: #{bottleneck_forward.1} parent=0 // loop_footer_branch
    %13 = sbr.rel target = $region3
  $region8: #{bottleneck_forward.1} parent=0 // loop_exit
    _

</llo_original>
